<compile_context>
chip_gen: v6e
topology: v6e:2x2x1
jax: 0.10.0
libtpu: 0.0.40
codegen_flags: <defaults>
</compile_context>

<pallas_src>
import functools

import jax
import jax.numpy as jnp
import numpy as np
from jax import lax
from jax.experimental import pallas as pl
from jax.experimental.pallas import tpu as pltpu


def _round_up(x, m):
    return ((x + m - 1) // m) * m


def _sigmoid_via_tanh(x):
    # sigmoid(x) == 0.5 * tanh(0.5 * x) + 0.5  (one EUP push instead of exp+div)
    return 0.5 * jnp.tanh(0.5 * x) + 0.5


# ----------------------------------------------------------------------------
# Fused Pallas kernel: all LSTM layers + final FC
# ----------------------------------------------------------------------------
def fused_lstm_fc_kernel(x_ref, wih_ref, whh_ref, b_ref, wfc_ref, bfc_ref,
                         out_ref, hseq_ref, xproj_ref,
                         *, num_layers, seq_len, batch_pad, hidden_pad):
    """
    x_ref:     (T*Bp, Fp)   bf16  time-major, batch- and feature-padded input
    wih_ref:   (L, Fp, 4Hp) bf16  per-layer input->gate weights (gate-blocked, padded)
    whh_ref:   (L, Hp, 4Hp) bf16  per-layer hidden->gate weights
    b_ref:     (L, 1, 4Hp)  f32   per-layer combined bias (b_ih + b_hh)
    wfc_ref:   (Hp, Op)     bf16  FC weights (padded, lane-dense)
    bfc_ref:   (1, Op)      f32   FC bias
    out_ref:   (Bp, Op)     f32   lane-dense output
    hseq_ref:  (T*Bp, Fp)   bf16  VMEM scratch: current layer's hidden sequence
    xproj_ref: (T*Bp, 4Hp)  f32   VMEM scratch: hoisted input projection (+bias)
    """
    T = seq_len
    Bp = batch_pad
    Hp = hidden_pad
    TB, Fp = x_ref.shape

    # Only the padding columns of hseq feed (zero) weight rows of the next
    # layer; zero just those so they aren't NaN garbage.  [0:Hp] is rewritten
    # every timestep.
    if Fp > Hp:
        hseq_ref[:, Hp:] = jnp.zeros((TB, Fp - Hp), jnp.bfloat16)

    h_last = None
    for l in range(num_layers):
        # ---- Hoisted input projection: one big bf16 GEMM (f32 acc) + bias,
        #      off the serial path.
        inp = x_ref[...] if l == 0 else hseq_ref[...]            # (T*Bp, Fp) bf16
        xproj_ref[...] = (
            jnp.dot(inp, wih_ref[l], preferred_element_type=jnp.float32)
            + b_ref[l]                                           # (1, 4Hp) f32 bcast
        )

        # ---- Recurrence: per step only h @ W_hh + elementwise gate math.
        def step(t, carry, l=l):
            h, c = carry                                         # f32 carries
            row0 = pl.multiple_of(t * Bp, Bp)                    # sublane-aligned
            g_x = xproj_ref[pl.ds(row0, Bp), :]                  # (Bp, 4Hp) f32
            gates = g_x + jnp.dot(h.astype(jnp.bfloat16), whh_ref[l],
                                  preferred_element_type=jnp.float32)
            # Gate slices are 128-lane aligned blocks (zero-cost views).
            i_g = _sigmoid_via_tanh(gates[:, 0 * Hp:1 * Hp])
            f_g = _sigmoid_via_tanh(gates[:, 1 * Hp:2 * Hp])
            g_g = jnp.tanh(gates[:, 2 * Hp:3 * Hp])
            o_g = _sigmoid_via_tanh(gates[:, 3 * Hp:4 * Hp])
            c_new = f_g * c + i_g * g_g
            h_new = o_g * jnp.tanh(c_new)
            if l < num_layers - 1:
                # Only intermediate layers need the full hidden sequence.
                if Fp == Hp:
                    hseq_ref[pl.ds(row0, Bp), :] = h_new.astype(jnp.bfloat16)
                else:
                    hseq_ref[pl.ds(row0, Bp), 0:Hp] = h_new.astype(jnp.bfloat16)
            return (h_new, c_new)

        h0 = jnp.zeros((Bp, Hp), jnp.float32)
        c0 = jnp.zeros((Bp, Hp), jnp.float32)
        # T is a small compile-time constant: fully unroll for LLO visibility.
        h_last, _ = lax.fori_loop(0, T, step, (h0, c0), unroll=True)

    # ---- Fused FC on the last timestep of the last layer (lane-dense store).
    out_ref[...] = (
        jnp.dot(h_last.astype(jnp.bfloat16), wfc_ref[...],
                preferred_element_type=jnp.float32)
        + bfc_ref[...]
    )


# ----------------------------------------------------------------------------
# Parameter construction / packing
# ----------------------------------------------------------------------------
def init_params(key, input_size, hidden_size, num_layers, output_size):
    """PyTorch-layout params with U(-1/sqrt(H), 1/sqrt(H)) init."""
    k = 1.0 / np.sqrt(hidden_size)
    lstm = []
    for layer in range(num_layers):
        d_in = input_size if layer == 0 else hidden_size
        key, k1, k2, k3, k4 = jax.random.split(key, 5)
        lstm.append(dict(
            w_ih=jax.random.uniform(k1, (4 * hidden_size, d_in), jnp.float32, -k, k),
            w_hh=jax.random.uniform(k2, (4 * hidden_size, hidden_size), jnp.float32, -k, k),
            b_ih=jax.random.uniform(k3, (4 * hidden_size,), jnp.float32, -k, k),
            b_hh=jax.random.uniform(k4, (4 * hidden_size,), jnp.float32, -k, k),
        ))
    key, k5, k6 = jax.random.split(key, 3)
    fc = dict(
        w=jax.random.uniform(k5, (output_size, hidden_size), jnp.float32, -k, k),
        b=jax.random.uniform(k6, (output_size,), jnp.float32, -k, k),
    )
    return dict(lstm=lstm, fc=fc)


def pack_params(params, input_size, hidden_size, num_layers, output_size):
    """Pad/stack weights into lane-aligned, gate-blocked kernel layout.

    NOTE (padded-lane invariant): padded weight columns/rows and padded bias
    lanes are exactly 0 AND the kernel starts from h0 = c0 = 0, so padded
    hidden lanes see gates == 0 every step (i/f/o = 0.5, g = 0) and therefore
    stay exactly 0.0.  Plumbing a nonzero initial state or nonzero bias
    padding through would silently break this.
    """
    H = hidden_size
    Hp = _round_up(H, 128)
    Fp = max(_round_up(input_size, 128), Hp)
    Op = _round_up(output_size, 128)

    wih_all, whh_all, b_all = [], [], []
    for l, lyr in enumerate(params["lstm"]):
        d_in = input_size if l == 0 else H
        wih_t = lyr["w_ih"].T                     # (d_in, 4H)
        whh_t = lyr["w_hh"].T                     # (H, 4H)
        bias = (lyr["b_ih"] + lyr["b_hh"]).reshape(1, 4 * H)
        wih_p = jnp.zeros((Fp, 4 * Hp), jnp.float32)
        whh_p = jnp.zeros((Hp, 4 * Hp), jnp.float32)
        b_p = jnp.zeros((1, 4 * Hp), jnp.float32)
        for g in range(4):                        # PyTorch gate order: i, f, g, o
            wih_p = wih_p.at[:d_in, g * Hp:g * Hp + H].set(wih_t[:, g * H:(g + 1) * H])
            whh_p = whh_p.at[:H, g * Hp:g * Hp + H].set(whh_t[:, g * H:(g + 1) * H])
            b_p = b_p.at[:, g * Hp:g * Hp + H].set(bias[:, g * H:(g + 1) * H])
        wih_all.append(wih_p.astype(jnp.bfloat16))
        whh_all.append(whh_p.astype(jnp.bfloat16))
        b_all.append(b_p)                         # bias stays f32

    wfc_p = (jnp.zeros((Hp, Op), jnp.float32)
             .at[:H, :output_size].set(params["fc"]["w"].T)
             .astype(jnp.bfloat16))
    bfc_p = jnp.zeros((1, Op), jnp.float32).at[:, :output_size].set(
        params["fc"]["b"].reshape(1, output_size))

    return dict(
        wih=jnp.stack(wih_all),      # (L, Fp, 4Hp) bf16
        whh=jnp.stack(whh_all),      # (L, Hp, 4Hp) bf16
        b=jnp.stack(b_all),          # (L, 1, 4Hp)  f32
        wfc=wfc_p, bfc=bfc_p,
        dims=dict(H=H, Hp=Hp, Fp=Fp, Op=Op, L=num_layers,
                  input_size=input_size, output_size=output_size),
    )


# ----------------------------------------------------------------------------
# Wrapper
# ----------------------------------------------------------------------------
def lstm_predictor_forward(x, packed):
    """x: (B, T, input_size) batch-first float32. Returns (B, output_size) f32."""
    d = packed["dims"]
    B, T, D = x.shape
    Bp = _round_up(B, 8)
    Fp, Hp, Op, L = d["Fp"], d["Hp"], d["Op"], d["L"]

    # Time-major + batch/feature zero-padding, flattened to (T*Bp, Fp), bf16.
    xt = jnp.transpose(x.astype(jnp.float32), (1, 0, 2))        # (T, B, D)
    x_pad = jnp.zeros((T, Bp, Fp), jnp.bfloat16).at[:, :B, :D].set(
        xt.astype(jnp.bfloat16))
    x_pad = x_pad.reshape(T * Bp, Fp)

    # VMEM footprint (inputs/outputs/scratch) with v7x-safe budgeting.
    total_bytes = (
        2 * (T * Bp * Fp)            # x (bf16)
        + 2 * (L * Fp * 4 * Hp)      # wih (bf16)
        + 2 * (L * Hp * 4 * Hp)      # whh (bf16)
        + 4 * (L * 4 * Hp)           # bias (f32)
        + 2 * (Hp * Op) + 4 * Op     # fc weights (bf16) + bias (f32)
        + 4 * (Bp * Op)              # out (f32)
        + 2 * (T * Bp * Fp)          # hseq scratch (bf16)
        + 4 * (T * Bp * 4 * Hp)      # xproj scratch (f32)
    )
    assert total_bytes < 24 * 1024 * 1024, (
        "fused LSTM kernel exceeds the VMEM budget (v7x has 64 MiB physical); "
        "tile T with a grid / stream weights from HBM instead")
    vmem_limit = int(min(40 * 1024 * 1024,
                         max(16 * 1024 * 1024, total_bytes + 2 * 1024 * 1024)))

    kernel = functools.partial(
        fused_lstm_fc_kernel,
        num_layers=L, seq_len=T, batch_pad=Bp, hidden_pad=Hp)

    vmem_spec = pl.BlockSpec(memory_space=pltpu.MemorySpace.VMEM)
    out_p = pl.pallas_call(
        kernel,
        out_shape=jax.ShapeDtypeStruct((Bp, Op), jnp.float32),
        in_specs=[vmem_spec] * 6,
        out_specs=vmem_spec,
        scratch_shapes=[
            pltpu.VMEM((T * Bp, Fp), jnp.bfloat16),       # hseq
            pltpu.VMEM((T * Bp, 4 * Hp), jnp.float32),    # xproj
        ],
        compiler_params=pltpu.CompilerParams(vmem_limit_bytes=vmem_limit),
    )(x_pad, packed["wih"], packed["whh"], packed["b"], packed["wfc"], packed["bfc"])

    return out_p[:B, :d["output_size"]]


# ----------------------------------------------------------------------------
# Pure-JAX reference (PyTorch semantics, unpadded, f32) — sanity check only
# ----------------------------------------------------------------------------
def reference_forward(x, params):
    B = x.shape[0]
    h_seq = jnp.transpose(x.astype(jnp.float32), (1, 0, 2))     # (T, B, D)
    for lyr in params["lstm"]:
        H = lyr["w_hh"].shape[1]
        wih_t = lyr["w_ih"].T
        whh_t = lyr["w_hh"].T
        bias = (lyr["b_ih"] + lyr["b_hh"]).reshape(1, -1)

        def step(carry, x_t, wih_t=wih_t, whh_t=whh_t, bias=bias, H=H):
            h, c = carry
            gates = x_t @ wih_t + h @ whh_t + bias
            i_g = jax.nn.sigmoid(gates[:, 0 * H:1 * H])
            f_g = jax.nn.sigmoid(gates[:, 1 * H:2 * H])
            g_g = jnp.tanh(gates[:, 2 * H:3 * H])
            o_g = jax.nn.sigmoid(gates[:, 3 * H:4 * H])
            c_new = f_g * c + i_g * g_g
            h_new = o_g * jnp.tanh(c_new)
            return (h_new, c_new), h_new

        init = (jnp.zeros((B, H), jnp.float32), jnp.zeros((B, H), jnp.float32))
        _, h_seq = lax.scan(step, init, h_seq)
    return h_seq[-1] @ params["fc"]["w"].T + params["fc"]["b"].reshape(1, -1)


# ----------------------------------------------------------------------------
if __name__ == "__main__":
    B, T = 2, 8
    INPUT_SIZE, HIDDEN_SIZE, NUM_LAYERS, OUTPUT_SIZE = 16, 32, 2, 4

    key = jax.random.PRNGKey(0)
    key, xk = jax.random.split(key)
    x = jax.random.normal(xk, (B, T, INPUT_SIZE), jnp.float32)

    params = init_params(key, INPUT_SIZE, HIDDEN_SIZE, NUM_LAYERS, OUTPUT_SIZE)
    packed = pack_params(params, INPUT_SIZE, HIDDEN_SIZE, NUM_LAYERS, OUTPUT_SIZE)

    out = lstm_predictor_forward(x, packed)
    out = jax.block_until_ready(out)

    # bf16 matmul operands (kernel) vs f32 reference: tolerance reflects bf16
    # rounding of activations/weights, not a semantic difference.
    ref = reference_forward(x, params)
    np.testing.assert_allclose(np.asarray(out), np.asarray(ref), rtol=2e-2, atol=2e-2)

    assert out.shape == (B, OUTPUT_SIZE)
    print("KERNEL_OK")
</pallas_src>

<mosaic_0001>
module attributes {stable_mosaic.version = 11 : i64} {
  func.func @fused_lstm_fc_kernel(%arg0: memref<64x128xbf16, #tpu.memory_space<vmem>>, %arg1: memref<2x128x512xbf16, #tpu.memory_space<vmem>>, %arg2: memref<2x128x512xbf16, #tpu.memory_space<vmem>>, %arg3: memref<2x1x512xf32, #tpu.memory_space<vmem>>, %arg4: memref<128x128xbf16, #tpu.memory_space<vmem>>, %arg5: memref<1x128xf32, #tpu.memory_space<vmem>>, %arg6: memref<8x128xf32, #tpu.memory_space<vmem>>, %arg7: memref<64x128xbf16, #tpu.memory_space<vmem>>, %arg8: memref<64x512xf32, #tpu.memory_space<vmem>>) attributes {dimension_semantics = [], scalar_prefetch = 0 : i64, scratch_operands = 2 : i64, tpu.core_type = #tpu.core_type<tc>} {
    %c0 = arith.constant 0 : index
    %c0_0 = arith.constant 0 : index
    %0 = vector.load %arg0[%c0, %c0_0] : memref<64x128xbf16, #tpu.memory_space<vmem>>, vector<64x128xbf16>
    %c0_1 = arith.constant 0 : index
    %c0_2 = arith.constant 0 : index
    %c0_3 = arith.constant 0 : index
    %1 = vector.load %arg1[%c0_1, %c0_2, %c0_3] : memref<2x128x512xbf16, #tpu.memory_space<vmem>>, vector<1x128x512xbf16>
    %2 = vector.shape_cast %1 : vector<1x128x512xbf16> to vector<128x512xbf16>
    %cst = arith.constant dense<0.000000e+00> : vector<64x512xf32>
    %3 = tpu.matmul %0, %2, %cst {dimension_numbers = #tpu.dot_dimension_numbers<[1], [0], [0], [1], [0, 0, 1, 1], [], []>} : vector<64x128xbf16>, vector<128x512xbf16>, vector<64x512xf32> -> vector<64x512xf32>
    %c0_4 = arith.constant 0 : index
    %c0_5 = arith.constant 0 : index
    %c0_6 = arith.constant 0 : index
    %4 = vector.load %arg3[%c0_4, %c0_5, %c0_6] : memref<2x1x512xf32, #tpu.memory_space<vmem>>, vector<1x1x512xf32>
    %5 = vector.shape_cast %4 : vector<1x1x512xf32> to vector<1x512xf32>
    %6 = vector.broadcast %5 : vector<1x512xf32> to vector<64x512xf32>
    %7 = arith.addf %3, %6 : vector<64x512xf32>
    %c0_7 = arith.constant 0 : index
    %c0_8 = arith.constant 0 : index
    %8 = vector.load %arg8[%c0_7, %c0_8] : memref<64x512xf32, #tpu.memory_space<vmem>>, vector<64x512xf32>
    tpu.vector_store %arg8[%c0_7, %c0_8], %7 {strides = array<i32>} : memref<64x512xf32, #tpu.memory_space<vmem>>, vector<64x512xf32>,
    %cst_9 = arith.constant 0.000000e+00 : f32
    %9 = vector.broadcast %cst_9 : f32 to vector<8x128xf32>
    %cst_10 = arith.constant 0.000000e+00 : f32
    %10 = vector.broadcast %cst_10 : f32 to vector<8x128xf32>
    %c0_i32 = arith.constant 0 : i32
    %c8_i32 = arith.constant 8 : i32
    %11 = arith.muli %c0_i32, %c8_i32 : i32
    %12 = tpu.assume_multiple %11, 8 : i32
    %13 = arith.index_cast %12 : i32 to index
    %c0_11 = arith.constant 0 : index
    %14 = vector.load %arg8[%13, %c0_11] : memref<64x512xf32, #tpu.memory_space<vmem>>, vector<8x512xf32>
    %15 = arith.truncf %9 : vector<8x128xf32> to vector<8x128xbf16>
    %c0_12 = arith.constant 0 : index
    %c0_13 = arith.constant 0 : index
    %c0_14 = arith.constant 0 : index
    %16 = vector.load %arg2[%c0_12, %c0_13, %c0_14] : memref<2x128x512xbf16, #tpu.memory_space<vmem>>, vector<1x128x512xbf16>
    %17 = vector.shape_cast %16 : vector<1x128x512xbf16> to vector<128x512xbf16>
    %cst_15 = arith.constant dense<0.000000e+00> : vector<8x512xf32>
    %18 = tpu.matmul %15, %17, %cst_15 {dimension_numbers = #tpu.dot_dimension_numbers<[1], [0], [0], [1], [0, 0, 1, 1], [], []>} : vector<8x128xbf16>, vector<128x512xbf16>, vector<8x512xf32> -> vector<8x512xf32>
    %19 = arith.addf %14, %18 : vector<8x512xf32>
    %20 = vector.extract_strided_slice %19 {offsets = [0, 0], sizes = [8, 128], strides = [1, 1]} : vector<8x512xf32> to vector<8x128xf32>
    %cst_16 = arith.constant 5.000000e-01 : f32
    %21 = vector.broadcast %cst_16 : f32 to vector<8x128xf32>
    %22 = arith.mulf %21, %20 : vector<8x128xf32>
    %23 = math.tanh %22 : vector<8x128xf32>
    %cst_17 = arith.constant 5.000000e-01 : f32
    %24 = vector.broadcast %cst_17 : f32 to vector<8x128xf32>
    %25 = arith.mulf %24, %23 : vector<8x128xf32>
    %cst_18 = arith.constant 5.000000e-01 : f32
    %26 = vector.broadcast %cst_18 : f32 to vector<8x128xf32>
    %27 = arith.addf %25, %26 : vector<8x128xf32>
    %28 = vector.extract_strided_slice %19 {offsets = [0, 128], sizes = [8, 128], strides = [1, 1]} : vector<8x512xf32> to vector<8x128xf32>
    %cst_19 = arith.constant 5.000000e-01 : f32
    %29 = vector.broadcast %cst_19 : f32 to vector<8x128xf32>
    %30 = arith.mulf %29, %28 : vector<8x128xf32>
    %31 = math.tanh %30 : vector<8x128xf32>
    %cst_20 = arith.constant 5.000000e-01 : f32
    %32 = vector.broadcast %cst_20 : f32 to vector<8x128xf32>
    %33 = arith.mulf %32, %31 : vector<8x128xf32>
    %cst_21 = arith.constant 5.000000e-01 : f32
    %34 = vector.broadcast %cst_21 : f32 to vector<8x128xf32>
    %35 = arith.addf %33, %34 : vector<8x128xf32>
    %36 = vector.extract_strided_slice %19 {offsets = [0, 256], sizes = [8, 128], strides = [1, 1]} : vector<8x512xf32> to vector<8x128xf32>
    %37 = math.tanh %36 : vector<8x128xf32>
    %38 = vector.extract_strided_slice %19 {offsets = [0, 384], sizes = [8, 128], strides = [1, 1]} : vector<8x512xf32> to vector<8x128xf32>
    %cst_22 = arith.constant 5.000000e-01 : f32
    %39 = vector.broadcast %cst_22 : f32 to vector<8x128xf32>
    %40 = arith.mulf %39, %38 : vector<8x128xf32>
    %41 = math.tanh %40 : vector<8x128xf32>
    %cst_23 = arith.constant 5.000000e-01 : f32
    %42 = vector.broadcast %cst_23 : f32 to vector<8x128xf32>
    %43 = arith.mulf %42, %41 : vector<8x128xf32>
    %cst_24 = arith.constant 5.000000e-01 : f32
    %44 = vector.broadcast %cst_24 : f32 to vector<8x128xf32>
    %45 = arith.addf %43, %44 : vector<8x128xf32>
    %46 = arith.mulf %35, %10 : vector<8x128xf32>
    %47 = arith.mulf %27, %37 : vector<8x128xf32>
    %48 = arith.addf %46, %47 : vector<8x128xf32>
    %49 = math.tanh %48 : vector<8x128xf32>
    %50 = arith.mulf %45, %49 : vector<8x128xf32>
    %51 = arith.truncf %50 : vector<8x128xf32> to vector<8x128xbf16>
    %52 = arith.index_cast %12 : i32 to index
    %c0_25 = arith.constant 0 : index
    %53 = vector.load %arg7[%52, %c0_25] : memref<64x128xbf16, #tpu.memory_space<vmem>>, vector<8x128xbf16>
    tpu.vector_store %arg7[%52, %c0_25], %51 {strides = array<i32>} : memref<64x128xbf16, #tpu.memory_space<vmem>>, vector<8x128xbf16>,
    %c1_i32 = arith.constant 1 : i32
    %c8_i32_26 = arith.constant 8 : i32
    %54 = arith.muli %c1_i32, %c8_i32_26 : i32
    %55 = tpu.assume_multiple %54, 8 : i32
    %56 = arith.index_cast %55 : i32 to index
    %c0_27 = arith.constant 0 : index
    %57 = vector.load %arg8[%56, %c0_27] : memref<64x512xf32, #tpu.memory_space<vmem>>, vector<8x512xf32>
    %58 = arith.truncf %50 : vector<8x128xf32> to vector<8x128xbf16>
    %c0_28 = arith.constant 0 : index
    %c0_29 = arith.constant 0 : index
    %c0_30 = arith.constant 0 : index
    %59 = vector.load %arg2[%c0_28, %c0_29, %c0_30] : memref<2x128x512xbf16, #tpu.memory_space<vmem>>, vector<1x128x512xbf16>
    %60 = vector.shape_cast %59 : vector<1x128x512xbf16> to vector<128x512xbf16>
    %cst_31 = arith.constant dense<0.000000e+00> : vector<8x512xf32>
    %61 = tpu.matmul %58, %60, %cst_31 {dimension_numbers = #tpu.dot_dimension_numbers<[1], [0], [0], [1], [0, 0, 1, 1], [], []>} : vector<8x128xbf16>, vector<128x512xbf16>, vector<8x512xf32> -> vector<8x512xf32>
    %62 = arith.addf %57, %61 : vector<8x512xf32>
    %63 = vector.extract_strided_slice %62 {offsets = [0, 0], sizes = [8, 128], strides = [1, 1]} : vector<8x512xf32> to vector<8x128xf32>
    %cst_32 = arith.constant 5.000000e-01 : f32
    %64 = vector.broadcast %cst_32 : f32 to vector<8x128xf32>
    %65 = arith.mulf %64, %63 : vector<8x128xf32>
    %66 = math.tanh %65 : vector<8x128xf32>
    %cst_33 = arith.constant 5.000000e-01 : f32
    %67 = vector.broadcast %cst_33 : f32 to vector<8x128xf32>
    %68 = arith.mulf %67, %66 : vector<8x128xf32>
    %cst_34 = arith.constant 5.000000e-01 : f32
    %69 = vector.broadcast %cst_34 : f32 to vector<8x128xf32>
    %70 = arith.addf %68, %69 : vector<8x128xf32>
    %71 = vector.extract_strided_slice %62 {offsets = [0, 128], sizes = [8, 128], strides = [1, 1]} : vector<8x512xf32> to vector<8x128xf32>
    %cst_35 = arith.constant 5.000000e-01 : f32
    %72 = vector.broadcast %cst_35 : f32 to vector<8x128xf32>
    %73 = arith.mulf %72, %71 : vector<8x128xf32>
    %74 = math.tanh %73 : vector<8x128xf32>
    %cst_36 = arith.constant 5.000000e-01 : f32
    %75 = vector.broadcast %cst_36 : f32 to vector<8x128xf32>
    %76 = arith.mulf %75, %74 : vector<8x128xf32>
    %cst_37 = arith.constant 5.000000e-01 : f32
    %77 = vector.broadcast %cst_37 : f32 to vector<8x128xf32>
    %78 = arith.addf %76, %77 : vector<8x128xf32>
    %79 = vector.extract_strided_slice %62 {offsets = [0, 256], sizes = [8, 128], strides = [1, 1]} : vector<8x512xf32> to vector<8x128xf32>
    %80 = math.tanh %79 : vector<8x128xf32>
    %81 = vector.extract_strided_slice %62 {offsets = [0, 384], sizes = [8, 128], strides = [1, 1]} : vector<8x512xf32> to vector<8x128xf32>
    %cst_38 = arith.constant 5.000000e-01 : f32
    %82 = vector.broadcast %cst_38 : f32 to vector<8x128xf32>
    %83 = arith.mulf %82, %81 : vector<8x128xf32>
    %84 = math.tanh %83 : vector<8x128xf32>
    %cst_39 = arith.constant 5.000000e-01 : f32
    %85 = vector.broadcast %cst_39 : f32 to vector<8x128xf32>
    %86 = arith.mulf %85, %84 : vector<8x128xf32>
    %cst_40 = arith.constant 5.000000e-01 : f32
    %87 = vector.broadcast %cst_40 : f32 to vector<8x128xf32>
    %88 = arith.addf %86, %87 : vector<8x128xf32>
    %89 = arith.mulf %78, %48 : vector<8x128xf32>
    %90 = arith.mulf %70, %80 : vector<8x128xf32>
    %91 = arith.addf %89, %90 : vector<8x128xf32>
    %92 = math.tanh %91 : vector<8x128xf32>
    %93 = arith.mulf %88, %92 : vector<8x128xf32>
    %94 = arith.truncf %93 : vector<8x128xf32> to vector<8x128xbf16>
    %95 = arith.index_cast %55 : i32 to index
    %c0_41 = arith.constant 0 : index
    %96 = vector.load %arg7[%95, %c0_41] : memref<64x128xbf16, #tpu.memory_space<vmem>>, vector<8x128xbf16>
    tpu.vector_store %arg7[%95, %c0_41], %94 {strides = array<i32>} : memref<64x128xbf16, #tpu.memory_space<vmem>>, vector<8x128xbf16>,
    %c2_i32 = arith.constant 2 : i32
    %c8_i32_42 = arith.constant 8 : i32
    %97 = arith.muli %c2_i32, %c8_i32_42 : i32
    %98 = tpu.assume_multiple %97, 8 : i32
    %99 = arith.index_cast %98 : i32 to index
    %c0_43 = arith.constant 0 : index
    %100 = vector.load %arg8[%99, %c0_43] : memref<64x512xf32, #tpu.memory_space<vmem>>, vector<8x512xf32>
    %101 = arith.truncf %93 : vector<8x128xf32> to vector<8x128xbf16>
    %c0_44 = arith.constant 0 : index
    %c0_45 = arith.constant 0 : index
    %c0_46 = arith.constant 0 : index
    %102 = vector.load %arg2[%c0_44, %c0_45, %c0_46] : memref<2x128x512xbf16, #tpu.memory_space<vmem>>, vector<1x128x512xbf16>
    %103 = vector.shape_cast %102 : vector<1x128x512xbf16> to vector<128x512xbf16>
    %cst_47 = arith.constant dense<0.000000e+00> : vector<8x512xf32>
    %104 = tpu.matmul %101, %103, %cst_47 {dimension_numbers = #tpu.dot_dimension_numbers<[1], [0], [0], [1], [0, 0, 1, 1], [], []>} : vector<8x128xbf16>, vector<128x512xbf16>, vector<8x512xf32> -> vector<8x512xf32>
    %105 = arith.addf %100, %104 : vector<8x512xf32>
    %106 = vector.extract_strided_slice %105 {offsets = [0, 0], sizes = [8, 128], strides = [1, 1]} : vector<8x512xf32> to vector<8x128xf32>
    %cst_48 = arith.constant 5.000000e-01 : f32
    %107 = vector.broadcast %cst_48 : f32 to vector<8x128xf32>
    %108 = arith.mulf %107, %106 : vector<8x128xf32>
    %109 = math.tanh %108 : vector<8x128xf32>
    %cst_49 = arith.constant 5.000000e-01 : f32
    %110 = vector.broadcast %cst_49 : f32 to vector<8x128xf32>
    %111 = arith.mulf %110, %109 : vector<8x128xf32>
    %cst_50 = arith.constant 5.000000e-01 : f32
    %112 = vector.broadcast %cst_50 : f32 to vector<8x128xf32>
    %113 = arith.addf %111, %112 : vector<8x128xf32>
    %114 = vector.extract_strided_slice %105 {offsets = [0, 128], sizes = [8, 128], strides = [1, 1]} : vector<8x512xf32> to vector<8x128xf32>
    %cst_51 = arith.constant 5.000000e-01 : f32
    %115 = vector.broadcast %cst_51 : f32 to vector<8x128xf32>
    %116 = arith.mulf %115, %114 : vector<8x128xf32>
    %117 = math.tanh %116 : vector<8x128xf32>
    %cst_52 = arith.constant 5.000000e-01 : f32
    %118 = vector.broadcast %cst_52 : f32 to vector<8x128xf32>
    %119 = arith.mulf %118, %117 : vector<8x128xf32>
    %cst_53 = arith.constant 5.000000e-01 : f32
    %120 = vector.broadcast %cst_53 : f32 to vector<8x128xf32>
    %121 = arith.addf %119, %120 : vector<8x128xf32>
    %122 = vector.extract_strided_slice %105 {offsets = [0, 256], sizes = [8, 128], strides = [1, 1]} : vector<8x512xf32> to vector<8x128xf32>
    %123 = math.tanh %122 : vector<8x128xf32>
    %124 = vector.extract_strided_slice %105 {offsets = [0, 384], sizes = [8, 128], strides = [1, 1]} : vector<8x512xf32> to vector<8x128xf32>
    %cst_54 = arith.constant 5.000000e-01 : f32
    %125 = vector.broadcast %cst_54 : f32 to vector<8x128xf32>
    %126 = arith.mulf %125, %124 : vector<8x128xf32>
    %127 = math.tanh %126 : vector<8x128xf32>
    %cst_55 = arith.constant 5.000000e-01 : f32
    %128 = vector.broadcast %cst_55 : f32 to vector<8x128xf32>
    %129 = arith.mulf %128, %127 : vector<8x128xf32>
    %cst_56 = arith.constant 5.000000e-01 : f32
    %130 = vector.broadcast %cst_56 : f32 to vector<8x128xf32>
    %131 = arith.addf %129, %130 : vector<8x128xf32>
    %132 = arith.mulf %121, %91 : vector<8x128xf32>
    %133 = arith.mulf %113, %123 : vector<8x128xf32>
    %134 = arith.addf %132, %133 : vector<8x128xf32>
    %135 = math.tanh %134 : vector<8x128xf32>
    %136 = arith.mulf %131, %135 : vector<8x128xf32>
    %137 = arith.truncf %136 : vector<8x128xf32> to vector<8x128xbf16>
    %138 = arith.index_cast %98 : i32 to index
    %c0_57 = arith.constant 0 : index
    %139 = vector.load %arg7[%138, %c0_57] : memref<64x128xbf16, #tpu.memory_space<vmem>>, vector<8x128xbf16>
    tpu.vector_store %arg7[%138, %c0_57], %137 {strides = array<i32>} : memref<64x128xbf16, #tpu.memory_space<vmem>>, vector<8x128xbf16>,
    %c3_i32 = arith.constant 3 : i32
    %c8_i32_58 = arith.constant 8 : i32
    %140 = arith.muli %c3_i32, %c8_i32_58 : i32
    %141 = tpu.assume_multiple %140, 8 : i32
    %142 = arith.index_cast %141 : i32 to index
    %c0_59 = arith.constant 0 : index
    %143 = vector.load %arg8[%142, %c0_59] : memref<64x512xf32, #tpu.memory_space<vmem>>, vector<8x512xf32>
    %144 = arith.truncf %136 : vector<8x128xf32> to vector<8x128xbf16>
    %c0_60 = arith.constant 0 : index
    %c0_61 = arith.constant 0 : index
    %c0_62 = arith.constant 0 : index
    %145 = vector.load %arg2[%c0_60, %c0_61, %c0_62] : memref<2x128x512xbf16, #tpu.memory_space<vmem>>, vector<1x128x512xbf16>
    %146 = vector.shape_cast %145 : vector<1x128x512xbf16> to vector<128x512xbf16>
    %cst_63 = arith.constant dense<0.000000e+00> : vector<8x512xf32>
    %147 = tpu.matmul %144, %146, %cst_63 {dimension_numbers = #tpu.dot_dimension_numbers<[1], [0], [0], [1], [0, 0, 1, 1], [], []>} : vector<8x128xbf16>, vector<128x512xbf16>, vector<8x512xf32> -> vector<8x512xf32>
    %148 = arith.addf %143, %147 : vector<8x512xf32>
    %149 = vector.extract_strided_slice %148 {offsets = [0, 0], sizes = [8, 128], strides = [1, 1]} : vector<8x512xf32> to vector<8x128xf32>
    %cst_64 = arith.constant 5.000000e-01 : f32
    %150 = vector.broadcast %cst_64 : f32 to vector<8x128xf32>
    %151 = arith.mulf %150, %149 : vector<8x128xf32>
    %152 = math.tanh %151 : vector<8x128xf32>
    %cst_65 = arith.constant 5.000000e-01 : f32
    %153 = vector.broadcast %cst_65 : f32 to vector<8x128xf32>
    %154 = arith.mulf %153, %152 : vector<8x128xf32>
    %cst_66 = arith.constant 5.000000e-01 : f32
    %155 = vector.broadcast %cst_66 : f32 to vector<8x128xf32>
    %156 = arith.addf %154, %155 : vector<8x128xf32>
    %157 = vector.extract_strided_slice %148 {offsets = [0, 128], sizes = [8, 128], strides = [1, 1]} : vector<8x512xf32> to vector<8x128xf32>
    %cst_67 = arith.constant 5.000000e-01 : f32
    %158 = vector.broadcast %cst_67 : f32 to vector<8x128xf32>
    %159 = arith.mulf %158, %157 : vector<8x128xf32>
    %160 = math.tanh %159 : vector<8x128xf32>
    %cst_68 = arith.constant 5.000000e-01 : f32
    %161 = vector.broadcast %cst_68 : f32 to vector<8x128xf32>
    %162 = arith.mulf %161, %160 : vector<8x128xf32>
    %cst_69 = arith.constant 5.000000e-01 : f32
    %163 = vector.broadcast %cst_69 : f32 to vector<8x128xf32>
    %164 = arith.addf %162, %163 : vector<8x128xf32>
    %165 = vector.extract_strided_slice %148 {offsets = [0, 256], sizes = [8, 128], strides = [1, 1]} : vector<8x512xf32> to vector<8x128xf32>
    %166 = math.tanh %165 : vector<8x128xf32>
    %167 = vector.extract_strided_slice %148 {offsets = [0, 384], sizes = [8, 128], strides = [1, 1]} : vector<8x512xf32> to vector<8x128xf32>
    %cst_70 = arith.constant 5.000000e-01 : f32
    %168 = vector.broadcast %cst_70 : f32 to vector<8x128xf32>
    %169 = arith.mulf %168, %167 : vector<8x128xf32>
    %170 = math.tanh %169 : vector<8x128xf32>
    %cst_71 = arith.constant 5.000000e-01 : f32
    %171 = vector.broadcast %cst_71 : f32 to vector<8x128xf32>
    %172 = arith.mulf %171, %170 : vector<8x128xf32>
    %cst_72 = arith.constant 5.000000e-01 : f32
    %173 = vector.broadcast %cst_72 : f32 to vector<8x128xf32>
    %174 = arith.addf %172, %173 : vector<8x128xf32>
    %175 = arith.mulf %164, %134 : vector<8x128xf32>
    %176 = arith.mulf %156, %166 : vector<8x128xf32>
    %177 = arith.addf %175, %176 : vector<8x128xf32>
    %178 = math.tanh %177 : vector<8x128xf32>
    %179 = arith.mulf %174, %178 : vector<8x128xf32>
    %180 = arith.truncf %179 : vector<8x128xf32> to vector<8x128xbf16>
    %181 = arith.index_cast %141 : i32 to index
    %c0_73 = arith.constant 0 : index
    %182 = vector.load %arg7[%181, %c0_73] : memref<64x128xbf16, #tpu.memory_space<vmem>>, vector<8x128xbf16>
    tpu.vector_store %arg7[%181, %c0_73], %180 {strides = array<i32>} : memref<64x128xbf16, #tpu.memory_space<vmem>>, vector<8x128xbf16>,
    %c4_i32 = arith.constant 4 : i32
    %c8_i32_74 = arith.constant 8 : i32
    %183 = arith.muli %c4_i32, %c8_i32_74 : i32
    %184 = tpu.assume_multiple %183, 8 : i32
    %185 = arith.index_cast %184 : i32 to index
    %c0_75 = arith.constant 0 : index
    %186 = vector.load %arg8[%185, %c0_75] : memref<64x512xf32, #tpu.memory_space<vmem>>, vector<8x512xf32>
    %187 = arith.truncf %179 : vector<8x128xf32> to vector<8x128xbf16>
    %c0_76 = arith.constant 0 : index
    %c0_77 = arith.constant 0 : index
    %c0_78 = arith.constant 0 : index
    %188 = vector.load %arg2[%c0_76, %c0_77, %c0_78] : memref<2x128x512xbf16, #tpu.memory_space<vmem>>, vector<1x128x512xbf16>
    %189 = vector.shape_cast %188 : vector<1x128x512xbf16> to vector<128x512xbf16>
    %cst_79 = arith.constant dense<0.000000e+00> : vector<8x512xf32>
    %190 = tpu.matmul %187, %189, %cst_79 {dimension_numbers = #tpu.dot_dimension_numbers<[1], [0], [0], [1], [0, 0, 1, 1], [], []>} : vector<8x128xbf16>, vector<128x512xbf16>, vector<8x512xf32> -> vector<8x512xf32>
    %191 = arith.addf %186, %190 : vector<8x512xf32>
    %192 = vector.extract_strided_slice %191 {offsets = [0, 0], sizes = [8, 128], strides = [1, 1]} : vector<8x512xf32> to vector<8x128xf32>
    %cst_80 = arith.constant 5.000000e-01 : f32
    %193 = vector.broadcast %cst_80 : f32 to vector<8x128xf32>
    %194 = arith.mulf %193, %192 : vector<8x128xf32>
    %195 = math.tanh %194 : vector<8x128xf32>
    %cst_81 = arith.constant 5.000000e-01 : f32
    %196 = vector.broadcast %cst_81 : f32 to vector<8x128xf32>
    %197 = arith.mulf %196, %195 : vector<8x128xf32>
    %cst_82 = arith.constant 5.000000e-01 : f32
    %198 = vector.broadcast %cst_82 : f32 to vector<8x128xf32>
    %199 = arith.addf %197, %198 : vector<8x128xf32>
    %200 = vector.extract_strided_slice %191 {offsets = [0, 128], sizes = [8, 128], strides = [1, 1]} : vector<8x512xf32> to vector<8x128xf32>
    %cst_83 = arith.constant 5.000000e-01 : f32
    %201 = vector.broadcast %cst_83 : f32 to vector<8x128xf32>
    %202 = arith.mulf %201, %200 : vector<8x128xf32>
    %203 = math.tanh %202 : vector<8x128xf32>
    %cst_84 = arith.constant 5.000000e-01 : f32
    %204 = vector.broadcast %cst_84 : f32 to vector<8x128xf32>
    %205 = arith.mulf %204, %203 : vector<8x128xf32>
    %cst_85 = arith.constant 5.000000e-01 : f32
    %206 = vector.broadcast %cst_85 : f32 to vector<8x128xf32>
    %207 = arith.addf %205, %206 : vector<8x128xf32>
    %208 = vector.extract_strided_slice %191 {offsets = [0, 256], sizes = [8, 128], strides = [1, 1]} : vector<8x512xf32> to vector<8x128xf32>
    %209 = math.tanh %208 : vector<8x128xf32>
    %210 = vector.extract_strided_slice %191 {offsets = [0, 384], sizes = [8, 128], strides = [1, 1]} : vector<8x512xf32> to vector<8x128xf32>
    %cst_86 = arith.constant 5.000000e-01 : f32
    %211 = vector.broadcast %cst_86 : f32 to vector<8x128xf32>
    %212 = arith.mulf %211, %210 : vector<8x128xf32>
    %213 = math.tanh %212 : vector<8x128xf32>
    %cst_87 = arith.constant 5.000000e-01 : f32
    %214 = vector.broadcast %cst_87 : f32 to vector<8x128xf32>
    %215 = arith.mulf %214, %213 : vector<8x128xf32>
    %cst_88 = arith.constant 5.000000e-01 : f32
    %216 = vector.broadcast %cst_88 : f32 to vector<8x128xf32>
    %217 = arith.addf %215, %216 : vector<8x128xf32>
    %218 = arith.mulf %207, %177 : vector<8x128xf32>
    %219 = arith.mulf %199, %209 : vector<8x128xf32>
    %220 = arith.addf %218, %219 : vector<8x128xf32>
    %221 = math.tanh %220 : vector<8x128xf32>
    %222 = arith.mulf %217, %221 : vector<8x128xf32>
    %223 = arith.truncf %222 : vector<8x128xf32> to vector<8x128xbf16>
    %224 = arith.index_cast %184 : i32 to index
    %c0_89 = arith.constant 0 : index
    %225 = vector.load %arg7[%224, %c0_89] : memref<64x128xbf16, #tpu.memory_space<vmem>>, vector<8x128xbf16>
    tpu.vector_store %arg7[%224, %c0_89], %223 {strides = array<i32>} : memref<64x128xbf16, #tpu.memory_space<vmem>>, vector<8x128xbf16>,
    %c5_i32 = arith.constant 5 : i32
    %c8_i32_90 = arith.constant 8 : i32
    %226 = arith.muli %c5_i32, %c8_i32_90 : i32
    %227 = tpu.assume_multiple %226, 8 : i32
    %228 = arith.index_cast %227 : i32 to index
    %c0_91 = arith.constant 0 : index
    %229 = vector.load %arg8[%228, %c0_91] : memref<64x512xf32, #tpu.memory_space<vmem>>, vector<8x512xf32>
    %230 = arith.truncf %222 : vector<8x128xf32> to vector<8x128xbf16>
    %c0_92 = arith.constant 0 : index
    %c0_93 = arith.constant 0 : index
    %c0_94 = arith.constant 0 : index
    %231 = vector.load %arg2[%c0_92, %c0_93, %c0_94] : memref<2x128x512xbf16, #tpu.memory_space<vmem>>, vector<1x128x512xbf16>
    %232 = vector.shape_cast %231 : vector<1x128x512xbf16> to vector<128x512xbf16>
    %cst_95 = arith.constant dense<0.000000e+00> : vector<8x512xf32>
    %233 = tpu.matmul %230, %232, %cst_95 {dimension_numbers = #tpu.dot_dimension_numbers<[1], [0], [0], [1], [0, 0, 1, 1], [], []>} : vector<8x128xbf16>, vector<128x512xbf16>, vector<8x512xf32> -> vector<8x512xf32>
    %234 = arith.addf %229, %233 : vector<8x512xf32>
    %235 = vector.extract_strided_slice %234 {offsets = [0, 0], sizes = [8, 128], strides = [1, 1]} : vector<8x512xf32> to vector<8x128xf32>
    %cst_96 = arith.constant 5.000000e-01 : f32
    %236 = vector.broadcast %cst_96 : f32 to vector<8x128xf32>
    %237 = arith.mulf %236, %235 : vector<8x128xf32>
    %238 = math.tanh %237 : vector<8x128xf32>
    %cst_97 = arith.constant 5.000000e-01 : f32
    %239 = vector.broadcast %cst_97 : f32 to vector<8x128xf32>
    %240 = arith.mulf %239, %238 : vector<8x128xf32>
    %cst_98 = arith.constant 5.000000e-01 : f32
    %241 = vector.broadcast %cst_98 : f32 to vector<8x128xf32>
    %242 = arith.addf %240, %241 : vector<8x128xf32>
    %243 = vector.extract_strided_slice %234 {offsets = [0, 128], sizes = [8, 128], strides = [1, 1]} : vector<8x512xf32> to vector<8x128xf32>
    %cst_99 = arith.constant 5.000000e-01 : f32
    %244 = vector.broadcast %cst_99 : f32 to vector<8x128xf32>
    %245 = arith.mulf %244, %243 : vector<8x128xf32>
    %246 = math.tanh %245 : vector<8x128xf32>
    %cst_100 = arith.constant 5.000000e-01 : f32
    %247 = vector.broadcast %cst_100 : f32 to vector<8x128xf32>
    %248 = arith.mulf %247, %246 : vector<8x128xf32>
    %cst_101 = arith.constant 5.000000e-01 : f32
    %249 = vector.broadcast %cst_101 : f32 to vector<8x128xf32>
    %250 = arith.addf %248, %249 : vector<8x128xf32>
    %251 = vector.extract_strided_slice %234 {offsets = [0, 256], sizes = [8, 128], strides = [1, 1]} : vector<8x512xf32> to vector<8x128xf32>
    %252 = math.tanh %251 : vector<8x128xf32>
    %253 = vector.extract_strided_slice %234 {offsets = [0, 384], sizes = [8, 128], strides = [1, 1]} : vector<8x512xf32> to vector<8x128xf32>
    %cst_102 = arith.constant 5.000000e-01 : f32
    %254 = vector.broadcast %cst_102 : f32 to vector<8x128xf32>
    %255 = arith.mulf %254, %253 : vector<8x128xf32>
    %256 = math.tanh %255 : vector<8x128xf32>
    %cst_103 = arith.constant 5.000000e-01 : f32
    %257 = vector.broadcast %cst_103 : f32 to vector<8x128xf32>
    %258 = arith.mulf %257, %256 : vector<8x128xf32>
    %cst_104 = arith.constant 5.000000e-01 : f32
    %259 = vector.broadcast %cst_104 : f32 to vector<8x128xf32>
    %260 = arith.addf %258, %259 : vector<8x128xf32>
    %261 = arith.mulf %250, %220 : vector<8x128xf32>
    %262 = arith.mulf %242, %252 : vector<8x128xf32>
    %263 = arith.addf %261, %262 : vector<8x128xf32>
    %264 = math.tanh %263 : vector<8x128xf32>
    %265 = arith.mulf %260, %264 : vector<8x128xf32>
    %266 = arith.truncf %265 : vector<8x128xf32> to vector<8x128xbf16>
    %267 = arith.index_cast %227 : i32 to index
    %c0_105 = arith.constant 0 : index
    %268 = vector.load %arg7[%267, %c0_105] : memref<64x128xbf16, #tpu.memory_space<vmem>>, vector<8x128xbf16>
    tpu.vector_store %arg7[%267, %c0_105], %266 {strides = array<i32>} : memref<64x128xbf16, #tpu.memory_space<vmem>>, vector<8x128xbf16>,
    %c6_i32 = arith.constant 6 : i32
    %c8_i32_106 = arith.constant 8 : i32
    %269 = arith.muli %c6_i32, %c8_i32_106 : i32
    %270 = tpu.assume_multiple %269, 8 : i32
    %271 = arith.index_cast %270 : i32 to index
    %c0_107 = arith.constant 0 : index
    %272 = vector.load %arg8[%271, %c0_107] : memref<64x512xf32, #tpu.memory_space<vmem>>, vector<8x512xf32>
    %273 = arith.truncf %265 : vector<8x128xf32> to vector<8x128xbf16>
    %c0_108 = arith.constant 0 : index
    %c0_109 = arith.constant 0 : index
    %c0_110 = arith.constant 0 : index
    %274 = vector.load %arg2[%c0_108, %c0_109, %c0_110] : memref<2x128x512xbf16, #tpu.memory_space<vmem>>, vector<1x128x512xbf16>
    %275 = vector.shape_cast %274 : vector<1x128x512xbf16> to vector<128x512xbf16>
    %cst_111 = arith.constant dense<0.000000e+00> : vector<8x512xf32>
    %276 = tpu.matmul %273, %275, %cst_111 {dimension_numbers = #tpu.dot_dimension_numbers<[1], [0], [0], [1], [0, 0, 1, 1], [], []>} : vector<8x128xbf16>, vector<128x512xbf16>, vector<8x512xf32> -> vector<8x512xf32>
    %277 = arith.addf %272, %276 : vector<8x512xf32>
    %278 = vector.extract_strided_slice %277 {offsets = [0, 0], sizes = [8, 128], strides = [1, 1]} : vector<8x512xf32> to vector<8x128xf32>
    %cst_112 = arith.constant 5.000000e-01 : f32
    %279 = vector.broadcast %cst_112 : f32 to vector<8x128xf32>
    %280 = arith.mulf %279, %278 : vector<8x128xf32>
    %281 = math.tanh %280 : vector<8x128xf32>
    %cst_113 = arith.constant 5.000000e-01 : f32
    %282 = vector.broadcast %cst_113 : f32 to vector<8x128xf32>
    %283 = arith.mulf %282, %281 : vector<8x128xf32>
    %cst_114 = arith.constant 5.000000e-01 : f32
    %284 = vector.broadcast %cst_114 : f32 to vector<8x128xf32>
    %285 = arith.addf %283, %284 : vector<8x128xf32>
    %286 = vector.extract_strided_slice %277 {offsets = [0, 128], sizes = [8, 128], strides = [1, 1]} : vector<8x512xf32> to vector<8x128xf32>
    %cst_115 = arith.constant 5.000000e-01 : f32
    %287 = vector.broadcast %cst_115 : f32 to vector<8x128xf32>
    %288 = arith.mulf %287, %286 : vector<8x128xf32>
    %289 = math.tanh %288 : vector<8x128xf32>
    %cst_116 = arith.constant 5.000000e-01 : f32
    %290 = vector.broadcast %cst_116 : f32 to vector<8x128xf32>
    %291 = arith.mulf %290, %289 : vector<8x128xf32>
    %cst_117 = arith.constant 5.000000e-01 : f32
    %292 = vector.broadcast %cst_117 : f32 to vector<8x128xf32>
    %293 = arith.addf %291, %292 : vector<8x128xf32>
    %294 = vector.extract_strided_slice %277 {offsets = [0, 256], sizes = [8, 128], strides = [1, 1]} : vector<8x512xf32> to vector<8x128xf32>
    %295 = math.tanh %294 : vector<8x128xf32>
    %296 = vector.extract_strided_slice %277 {offsets = [0, 384], sizes = [8, 128], strides = [1, 1]} : vector<8x512xf32> to vector<8x128xf32>
    %cst_118 = arith.constant 5.000000e-01 : f32
    %297 = vector.broadcast %cst_118 : f32 to vector<8x128xf32>
    %298 = arith.mulf %297, %296 : vector<8x128xf32>
    %299 = math.tanh %298 : vector<8x128xf32>
    %cst_119 = arith.constant 5.000000e-01 : f32
    %300 = vector.broadcast %cst_119 : f32 to vector<8x128xf32>
    %301 = arith.mulf %300, %299 : vector<8x128xf32>
    %cst_120 = arith.constant 5.000000e-01 : f32
    %302 = vector.broadcast %cst_120 : f32 to vector<8x128xf32>
    %303 = arith.addf %301, %302 : vector<8x128xf32>
    %304 = arith.mulf %293, %263 : vector<8x128xf32>
    %305 = arith.mulf %285, %295 : vector<8x128xf32>
    %306 = arith.addf %304, %305 : vector<8x128xf32>
    %307 = math.tanh %306 : vector<8x128xf32>
    %308 = arith.mulf %303, %307 : vector<8x128xf32>
    %309 = arith.truncf %308 : vector<8x128xf32> to vector<8x128xbf16>
    %310 = arith.index_cast %270 : i32 to index
    %c0_121 = arith.constant 0 : index
    %311 = vector.load %arg7[%310, %c0_121] : memref<64x128xbf16, #tpu.memory_space<vmem>>, vector<8x128xbf16>
    tpu.vector_store %arg7[%310, %c0_121], %309 {strides = array<i32>} : memref<64x128xbf16, #tpu.memory_space<vmem>>, vector<8x128xbf16>,
    %c7_i32 = arith.constant 7 : i32
    %c8_i32_122 = arith.constant 8 : i32
    %312 = arith.muli %c7_i32, %c8_i32_122 : i32
    %313 = tpu.assume_multiple %312, 8 : i32
    %314 = arith.index_cast %313 : i32 to index
    %c0_123 = arith.constant 0 : index
    %315 = vector.load %arg8[%314, %c0_123] : memref<64x512xf32, #tpu.memory_space<vmem>>, vector<8x512xf32>
    %316 = arith.truncf %308 : vector<8x128xf32> to vector<8x128xbf16>
    %c0_124 = arith.constant 0 : index
    %c0_125 = arith.constant 0 : index
    %c0_126 = arith.constant 0 : index
    %317 = vector.load %arg2[%c0_124, %c0_125, %c0_126] : memref<2x128x512xbf16, #tpu.memory_space<vmem>>, vector<1x128x512xbf16>
    %318 = vector.shape_cast %317 : vector<1x128x512xbf16> to vector<128x512xbf16>
    %cst_127 = arith.constant dense<0.000000e+00> : vector<8x512xf32>
    %319 = tpu.matmul %316, %318, %cst_127 {dimension_numbers = #tpu.dot_dimension_numbers<[1], [0], [0], [1], [0, 0, 1, 1], [], []>} : vector<8x128xbf16>, vector<128x512xbf16>, vector<8x512xf32> -> vector<8x512xf32>
    %320 = arith.addf %315, %319 : vector<8x512xf32>
    %321 = vector.extract_strided_slice %320 {offsets = [0, 0], sizes = [8, 128], strides = [1, 1]} : vector<8x512xf32> to vector<8x128xf32>
    %cst_128 = arith.constant 5.000000e-01 : f32
    %322 = vector.broadcast %cst_128 : f32 to vector<8x128xf32>
    %323 = arith.mulf %322, %321 : vector<8x128xf32>
    %324 = math.tanh %323 : vector<8x128xf32>
    %cst_129 = arith.constant 5.000000e-01 : f32
    %325 = vector.broadcast %cst_129 : f32 to vector<8x128xf32>
    %326 = arith.mulf %325, %324 : vector<8x128xf32>
    %cst_130 = arith.constant 5.000000e-01 : f32
    %327 = vector.broadcast %cst_130 : f32 to vector<8x128xf32>
    %328 = arith.addf %326, %327 : vector<8x128xf32>
    %329 = vector.extract_strided_slice %320 {offsets = [0, 128], sizes = [8, 128], strides = [1, 1]} : vector<8x512xf32> to vector<8x128xf32>
    %cst_131 = arith.constant 5.000000e-01 : f32
    %330 = vector.broadcast %cst_131 : f32 to vector<8x128xf32>
    %331 = arith.mulf %330, %329 : vector<8x128xf32>
    %332 = math.tanh %331 : vector<8x128xf32>
    %cst_132 = arith.constant 5.000000e-01 : f32
    %333 = vector.broadcast %cst_132 : f32 to vector<8x128xf32>
    %334 = arith.mulf %333, %332 : vector<8x128xf32>
    %cst_133 = arith.constant 5.000000e-01 : f32
    %335 = vector.broadcast %cst_133 : f32 to vector<8x128xf32>
    %336 = arith.addf %334, %335 : vector<8x128xf32>
    %337 = vector.extract_strided_slice %320 {offsets = [0, 256], sizes = [8, 128], strides = [1, 1]} : vector<8x512xf32> to vector<8x128xf32>
    %338 = math.tanh %337 : vector<8x128xf32>
    %339 = vector.extract_strided_slice %320 {offsets = [0, 384], sizes = [8, 128], strides = [1, 1]} : vector<8x512xf32> to vector<8x128xf32>
    %cst_134 = arith.constant 5.000000e-01 : f32
    %340 = vector.broadcast %cst_134 : f32 to vector<8x128xf32>
    %341 = arith.mulf %340, %339 : vector<8x128xf32>
    %342 = math.tanh %341 : vector<8x128xf32>
    %cst_135 = arith.constant 5.000000e-01 : f32
    %343 = vector.broadcast %cst_135 : f32 to vector<8x128xf32>
    %344 = arith.mulf %343, %342 : vector<8x128xf32>
    %cst_136 = arith.constant 5.000000e-01 : f32
    %345 = vector.broadcast %cst_136 : f32 to vector<8x128xf32>
    %346 = arith.addf %344, %345 : vector<8x128xf32>
    %347 = arith.mulf %336, %306 : vector<8x128xf32>
    %348 = arith.mulf %328, %338 : vector<8x128xf32>
    %349 = arith.addf %347, %348 : vector<8x128xf32>
    %350 = math.tanh %349 : vector<8x128xf32>
    %351 = arith.mulf %346, %350 : vector<8x128xf32>
    %352 = arith.truncf %351 : vector<8x128xf32> to vector<8x128xbf16>
    %353 = arith.index_cast %313 : i32 to index
    %c0_137 = arith.constant 0 : index
    %354 = vector.load %arg7[%353, %c0_137] : memref<64x128xbf16, #tpu.memory_space<vmem>>, vector<8x128xbf16>
    tpu.vector_store %arg7[%353, %c0_137], %352 {strides = array<i32>} : memref<64x128xbf16, #tpu.memory_space<vmem>>, vector<8x128xbf16>,
    %c8_i32_138 = arith.constant 8 : i32
    %c0_139 = arith.constant 0 : index
    %c0_140 = arith.constant 0 : index
    %355 = vector.load %arg7[%c0_139, %c0_140] : memref<64x128xbf16, #tpu.memory_space<vmem>>, vector<64x128xbf16>
    %c1 = arith.constant 1 : index
    %c0_141 = arith.constant 0 : index
    %c0_142 = arith.constant 0 : index
    %356 = vector.load %arg1[%c1, %c0_141, %c0_142] : memref<2x128x512xbf16, #tpu.memory_space<vmem>>, vector<1x128x512xbf16>
    %357 = vector.shape_cast %356 : vector<1x128x512xbf16> to vector<128x512xbf16>
    %cst_143 = arith.constant dense<0.000000e+00> : vector<64x512xf32>
    %358 = tpu.matmul %355, %357, %cst_143 {dimension_numbers = #tpu.dot_dimension_numbers<[1], [0], [0], [1], [0, 0, 1, 1], [], []>} : vector<64x128xbf16>, vector<128x512xbf16>, vector<64x512xf32> -> vector<64x512xf32>
    %c1_144 = arith.constant 1 : index
    %c0_145 = arith.constant 0 : index
    %c0_146 = arith.constant 0 : index
    %359 = vector.load %arg3[%c1_144, %c0_145, %c0_146] : memref<2x1x512xf32, #tpu.memory_space<vmem>>, vector<1x1x512xf32>
    %360 = vector.shape_cast %359 : vector<1x1x512xf32> to vector<1x512xf32>
    %361 = vector.broadcast %360 : vector<1x512xf32> to vector<64x512xf32>
    %362 = arith.addf %358, %361 : vector<64x512xf32>
    %c0_147 = arith.constant 0 : index
    %c0_148 = arith.constant 0 : index
    %363 = vector.load %arg8[%c0_147, %c0_148] : memref<64x512xf32, #tpu.memory_space<vmem>>, vector<64x512xf32>
    tpu.vector_store %arg8[%c0_147, %c0_148], %362 {strides = array<i32>} : memref<64x512xf32, #tpu.memory_space<vmem>>, vector<64x512xf32>,
    %cst_149 = arith.constant 0.000000e+00 : f32
    %364 = vector.broadcast %cst_149 : f32 to vector<8x128xf32>
    %cst_150 = arith.constant 0.000000e+00 : f32
    %365 = vector.broadcast %cst_150 : f32 to vector<8x128xf32>
    %c0_i32_151 = arith.constant 0 : i32
    %c8_i32_152 = arith.constant 8 : i32
    %366 = arith.muli %c0_i32_151, %c8_i32_152 : i32
    %367 = tpu.assume_multiple %366, 8 : i32
    %368 = arith.index_cast %367 : i32 to index
    %c0_153 = arith.constant 0 : index
    %369 = vector.load %arg8[%368, %c0_153] : memref<64x512xf32, #tpu.memory_space<vmem>>, vector<8x512xf32>
    %370 = arith.truncf %364 : vector<8x128xf32> to vector<8x128xbf16>
    %c1_154 = arith.constant 1 : index
    %c0_155 = arith.constant 0 : index
    %c0_156 = arith.constant 0 : index
    %371 = vector.load %arg2[%c1_154, %c0_155, %c0_156] : memref<2x128x512xbf16, #tpu.memory_space<vmem>>, vector<1x128x512xbf16>
    %372 = vector.shape_cast %371 : vector<1x128x512xbf16> to vector<128x512xbf16>
    %cst_157 = arith.constant dense<0.000000e+00> : vector<8x512xf32>
    %373 = tpu.matmul %370, %372, %cst_157 {dimension_numbers = #tpu.dot_dimension_numbers<[1], [0], [0], [1], [0, 0, 1, 1], [], []>} : vector<8x128xbf16>, vector<128x512xbf16>, vector<8x512xf32> -> vector<8x512xf32>
    %374 = arith.addf %369, %373 : vector<8x512xf32>
    %375 = vector.extract_strided_slice %374 {offsets = [0, 0], sizes = [8, 128], strides = [1, 1]} : vector<8x512xf32> to vector<8x128xf32>
    %cst_158 = arith.constant 5.000000e-01 : f32
    %376 = vector.broadcast %cst_158 : f32 to vector<8x128xf32>
    %377 = arith.mulf %376, %375 : vector<8x128xf32>
    %378 = math.tanh %377 : vector<8x128xf32>
    %cst_159 = arith.constant 5.000000e-01 : f32
    %379 = vector.broadcast %cst_159 : f32 to vector<8x128xf32>
    %380 = arith.mulf %379, %378 : vector<8x128xf32>
    %cst_160 = arith.constant 5.000000e-01 : f32
    %381 = vector.broadcast %cst_160 : f32 to vector<8x128xf32>
    %382 = arith.addf %380, %381 : vector<8x128xf32>
    %383 = vector.extract_strided_slice %374 {offsets = [0, 128], sizes = [8, 128], strides = [1, 1]} : vector<8x512xf32> to vector<8x128xf32>
    %cst_161 = arith.constant 5.000000e-01 : f32
    %384 = vector.broadcast %cst_161 : f32 to vector<8x128xf32>
    %385 = arith.mulf %384, %383 : vector<8x128xf32>
    %386 = math.tanh %385 : vector<8x128xf32>
    %cst_162 = arith.constant 5.000000e-01 : f32
    %387 = vector.broadcast %cst_162 : f32 to vector<8x128xf32>
    %388 = arith.mulf %387, %386 : vector<8x128xf32>
    %cst_163 = arith.constant 5.000000e-01 : f32
    %389 = vector.broadcast %cst_163 : f32 to vector<8x128xf32>
    %390 = arith.addf %388, %389 : vector<8x128xf32>
    %391 = vector.extract_strided_slice %374 {offsets = [0, 256], sizes = [8, 128], strides = [1, 1]} : vector<8x512xf32> to vector<8x128xf32>
    %392 = math.tanh %391 : vector<8x128xf32>
    %393 = vector.extract_strided_slice %374 {offsets = [0, 384], sizes = [8, 128], strides = [1, 1]} : vector<8x512xf32> to vector<8x128xf32>
    %cst_164 = arith.constant 5.000000e-01 : f32
    %394 = vector.broadcast %cst_164 : f32 to vector<8x128xf32>
    %395 = arith.mulf %394, %393 : vector<8x128xf32>
    %396 = math.tanh %395 : vector<8x128xf32>
    %cst_165 = arith.constant 5.000000e-01 : f32
    %397 = vector.broadcast %cst_165 : f32 to vector<8x128xf32>
    %398 = arith.mulf %397, %396 : vector<8x128xf32>
    %cst_166 = arith.constant 5.000000e-01 : f32
    %399 = vector.broadcast %cst_166 : f32 to vector<8x128xf32>
    %400 = arith.addf %398, %399 : vector<8x128xf32>
    %401 = arith.mulf %390, %365 : vector<8x128xf32>
    %402 = arith.mulf %382, %392 : vector<8x128xf32>
    %403 = arith.addf %401, %402 : vector<8x128xf32>
    %404 = math.tanh %403 : vector<8x128xf32>
    %405 = arith.mulf %400, %404 : vector<8x128xf32>
    %c1_i32_167 = arith.constant 1 : i32
    %c8_i32_168 = arith.constant 8 : i32
    %406 = arith.muli %c1_i32_167, %c8_i32_168 : i32
    %407 = tpu.assume_multiple %406, 8 : i32
    %408 = arith.index_cast %407 : i32 to index
    %c0_169 = arith.constant 0 : index
    %409 = vector.load %arg8[%408, %c0_169] : memref<64x512xf32, #tpu.memory_space<vmem>>, vector<8x512xf32>
    %410 = arith.truncf %405 : vector<8x128xf32> to vector<8x128xbf16>
    %c1_170 = arith.constant 1 : index
    %c0_171 = arith.constant 0 : index
    %c0_172 = arith.constant 0 : index
    %411 = vector.load %arg2[%c1_170, %c0_171, %c0_172] : memref<2x128x512xbf16, #tpu.memory_space<vmem>>, vector<1x128x512xbf16>
    %412 = vector.shape_cast %411 : vector<1x128x512xbf16> to vector<128x512xbf16>
    %cst_173 = arith.constant dense<0.000000e+00> : vector<8x512xf32>
    %413 = tpu.matmul %410, %412, %cst_173 {dimension_numbers = #tpu.dot_dimension_numbers<[1], [0], [0], [1], [0, 0, 1, 1], [], []>} : vector<8x128xbf16>, vector<128x512xbf16>, vector<8x512xf32> -> vector<8x512xf32>
    %414 = arith.addf %409, %413 : vector<8x512xf32>
    %415 = vector.extract_strided_slice %414 {offsets = [0, 0], sizes = [8, 128], strides = [1, 1]} : vector<8x512xf32> to vector<8x128xf32>
    %cst_174 = arith.constant 5.000000e-01 : f32
    %416 = vector.broadcast %cst_174 : f32 to vector<8x128xf32>
    %417 = arith.mulf %416, %415 : vector<8x128xf32>
    %418 = math.tanh %417 : vector<8x128xf32>
    %cst_175 = arith.constant 5.000000e-01 : f32
    %419 = vector.broadcast %cst_175 : f32 to vector<8x128xf32>
    %420 = arith.mulf %419, %418 : vector<8x128xf32>
    %cst_176 = arith.constant 5.000000e-01 : f32
    %421 = vector.broadcast %cst_176 : f32 to vector<8x128xf32>
    %422 = arith.addf %420, %421 : vector<8x128xf32>
    %423 = vector.extract_strided_slice %414 {offsets = [0, 128], sizes = [8, 128], strides = [1, 1]} : vector<8x512xf32> to vector<8x128xf32>
    %cst_177 = arith.constant 5.000000e-01 : f32
    %424 = vector.broadcast %cst_177 : f32 to vector<8x128xf32>
    %425 = arith.mulf %424, %423 : vector<8x128xf32>
    %426 = math.tanh %425 : vector<8x128xf32>
    %cst_178 = arith.constant 5.000000e-01 : f32
    %427 = vector.broadcast %cst_178 : f32 to vector<8x128xf32>
    %428 = arith.mulf %427, %426 : vector<8x128xf32>
    %cst_179 = arith.constant 5.000000e-01 : f32
    %429 = vector.broadcast %cst_179 : f32 to vector<8x128xf32>
    %430 = arith.addf %428, %429 : vector<8x128xf32>
    %431 = vector.extract_strided_slice %414 {offsets = [0, 256], sizes = [8, 128], strides = [1, 1]} : vector<8x512xf32> to vector<8x128xf32>
    %432 = math.tanh %431 : vector<8x128xf32>
    %433 = vector.extract_strided_slice %414 {offsets = [0, 384], sizes = [8, 128], strides = [1, 1]} : vector<8x512xf32> to vector<8x128xf32>
    %cst_180 = arith.constant 5.000000e-01 : f32
    %434 = vector.broadcast %cst_180 : f32 to vector<8x128xf32>
    %435 = arith.mulf %434, %433 : vector<8x128xf32>
    %436 = math.tanh %435 : vector<8x128xf32>
    %cst_181 = arith.constant 5.000000e-01 : f32
    %437 = vector.broadcast %cst_181 : f32 to vector<8x128xf32>
    %438 = arith.mulf %437, %436 : vector<8x128xf32>
    %cst_182 = arith.constant 5.000000e-01 : f32
    %439 = vector.broadcast %cst_182 : f32 to vector<8x128xf32>
    %440 = arith.addf %438, %439 : vector<8x128xf32>
    %441 = arith.mulf %430, %403 : vector<8x128xf32>
    %442 = arith.mulf %422, %432 : vector<8x128xf32>
    %443 = arith.addf %441, %442 : vector<8x128xf32>
    %444 = math.tanh %443 : vector<8x128xf32>
    %445 = arith.mulf %440, %444 : vector<8x128xf32>
    %c2_i32_183 = arith.constant 2 : i32
    %c8_i32_184 = arith.constant 8 : i32
    %446 = arith.muli %c2_i32_183, %c8_i32_184 : i32
    %447 = tpu.assume_multiple %446, 8 : i32
    %448 = arith.index_cast %447 : i32 to index
    %c0_185 = arith.constant 0 : index
    %449 = vector.load %arg8[%448, %c0_185] : memref<64x512xf32, #tpu.memory_space<vmem>>, vector<8x512xf32>
    %450 = arith.truncf %445 : vector<8x128xf32> to vector<8x128xbf16>
    %c1_186 = arith.constant 1 : index
    %c0_187 = arith.constant 0 : index
    %c0_188 = arith.constant 0 : index
    %451 = vector.load %arg2[%c1_186, %c0_187, %c0_188] : memref<2x128x512xbf16, #tpu.memory_space<vmem>>, vector<1x128x512xbf16>
    %452 = vector.shape_cast %451 : vector<1x128x512xbf16> to vector<128x512xbf16>
    %cst_189 = arith.constant dense<0.000000e+00> : vector<8x512xf32>
    %453 = tpu.matmul %450, %452, %cst_189 {dimension_numbers = #tpu.dot_dimension_numbers<[1], [0], [0], [1], [0, 0, 1, 1], [], []>} : vector<8x128xbf16>, vector<128x512xbf16>, vector<8x512xf32> -> vector<8x512xf32>
    %454 = arith.addf %449, %453 : vector<8x512xf32>
    %455 = vector.extract_strided_slice %454 {offsets = [0, 0], sizes = [8, 128], strides = [1, 1]} : vector<8x512xf32> to vector<8x128xf32>
    %cst_190 = arith.constant 5.000000e-01 : f32
    %456 = vector.broadcast %cst_190 : f32 to vector<8x128xf32>
    %457 = arith.mulf %456, %455 : vector<8x128xf32>
    %458 = math.tanh %457 : vector<8x128xf32>
    %cst_191 = arith.constant 5.000000e-01 : f32
    %459 = vector.broadcast %cst_191 : f32 to vector<8x128xf32>
    %460 = arith.mulf %459, %458 : vector<8x128xf32>
    %cst_192 = arith.constant 5.000000e-01 : f32
    %461 = vector.broadcast %cst_192 : f32 to vector<8x128xf32>
    %462 = arith.addf %460, %461 : vector<8x128xf32>
    %463 = vector.extract_strided_slice %454 {offsets = [0, 128], sizes = [8, 128], strides = [1, 1]} : vector<8x512xf32> to vector<8x128xf32>
    %cst_193 = arith.constant 5.000000e-01 : f32
    %464 = vector.broadcast %cst_193 : f32 to vector<8x128xf32>
    %465 = arith.mulf %464, %463 : vector<8x128xf32>
    %466 = math.tanh %465 : vector<8x128xf32>
    %cst_194 = arith.constant 5.000000e-01 : f32
    %467 = vector.broadcast %cst_194 : f32 to vector<8x128xf32>
    %468 = arith.mulf %467, %466 : vector<8x128xf32>
    %cst_195 = arith.constant 5.000000e-01 : f32
    %469 = vector.broadcast %cst_195 : f32 to vector<8x128xf32>
    %470 = arith.addf %468, %469 : vector<8x128xf32>
    %471 = vector.extract_strided_slice %454 {offsets = [0, 256], sizes = [8, 128], strides = [1, 1]} : vector<8x512xf32> to vector<8x128xf32>
    %472 = math.tanh %471 : vector<8x128xf32>
    %473 = vector.extract_strided_slice %454 {offsets = [0, 384], sizes = [8, 128], strides = [1, 1]} : vector<8x512xf32> to vector<8x128xf32>
    %cst_196 = arith.constant 5.000000e-01 : f32
    %474 = vector.broadcast %cst_196 : f32 to vector<8x128xf32>
    %475 = arith.mulf %474, %473 : vector<8x128xf32>
    %476 = math.tanh %475 : vector<8x128xf32>
    %cst_197 = arith.constant 5.000000e-01 : f32
    %477 = vector.broadcast %cst_197 : f32 to vector<8x128xf32>
    %478 = arith.mulf %477, %476 : vector<8x128xf32>
    %cst_198 = arith.constant 5.000000e-01 : f32
    %479 = vector.broadcast %cst_198 : f32 to vector<8x128xf32>
    %480 = arith.addf %478, %479 : vector<8x128xf32>
    %481 = arith.mulf %470, %443 : vector<8x128xf32>
    %482 = arith.mulf %462, %472 : vector<8x128xf32>
    %483 = arith.addf %481, %482 : vector<8x128xf32>
    %484 = math.tanh %483 : vector<8x128xf32>
    %485 = arith.mulf %480, %484 : vector<8x128xf32>
    %c3_i32_199 = arith.constant 3 : i32
    %c8_i32_200 = arith.constant 8 : i32
    %486 = arith.muli %c3_i32_199, %c8_i32_200 : i32
    %487 = tpu.assume_multiple %486, 8 : i32
    %488 = arith.index_cast %487 : i32 to index
    %c0_201 = arith.constant 0 : index
    %489 = vector.load %arg8[%488, %c0_201] : memref<64x512xf32, #tpu.memory_space<vmem>>, vector<8x512xf32>
    %490 = arith.truncf %485 : vector<8x128xf32> to vector<8x128xbf16>
    %c1_202 = arith.constant 1 : index
    %c0_203 = arith.constant 0 : index
    %c0_204 = arith.constant 0 : index
    %491 = vector.load %arg2[%c1_202, %c0_203, %c0_204] : memref<2x128x512xbf16, #tpu.memory_space<vmem>>, vector<1x128x512xbf16>
    %492 = vector.shape_cast %491 : vector<1x128x512xbf16> to vector<128x512xbf16>
    %cst_205 = arith.constant dense<0.000000e+00> : vector<8x512xf32>
    %493 = tpu.matmul %490, %492, %cst_205 {dimension_numbers = #tpu.dot_dimension_numbers<[1], [0], [0], [1], [0, 0, 1, 1], [], []>} : vector<8x128xbf16>, vector<128x512xbf16>, vector<8x512xf32> -> vector<8x512xf32>
    %494 = arith.addf %489, %493 : vector<8x512xf32>
    %495 = vector.extract_strided_slice %494 {offsets = [0, 0], sizes = [8, 128], strides = [1, 1]} : vector<8x512xf32> to vector<8x128xf32>
    %cst_206 = arith.constant 5.000000e-01 : f32
    %496 = vector.broadcast %cst_206 : f32 to vector<8x128xf32>
    %497 = arith.mulf %496, %495 : vector<8x128xf32>
    %498 = math.tanh %497 : vector<8x128xf32>
    %cst_207 = arith.constant 5.000000e-01 : f32
    %499 = vector.broadcast %cst_207 : f32 to vector<8x128xf32>
    %500 = arith.mulf %499, %498 : vector<8x128xf32>
    %cst_208 = arith.constant 5.000000e-01 : f32
    %501 = vector.broadcast %cst_208 : f32 to vector<8x128xf32>
    %502 = arith.addf %500, %501 : vector<8x128xf32>
    %503 = vector.extract_strided_slice %494 {offsets = [0, 128], sizes = [8, 128], strides = [1, 1]} : vector<8x512xf32> to vector<8x128xf32>
    %cst_209 = arith.constant 5.000000e-01 : f32
    %504 = vector.broadcast %cst_209 : f32 to vector<8x128xf32>
    %505 = arith.mulf %504, %503 : vector<8x128xf32>
    %506 = math.tanh %505 : vector<8x128xf32>
    %cst_210 = arith.constant 5.000000e-01 : f32
    %507 = vector.broadcast %cst_210 : f32 to vector<8x128xf32>
    %508 = arith.mulf %507, %506 : vector<8x128xf32>
    %cst_211 = arith.constant 5.000000e-01 : f32
    %509 = vector.broadcast %cst_211 : f32 to vector<8x128xf32>
    %510 = arith.addf %508, %509 : vector<8x128xf32>
    %511 = vector.extract_strided_slice %494 {offsets = [0, 256], sizes = [8, 128], strides = [1, 1]} : vector<8x512xf32> to vector<8x128xf32>
    %512 = math.tanh %511 : vector<8x128xf32>
    %513 = vector.extract_strided_slice %494 {offsets = [0, 384], sizes = [8, 128], strides = [1, 1]} : vector<8x512xf32> to vector<8x128xf32>
    %cst_212 = arith.constant 5.000000e-01 : f32
    %514 = vector.broadcast %cst_212 : f32 to vector<8x128xf32>
    %515 = arith.mulf %514, %513 : vector<8x128xf32>
    %516 = math.tanh %515 : vector<8x128xf32>
    %cst_213 = arith.constant 5.000000e-01 : f32
    %517 = vector.broadcast %cst_213 : f32 to vector<8x128xf32>
    %518 = arith.mulf %517, %516 : vector<8x128xf32>
    %cst_214 = arith.constant 5.000000e-01 : f32
    %519 = vector.broadcast %cst_214 : f32 to vector<8x128xf32>
    %520 = arith.addf %518, %519 : vector<8x128xf32>
    %521 = arith.mulf %510, %483 : vector<8x128xf32>
    %522 = arith.mulf %502, %512 : vector<8x128xf32>
    %523 = arith.addf %521, %522 : vector<8x128xf32>
    %524 = math.tanh %523 : vector<8x128xf32>
    %525 = arith.mulf %520, %524 : vector<8x128xf32>
    %c4_i32_215 = arith.constant 4 : i32
    %c8_i32_216 = arith.constant 8 : i32
    %526 = arith.muli %c4_i32_215, %c8_i32_216 : i32
    %527 = tpu.assume_multiple %526, 8 : i32
    %528 = arith.index_cast %527 : i32 to index
    %c0_217 = arith.constant 0 : index
    %529 = vector.load %arg8[%528, %c0_217] : memref<64x512xf32, #tpu.memory_space<vmem>>, vector<8x512xf32>
    %530 = arith.truncf %525 : vector<8x128xf32> to vector<8x128xbf16>
    %c1_218 = arith.constant 1 : index
    %c0_219 = arith.constant 0 : index
    %c0_220 = arith.constant 0 : index
    %531 = vector.load %arg2[%c1_218, %c0_219, %c0_220] : memref<2x128x512xbf16, #tpu.memory_space<vmem>>, vector<1x128x512xbf16>
    %532 = vector.shape_cast %531 : vector<1x128x512xbf16> to vector<128x512xbf16>
    %cst_221 = arith.constant dense<0.000000e+00> : vector<8x512xf32>
    %533 = tpu.matmul %530, %532, %cst_221 {dimension_numbers = #tpu.dot_dimension_numbers<[1], [0], [0], [1], [0, 0, 1, 1], [], []>} : vector<8x128xbf16>, vector<128x512xbf16>, vector<8x512xf32> -> vector<8x512xf32>
    %534 = arith.addf %529, %533 : vector<8x512xf32>
    %535 = vector.extract_strided_slice %534 {offsets = [0, 0], sizes = [8, 128], strides = [1, 1]} : vector<8x512xf32> to vector<8x128xf32>
    %cst_222 = arith.constant 5.000000e-01 : f32
    %536 = vector.broadcast %cst_222 : f32 to vector<8x128xf32>
    %537 = arith.mulf %536, %535 : vector<8x128xf32>
    %538 = math.tanh %537 : vector<8x128xf32>
    %cst_223 = arith.constant 5.000000e-01 : f32
    %539 = vector.broadcast %cst_223 : f32 to vector<8x128xf32>
    %540 = arith.mulf %539, %538 : vector<8x128xf32>
    %cst_224 = arith.constant 5.000000e-01 : f32
    %541 = vector.broadcast %cst_224 : f32 to vector<8x128xf32>
    %542 = arith.addf %540, %541 : vector<8x128xf32>
    %543 = vector.extract_strided_slice %534 {offsets = [0, 128], sizes = [8, 128], strides = [1, 1]} : vector<8x512xf32> to vector<8x128xf32>
    %cst_225 = arith.constant 5.000000e-01 : f32
    %544 = vector.broadcast %cst_225 : f32 to vector<8x128xf32>
    %545 = arith.mulf %544, %543 : vector<8x128xf32>
    %546 = math.tanh %545 : vector<8x128xf32>
    %cst_226 = arith.constant 5.000000e-01 : f32
    %547 = vector.broadcast %cst_226 : f32 to vector<8x128xf32>
    %548 = arith.mulf %547, %546 : vector<8x128xf32>
    %cst_227 = arith.constant 5.000000e-01 : f32
    %549 = vector.broadcast %cst_227 : f32 to vector<8x128xf32>
    %550 = arith.addf %548, %549 : vector<8x128xf32>
    %551 = vector.extract_strided_slice %534 {offsets = [0, 256], sizes = [8, 128], strides = [1, 1]} : vector<8x512xf32> to vector<8x128xf32>
    %552 = math.tanh %551 : vector<8x128xf32>
    %553 = vector.extract_strided_slice %534 {offsets = [0, 384], sizes = [8, 128], strides = [1, 1]} : vector<8x512xf32> to vector<8x128xf32>
    %cst_228 = arith.constant 5.000000e-01 : f32
    %554 = vector.broadcast %cst_228 : f32 to vector<8x128xf32>
    %555 = arith.mulf %554, %553 : vector<8x128xf32>
    %556 = math.tanh %555 : vector<8x128xf32>
    %cst_229 = arith.constant 5.000000e-01 : f32
    %557 = vector.broadcast %cst_229 : f32 to vector<8x128xf32>
    %558 = arith.mulf %557, %556 : vector<8x128xf32>
    %cst_230 = arith.constant 5.000000e-01 : f32
    %559 = vector.broadcast %cst_230 : f32 to vector<8x128xf32>
    %560 = arith.addf %558, %559 : vector<8x128xf32>
    %561 = arith.mulf %550, %523 : vector<8x128xf32>
    %562 = arith.mulf %542, %552 : vector<8x128xf32>
    %563 = arith.addf %561, %562 : vector<8x128xf32>
    %564 = math.tanh %563 : vector<8x128xf32>
    %565 = arith.mulf %560, %564 : vector<8x128xf32>
    %c5_i32_231 = arith.constant 5 : i32
    %c8_i32_232 = arith.constant 8 : i32
    %566 = arith.muli %c5_i32_231, %c8_i32_232 : i32
    %567 = tpu.assume_multiple %566, 8 : i32
    %568 = arith.index_cast %567 : i32 to index
    %c0_233 = arith.constant 0 : index
    %569 = vector.load %arg8[%568, %c0_233] : memref<64x512xf32, #tpu.memory_space<vmem>>, vector<8x512xf32>
    %570 = arith.truncf %565 : vector<8x128xf32> to vector<8x128xbf16>
    %c1_234 = arith.constant 1 : index
    %c0_235 = arith.constant 0 : index
    %c0_236 = arith.constant 0 : index
    %571 = vector.load %arg2[%c1_234, %c0_235, %c0_236] : memref<2x128x512xbf16, #tpu.memory_space<vmem>>, vector<1x128x512xbf16>
    %572 = vector.shape_cast %571 : vector<1x128x512xbf16> to vector<128x512xbf16>
    %cst_237 = arith.constant dense<0.000000e+00> : vector<8x512xf32>
    %573 = tpu.matmul %570, %572, %cst_237 {dimension_numbers = #tpu.dot_dimension_numbers<[1], [0], [0], [1], [0, 0, 1, 1], [], []>} : vector<8x128xbf16>, vector<128x512xbf16>, vector<8x512xf32> -> vector<8x512xf32>
    %574 = arith.addf %569, %573 : vector<8x512xf32>
    %575 = vector.extract_strided_slice %574 {offsets = [0, 0], sizes = [8, 128], strides = [1, 1]} : vector<8x512xf32> to vector<8x128xf32>
    %cst_238 = arith.constant 5.000000e-01 : f32
    %576 = vector.broadcast %cst_238 : f32 to vector<8x128xf32>
    %577 = arith.mulf %576, %575 : vector<8x128xf32>
    %578 = math.tanh %577 : vector<8x128xf32>
    %cst_239 = arith.constant 5.000000e-01 : f32
    %579 = vector.broadcast %cst_239 : f32 to vector<8x128xf32>
    %580 = arith.mulf %579, %578 : vector<8x128xf32>
    %cst_240 = arith.constant 5.000000e-01 : f32
    %581 = vector.broadcast %cst_240 : f32 to vector<8x128xf32>
    %582 = arith.addf %580, %581 : vector<8x128xf32>
    %583 = vector.extract_strided_slice %574 {offsets = [0, 128], sizes = [8, 128], strides = [1, 1]} : vector<8x512xf32> to vector<8x128xf32>
    %cst_241 = arith.constant 5.000000e-01 : f32
    %584 = vector.broadcast %cst_241 : f32 to vector<8x128xf32>
    %585 = arith.mulf %584, %583 : vector<8x128xf32>
    %586 = math.tanh %585 : vector<8x128xf32>
    %cst_242 = arith.constant 5.000000e-01 : f32
    %587 = vector.broadcast %cst_242 : f32 to vector<8x128xf32>
    %588 = arith.mulf %587, %586 : vector<8x128xf32>
    %cst_243 = arith.constant 5.000000e-01 : f32
    %589 = vector.broadcast %cst_243 : f32 to vector<8x128xf32>
    %590 = arith.addf %588, %589 : vector<8x128xf32>
    %591 = vector.extract_strided_slice %574 {offsets = [0, 256], sizes = [8, 128], strides = [1, 1]} : vector<8x512xf32> to vector<8x128xf32>
    %592 = math.tanh %591 : vector<8x128xf32>
    %593 = vector.extract_strided_slice %574 {offsets = [0, 384], sizes = [8, 128], strides = [1, 1]} : vector<8x512xf32> to vector<8x128xf32>
    %cst_244 = arith.constant 5.000000e-01 : f32
    %594 = vector.broadcast %cst_244 : f32 to vector<8x128xf32>
    %595 = arith.mulf %594, %593 : vector<8x128xf32>
    %596 = math.tanh %595 : vector<8x128xf32>
    %cst_245 = arith.constant 5.000000e-01 : f32
    %597 = vector.broadcast %cst_245 : f32 to vector<8x128xf32>
    %598 = arith.mulf %597, %596 : vector<8x128xf32>
    %cst_246 = arith.constant 5.000000e-01 : f32
    %599 = vector.broadcast %cst_246 : f32 to vector<8x128xf32>
    %600 = arith.addf %598, %599 : vector<8x128xf32>
    %601 = arith.mulf %590, %563 : vector<8x128xf32>
    %602 = arith.mulf %582, %592 : vector<8x128xf32>
    %603 = arith.addf %601, %602 : vector<8x128xf32>
    %604 = math.tanh %603 : vector<8x128xf32>
    %605 = arith.mulf %600, %604 : vector<8x128xf32>
    %c6_i32_247 = arith.constant 6 : i32
    %c8_i32_248 = arith.constant 8 : i32
    %606 = arith.muli %c6_i32_247, %c8_i32_248 : i32
    %607 = tpu.assume_multiple %606, 8 : i32
    %608 = arith.index_cast %607 : i32 to index
    %c0_249 = arith.constant 0 : index
    %609 = vector.load %arg8[%608, %c0_249] : memref<64x512xf32, #tpu.memory_space<vmem>>, vector<8x512xf32>
    %610 = arith.truncf %605 : vector<8x128xf32> to vector<8x128xbf16>
    %c1_250 = arith.constant 1 : index
    %c0_251 = arith.constant 0 : index
    %c0_252 = arith.constant 0 : index
    %611 = vector.load %arg2[%c1_250, %c0_251, %c0_252] : memref<2x128x512xbf16, #tpu.memory_space<vmem>>, vector<1x128x512xbf16>
    %612 = vector.shape_cast %611 : vector<1x128x512xbf16> to vector<128x512xbf16>
    %cst_253 = arith.constant dense<0.000000e+00> : vector<8x512xf32>
    %613 = tpu.matmul %610, %612, %cst_253 {dimension_numbers = #tpu.dot_dimension_numbers<[1], [0], [0], [1], [0, 0, 1, 1], [], []>} : vector<8x128xbf16>, vector<128x512xbf16>, vector<8x512xf32> -> vector<8x512xf32>
    %614 = arith.addf %609, %613 : vector<8x512xf32>
    %615 = vector.extract_strided_slice %614 {offsets = [0, 0], sizes = [8, 128], strides = [1, 1]} : vector<8x512xf32> to vector<8x128xf32>
    %cst_254 = arith.constant 5.000000e-01 : f32
    %616 = vector.broadcast %cst_254 : f32 to vector<8x128xf32>
    %617 = arith.mulf %616, %615 : vector<8x128xf32>
    %618 = math.tanh %617 : vector<8x128xf32>
    %cst_255 = arith.constant 5.000000e-01 : f32
    %619 = vector.broadcast %cst_255 : f32 to vector<8x128xf32>
    %620 = arith.mulf %619, %618 : vector<8x128xf32>
    %cst_256 = arith.constant 5.000000e-01 : f32
    %621 = vector.broadcast %cst_256 : f32 to vector<8x128xf32>
    %622 = arith.addf %620, %621 : vector<8x128xf32>
    %623 = vector.extract_strided_slice %614 {offsets = [0, 128], sizes = [8, 128], strides = [1, 1]} : vector<8x512xf32> to vector<8x128xf32>
    %cst_257 = arith.constant 5.000000e-01 : f32
    %624 = vector.broadcast %cst_257 : f32 to vector<8x128xf32>
    %625 = arith.mulf %624, %623 : vector<8x128xf32>
    %626 = math.tanh %625 : vector<8x128xf32>
    %cst_258 = arith.constant 5.000000e-01 : f32
    %627 = vector.broadcast %cst_258 : f32 to vector<8x128xf32>
    %628 = arith.mulf %627, %626 : vector<8x128xf32>
    %cst_259 = arith.constant 5.000000e-01 : f32
    %629 = vector.broadcast %cst_259 : f32 to vector<8x128xf32>
    %630 = arith.addf %628, %629 : vector<8x128xf32>
    %631 = vector.extract_strided_slice %614 {offsets = [0, 256], sizes = [8, 128], strides = [1, 1]} : vector<8x512xf32> to vector<8x128xf32>
    %632 = math.tanh %631 : vector<8x128xf32>
    %633 = vector.extract_strided_slice %614 {offsets = [0, 384], sizes = [8, 128], strides = [1, 1]} : vector<8x512xf32> to vector<8x128xf32>
    %cst_260 = arith.constant 5.000000e-01 : f32
    %634 = vector.broadcast %cst_260 : f32 to vector<8x128xf32>
    %635 = arith.mulf %634, %633 : vector<8x128xf32>
    %636 = math.tanh %635 : vector<8x128xf32>
    %cst_261 = arith.constant 5.000000e-01 : f32
    %637 = vector.broadcast %cst_261 : f32 to vector<8x128xf32>
    %638 = arith.mulf %637, %636 : vector<8x128xf32>
    %cst_262 = arith.constant 5.000000e-01 : f32
    %639 = vector.broadcast %cst_262 : f32 to vector<8x128xf32>
    %640 = arith.addf %638, %639 : vector<8x128xf32>
    %641 = arith.mulf %630, %603 : vector<8x128xf32>
    %642 = arith.mulf %622, %632 : vector<8x128xf32>
    %643 = arith.addf %641, %642 : vector<8x128xf32>
    %644 = math.tanh %643 : vector<8x128xf32>
    %645 = arith.mulf %640, %644 : vector<8x128xf32>
    %c7_i32_263 = arith.constant 7 : i32
    %c8_i32_264 = arith.constant 8 : i32
    %646 = arith.muli %c7_i32_263, %c8_i32_264 : i32
    %647 = tpu.assume_multiple %646, 8 : i32
    %648 = arith.index_cast %647 : i32 to index
    %c0_265 = arith.constant 0 : index
    %649 = vector.load %arg8[%648, %c0_265] : memref<64x512xf32, #tpu.memory_space<vmem>>, vector<8x512xf32>
    %650 = arith.truncf %645 : vector<8x128xf32> to vector<8x128xbf16>
    %c1_266 = arith.constant 1 : index
    %c0_267 = arith.constant 0 : index
    %c0_268 = arith.constant 0 : index
    %651 = vector.load %arg2[%c1_266, %c0_267, %c0_268] : memref<2x128x512xbf16, #tpu.memory_space<vmem>>, vector<1x128x512xbf16>
    %652 = vector.shape_cast %651 : vector<1x128x512xbf16> to vector<128x512xbf16>
    %cst_269 = arith.constant dense<0.000000e+00> : vector<8x512xf32>
    %653 = tpu.matmul %650, %652, %cst_269 {dimension_numbers = #tpu.dot_dimension_numbers<[1], [0], [0], [1], [0, 0, 1, 1], [], []>} : vector<8x128xbf16>, vector<128x512xbf16>, vector<8x512xf32> -> vector<8x512xf32>
    %654 = arith.addf %649, %653 : vector<8x512xf32>
    %655 = vector.extract_strided_slice %654 {offsets = [0, 0], sizes = [8, 128], strides = [1, 1]} : vector<8x512xf32> to vector<8x128xf32>
    %cst_270 = arith.constant 5.000000e-01 : f32
    %656 = vector.broadcast %cst_270 : f32 to vector<8x128xf32>
    %657 = arith.mulf %656, %655 : vector<8x128xf32>
    %658 = math.tanh %657 : vector<8x128xf32>
    %cst_271 = arith.constant 5.000000e-01 : f32
    %659 = vector.broadcast %cst_271 : f32 to vector<8x128xf32>
    %660 = arith.mulf %659, %658 : vector<8x128xf32>
    %cst_272 = arith.constant 5.000000e-01 : f32
    %661 = vector.broadcast %cst_272 : f32 to vector<8x128xf32>
    %662 = arith.addf %660, %661 : vector<8x128xf32>
    %663 = vector.extract_strided_slice %654 {offsets = [0, 128], sizes = [8, 128], strides = [1, 1]} : vector<8x512xf32> to vector<8x128xf32>
    %cst_273 = arith.constant 5.000000e-01 : f32
    %664 = vector.broadcast %cst_273 : f32 to vector<8x128xf32>
    %665 = arith.mulf %664, %663 : vector<8x128xf32>
    %666 = math.tanh %665 : vector<8x128xf32>
    %cst_274 = arith.constant 5.000000e-01 : f32
    %667 = vector.broadcast %cst_274 : f32 to vector<8x128xf32>
    %668 = arith.mulf %667, %666 : vector<8x128xf32>
    %cst_275 = arith.constant 5.000000e-01 : f32
    %669 = vector.broadcast %cst_275 : f32 to vector<8x128xf32>
    %670 = arith.addf %668, %669 : vector<8x128xf32>
    %671 = vector.extract_strided_slice %654 {offsets = [0, 256], sizes = [8, 128], strides = [1, 1]} : vector<8x512xf32> to vector<8x128xf32>
    %672 = math.tanh %671 : vector<8x128xf32>
    %673 = vector.extract_strided_slice %654 {offsets = [0, 384], sizes = [8, 128], strides = [1, 1]} : vector<8x512xf32> to vector<8x128xf32>
    %cst_276 = arith.constant 5.000000e-01 : f32
    %674 = vector.broadcast %cst_276 : f32 to vector<8x128xf32>
    %675 = arith.mulf %674, %673 : vector<8x128xf32>
    %676 = math.tanh %675 : vector<8x128xf32>
    %cst_277 = arith.constant 5.000000e-01 : f32
    %677 = vector.broadcast %cst_277 : f32 to vector<8x128xf32>
    %678 = arith.mulf %677, %676 : vector<8x128xf32>
    %cst_278 = arith.constant 5.000000e-01 : f32
    %679 = vector.broadcast %cst_278 : f32 to vector<8x128xf32>
    %680 = arith.addf %678, %679 : vector<8x128xf32>
    %681 = arith.mulf %670, %643 : vector<8x128xf32>
    %682 = arith.mulf %662, %672 : vector<8x128xf32>
    %683 = arith.addf %681, %682 : vector<8x128xf32>
    %684 = math.tanh %683 : vector<8x128xf32>
    %685 = arith.mulf %680, %684 : vector<8x128xf32>
    %c8_i32_279 = arith.constant 8 : i32
    %686 = arith.truncf %685 : vector<8x128xf32> to vector<8x128xbf16>
    %c0_280 = arith.constant 0 : index
    %c0_281 = arith.constant 0 : index
    %687 = vector.load %arg4[%c0_280, %c0_281] : memref<128x128xbf16, #tpu.memory_space<vmem>>, vector<128x128xbf16>
    %cst_282 = arith.constant dense<0.000000e+00> : vector<8x128xf32>
    %688 = tpu.matmul %686, %687, %cst_282 {dimension_numbers = #tpu.dot_dimension_numbers<[1], [0], [0], [1], [0, 0, 1, 1], [], []>} : vector<8x128xbf16>, vector<128x128xbf16>, vector<8x128xf32> -> vector<8x128xf32>
    %c0_283 = arith.constant 0 : index
    %c0_284 = arith.constant 0 : index
    %689 = vector.load %arg5[%c0_283, %c0_284] : memref<1x128xf32, #tpu.memory_space<vmem>>, vector<1x128xf32>
    %690 = vector.broadcast %689 : vector<1x128xf32> to vector<8x128xf32>
    %691 = arith.addf %688, %690 : vector<8x128xf32>
    %c0_285 = arith.constant 0 : index
    %c0_286 = arith.constant 0 : index
    %692 = vector.load %arg6[%c0_285, %c0_286] : memref<8x128xf32, #tpu.memory_space<vmem>>, vector<8x128xf32>
    tpu.vector_store %arg6[%c0_285, %c0_286], %691 {strides = array<i32>} : memref<8x128xf32, #tpu.memory_space<vmem>>, vector<8x128xf32>,
    return
  }
}

</mosaic_0001>

<llo_original>
// kernel: tpu_custom_call.1
$region0: #{tpu_custom_call.1}
  #allocation0 [shape = 'u32[]', space=smem, size = 0x4, offset = 0x4, fixed_abs, tag = 'smem constant byte address 0x4 - core index']
  #allocation1 [shape = 'u32[144,128]{1,0:T(1,128)}', space=vmem, size = 0x12000, scoped, tag = 'internal scratch']
  #allocation2 [shape = 'bf16[64,128]{1,0:T(8,128)(2,1)}', space=vmem, size = 0x4000, scoped, tag = 'scratch operand']
  #allocation3 [shape = 'f32[64,512]{1,0:T(8,128)}', space=vmem, size = 0x20000, scoped, tag = 'scratch operand']
  %s0 = inlined_call_operand.hbm [shape: bf16[64,128], index: 0, kind: input, shape index: {}]
  %s1 = inlined_call_operand.hbm [shape: bf16[2,128,512], index: 1, kind: input, shape index: {}]
  %s2 = inlined_call_operand.hbm [shape: bf16[2,128,512], index: 2, kind: input, shape index: {}]
  %s3 = inlined_call_operand.hbm [shape: f32[2,1,512], index: 3, kind: input, shape index: {}]
  %s4 = inlined_call_operand.hbm [shape: bf16[128,128], index: 4, kind: input, shape index: {}]
  %s5 = inlined_call_operand.vmem [shape: f32[1,128], index: 5, kind: input, shape index: {}]
  %s6 = inlined_call_operand.hbm [shape: f32[8,128], index: 6, kind: output, shape index: {}]
  %s7 = sld [smem:[#allocation0]]
  $region54: #{tpu_custom_call.1} parent=0
    _
  %s9 = ssub.s32 1, %s7
  %s10 = scalar_select 0, %s9, %s7
  $region1: #{tpu_custom_call.1} parent=0
    #allocation4 [shape = 'u8[16384]{0}', space=vmem, size = 0x4000, scoped, tag = 'input window, operand 0, single buffered']
    #allocation5 [shape = 's32[1]{0}', space=sflag, size = 0x4, scoped, tag = 'scoped memory for tpu_custom_call.1']
    #allocation6 [shape = 's32[1]{0}', space=sflag, size = 0x4, scoped, tag = 'scoped memory for tpu_custom_call.1']
    #allocation7 [shape = 'u8[262144]{0}', space=vmem, size = 0x40000, scoped, tag = 'input window, operand 1, single buffered']
    #allocation8 [shape = 's32[1]{0}', space=sflag, size = 0x4, scoped, tag = 'scoped memory for tpu_custom_call.1']
    #allocation9 [shape = 'u8[262144]{0}', space=vmem, size = 0x40000, scoped, tag = 'input window, operand 2, single buffered']
    #allocation10 [shape = 'u8[4096]{0}', space=vmem, size = 0x1000, scoped, tag = 'input window, operand 3, single buffered']
    #allocation11 [shape = 's32[1]{0}', space=sflag, size = 0x4, scoped, tag = 'scoped memory for tpu_custom_call.1']
    #allocation12 [shape = 'u8[32768]{0}', space=vmem, size = 0x8000, scoped, tag = 'input window, operand 4, single buffered']
    #allocation13 [shape = 'u8[4096]{0}', space=vmem, size = 0x1000, scoped, tag = 'output window, operand 0, single buffered']
    %11 = vsyncpa [#allocation5], 0
    %12 = vsyncpa [#allocation8], 0
    %13 = vsyncpa [#allocation11], 0
    %14 = vsyncpa [#allocation6], 0
    // Predicated region
    $region2: #{tpu_custom_call.1} parent=1 // pred_check
      _
    $region3: #{tpu_custom_call.1} parent=1 // pred_check_branch
      %16 = sbr.rel (0) target = $region5
    $region4: #{tpu_custom_call.1} parent=1 // pred_region
      %s18 = ssub.s32 512, 512
      %19 = vsyncadd [#allocation5], %s18
      %s20 = sshll.u32 [#allocation4], 4
      %s21 = int_to_ptr.vmem [resolvable:$true] %s20
      %26 = dma.hbm_to_vmem [thread:$0]  %s0, 512, %s21, [#allocation5], 64, 64, 4
    $region5: #{tpu_custom_call.1} parent=1 // pred_fallthru
      _
    // Predicated region
    $region6: #{tpu_custom_call.1} parent=1 // pred_check
      _
    $region7: #{tpu_custom_call.1} parent=1 // pred_check_branch
      %28 = sbr.rel (0) target = $region9
    $region8: #{tpu_custom_call.1} parent=1 // pred_region
      %s30 = ssub.s32 8192, 8192
      %31 = vsyncadd [#allocation8], %s30
      %s32 = sshll.u32 [#allocation7], 4
      %s33 = int_to_ptr.vmem [resolvable:$true] %s32
      %38 = dma.hbm_to_vmem [thread:$0]  %s1, 8192, %s33, [#allocation8], 256, 256, 16
    $region9: #{tpu_custom_call.1} parent=1 // pred_fallthru
      _
    // Predicated region
    $region10: #{tpu_custom_call.1} parent=1 // pred_check
      _
    $region11: #{tpu_custom_call.1} parent=1 // pred_check_branch
      %40 = sbr.rel (0) target = $region13
    $region12: #{tpu_custom_call.1} parent=1 // pred_region
      %s42 = ssub.s32 8192, 8192
      %43 = vsyncadd [#allocation8], %s42
      %s44 = sshll.u32 [#allocation9], 4
      %s45 = int_to_ptr.vmem [resolvable:$true] %s44
      %50 = dma.hbm_to_vmem [thread:$0]  %s2, 8192, %s45, [#allocation8], 256, 256, 16
    $region13: #{tpu_custom_call.1} parent=1 // pred_fallthru
      _
    // Predicated region
    $region14: #{tpu_custom_call.1} parent=1 // pred_check
      _
    $region15: #{tpu_custom_call.1} parent=1 // pred_check_branch
      %52 = sbr.rel (0) target = $region17
    $region16: #{tpu_custom_call.1} parent=1 // pred_region
      %s54 = ssub.s32 128, 128
      %55 = vsyncadd [#allocation11], %s54
      %s56 = sshll.u32 [#allocation10], 4
      %s57 = int_to_ptr.vmem [resolvable:$true] %s56
      %62 = dma.hbm_to_vmem [thread:$0]  %s3, 128, %s57, [#allocation11], 64, 64, 4
    $region17: #{tpu_custom_call.1} parent=1 // pred_fallthru
      _
    // Predicated region
    $region18: #{tpu_custom_call.1} parent=1 // pred_check
      _
    $region19: #{tpu_custom_call.1} parent=1 // pred_check_branch
      %64 = sbr.rel (0) target = $region21
    $region20: #{tpu_custom_call.1} parent=1 // pred_region
      %s66 = ssub.s32 1024, 1024
      %67 = vsyncadd [#allocation11], %s66
      %s68 = sshll.u32 [#allocation12], 4
      %s69 = int_to_ptr.vmem [resolvable:$true] %s68
      %74 = dma.hbm_to_vmem [thread:$0]  %s4, 1024, %s69, [#allocation11], 64, 64, 4
    $region21: #{tpu_custom_call.1} parent=1 // pred_fallthru
      _
    // Predicated region
    $region22: #{tpu_custom_call.1} parent=1 // pred_check
      _
    $region23: #{tpu_custom_call.1} parent=1 // pred_check_branch
      %76 = sbr.rel (0) target = $region25
    $region24: #{tpu_custom_call.1} parent=1 // pred_region
      _
    $region25: #{tpu_custom_call.1} parent=1 // pred_fallthru
      _
    // Predicated region
    $region26: #{tpu_custom_call.1} parent=1 // pred_check
      _
    $region27: #{tpu_custom_call.1} parent=1 // pred_check_branch
      %78 = sbr.rel (0) target = $region29
    $region28: #{tpu_custom_call.1} parent=1 // pred_region
      %79 = dma.done [#allocation5], 512
    $region29: #{tpu_custom_call.1} parent=1 // pred_fallthru
      _
    // Predicated region
    $region30: #{tpu_custom_call.1} parent=1 // pred_check
      _
    $region31: #{tpu_custom_call.1} parent=1 // pred_check_branch
      %81 = sbr.rel (0) target = $region33
    $region32: #{tpu_custom_call.1} parent=1 // pred_region
      %82 = dma.done [#allocation8], 8192
    $region33: #{tpu_custom_call.1} parent=1 // pred_fallthru
      _
    // Predicated region
    $region34: #{tpu_custom_call.1} parent=1 // pred_check
      _
    $region35: #{tpu_custom_call.1} parent=1 // pred_check_branch
      %84 = sbr.rel (0) target = $region37
    $region36: #{tpu_custom_call.1} parent=1 // pred_region
      %85 = dma.done [#allocation8], 8192
    $region37: #{tpu_custom_call.1} parent=1 // pred_fallthru
      _
    // Predicated region
    $region38: #{tpu_custom_call.1} parent=1 // pred_check
      _
    $region39: #{tpu_custom_call.1} parent=1 // pred_check_branch
      %87 = sbr.rel (0) target = $region41
    $region40: #{tpu_custom_call.1} parent=1 // pred_region
      %88 = dma.done [#allocation11], 128
    $region41: #{tpu_custom_call.1} parent=1 // pred_fallthru
      _
    // Predicated region
    $region42: #{tpu_custom_call.1} parent=1 // pred_check
      _
    $region43: #{tpu_custom_call.1} parent=1 // pred_check_branch
      %90 = sbr.rel (0) target = $region45
    $region44: #{tpu_custom_call.1} parent=1 // pred_region
      %91 = dma.done [#allocation11], 1024
    $region45: #{tpu_custom_call.1} parent=1 // pred_fallthru
      _
    %v93 = vld [vmem:[#allocation4] sm:$0xf]
    %v94 = vld [vmem:[#allocation4 + $0x4] sm:$0xf]
    %v95 = vld [vmem:[#allocation4 + $0x8] sm:$0xf]
    %v96 = vld [vmem:[#allocation4 + $0xc] sm:$0xf]
    %v97 = vld [vmem:[#allocation4 + $0x10] sm:$0xf]
    %v98 = vld [vmem:[#allocation4 + $0x14] sm:$0xf]
    %v99 = vld [vmem:[#allocation4 + $0x18] sm:$0xf]
    %v100 = vld [vmem:[#allocation4 + $0x1c] sm:$0xf]
    %v101 = vld [vmem:[#allocation7] sm:$0xff]
    %v102 = vld [vmem:[#allocation7 + $0x8] sm:$0xff]
    %v103 = vld [vmem:[#allocation7 + $0x10] sm:$0xff]
    %v104 = vld [vmem:[#allocation7 + $0x18] sm:$0xff]
    %v105 = vld [vmem:[#allocation7 + $0x20] sm:$0xff]
    %v106 = vld [vmem:[#allocation7 + $0x28] sm:$0xff]
    %v107 = vld [vmem:[#allocation7 + $0x30] sm:$0xff]
    %v108 = vld [vmem:[#allocation7 + $0x38] sm:$0xff]
    %v109 = vld [vmem:[#allocation7 + $0x40] sm:$0xff]
    %v110 = vld [vmem:[#allocation7 + $0x48] sm:$0xff]
    %v111 = vld [vmem:[#allocation7 + $0x50] sm:$0xff]
    %v112 = vld [vmem:[#allocation7 + $0x58] sm:$0xff]
    %v113 = vld [vmem:[#allocation7 + $0x60] sm:$0xff]
    %v114 = vld [vmem:[#allocation7 + $0x68] sm:$0xff]
    %v115 = vld [vmem:[#allocation7 + $0x70] sm:$0xff]
    %v116 = vld [vmem:[#allocation7 + $0x78] sm:$0xff]
    %v117 = vld [vmem:[#allocation7 + $0x80] sm:$0xff]
    %v118 = vld [vmem:[#allocation7 + $0x88] sm:$0xff]
    %v119 = vld [vmem:[#allocation7 + $0x90] sm:$0xff]
    %v120 = vld [vmem:[#allocation7 + $0x98] sm:$0xff]
    %v121 = vld [vmem:[#allocation7 + $0xa0] sm:$0xff]
    %v122 = vld [vmem:[#allocation7 + $0xa8] sm:$0xff]
    %v123 = vld [vmem:[#allocation7 + $0xb0] sm:$0xff]
    %v124 = vld [vmem:[#allocation7 + $0xb8] sm:$0xff]
    %v125 = vld [vmem:[#allocation7 + $0xc0] sm:$0xff]
    %v126 = vld [vmem:[#allocation7 + $0xc8] sm:$0xff]
    %v127 = vld [vmem:[#allocation7 + $0xd0] sm:$0xff]
    %v128 = vld [vmem:[#allocation7 + $0xd8] sm:$0xff]
    %v129 = vld [vmem:[#allocation7 + $0xe0] sm:$0xff]
    %v130 = vld [vmem:[#allocation7 + $0xe8] sm:$0xff]
    %v131 = vld [vmem:[#allocation7 + $0xf0] sm:$0xff]
    %v132 = vld [vmem:[#allocation7 + $0xf8] sm:$0xff]
    %v133 = vld [vmem:[#allocation10] sm:$0xf]
    %v135 = vlaneseq
    %v136 = vshrl.u32 %v135, 7
    %v137 = vsub.s32 0, %v136
    %v138 = vrot.slane %v133, %v137
    %v139 = vlaneseq
    %v140 = vshrl.u32 %v139, 7
    %v141 = vsub.s32 1, %v140
    %v142 = vrot.slane %v133, %v141
    %v143 = vlaneseq
    %v144 = vshrl.u32 %v143, 7
    %v145 = vsub.s32 2, %v144
    %v146 = vrot.slane %v133, %v145
    %v147 = vlaneseq
    %v148 = vshrl.u32 %v147, 7
    %v149 = vsub.s32 3, %v148
    %v150 = vrot.slane %v133, %v149
    %v163 = vunpack.c.l.b16 %v93
    %v164 = vunpack.c.l.b16 %v94
    %v165 = vunpack.c.l.b16 %v95
    %v166 = vunpack.c.l.b16 %v96
    %v167 = vunpack.c.l.b16 %v97
    %v168 = vunpack.c.l.b16 %v98
    %v169 = vunpack.c.l.b16 %v99
    %v170 = vunpack.c.l.b16 %v100
    %v171 = vpack.c.b16 %v164, %v163
    %v172 = vpack.c.b16 %v166, %v165
    %v173 = vpack.c.b16 %v168, %v167
    %v174 = vpack.c.b16 %v170, %v169
    %v211 = vunpack.c.l.b16 %v101
    %v212 = vunpack.c.h.b16 %v101
    %v213 = vunpack.c.l.b16 %v102
    %v214 = vunpack.c.h.b16 %v102
    %v215 = vunpack.c.l.b16 %v103
    %v216 = vunpack.c.h.b16 %v103
    %v217 = vunpack.c.l.b16 %v104
    %v218 = vunpack.c.h.b16 %v104
    %v219 = vunpack.c.l.b16 %v105
    %v220 = vunpack.c.h.b16 %v105
    %v221 = vunpack.c.l.b16 %v106
    %v222 = vunpack.c.h.b16 %v106
    %v223 = vunpack.c.l.b16 %v107
    %v224 = vunpack.c.h.b16 %v107
    %v225 = vunpack.c.l.b16 %v108
    %v226 = vunpack.c.h.b16 %v108
    %v227 = vunpack.c.l.b16 %v109
    %v228 = vunpack.c.h.b16 %v109
    %v229 = vunpack.c.l.b16 %v110
    %v230 = vunpack.c.h.b16 %v110
    %v231 = vunpack.c.l.b16 %v111
    %v232 = vunpack.c.h.b16 %v111
    %v233 = vunpack.c.l.b16 %v112
    %v234 = vunpack.c.h.b16 %v112
    %v235 = vunpack.c.l.b16 %v113
    %v236 = vunpack.c.h.b16 %v113
    %v237 = vunpack.c.l.b16 %v114
    %v238 = vunpack.c.h.b16 %v114
    %v239 = vunpack.c.l.b16 %v115
    %v240 = vunpack.c.h.b16 %v115
    %v241 = vunpack.c.l.b16 %v116
    %v242 = vunpack.c.h.b16 %v116
    %v243 = vunpack.c.l.b16 %v117
    %v244 = vunpack.c.h.b16 %v117
    %v245 = vunpack.c.l.b16 %v118
    %v246 = vunpack.c.h.b16 %v118
    %v247 = vunpack.c.l.b16 %v119
    %v248 = vunpack.c.h.b16 %v119
    %v249 = vunpack.c.l.b16 %v120
    %v250 = vunpack.c.h.b16 %v120
    %v251 = vunpack.c.l.b16 %v121
    %v252 = vunpack.c.h.b16 %v121
    %v253 = vunpack.c.l.b16 %v122
    %v254 = vunpack.c.h.b16 %v122
    %v255 = vunpack.c.l.b16 %v123
    %v256 = vunpack.c.h.b16 %v123
    %v257 = vunpack.c.l.b16 %v124
    %v258 = vunpack.c.h.b16 %v124
    %v259 = vunpack.c.l.b16 %v125
    %v260 = vunpack.c.h.b16 %v125
    %v261 = vunpack.c.l.b16 %v126
    %v262 = vunpack.c.h.b16 %v126
    %v263 = vunpack.c.l.b16 %v127
    %v264 = vunpack.c.h.b16 %v127
    %v265 = vunpack.c.l.b16 %v128
    %v266 = vunpack.c.h.b16 %v128
    %v267 = vunpack.c.l.b16 %v129
    %v268 = vunpack.c.h.b16 %v129
    %v269 = vunpack.c.l.b16 %v130
    %v270 = vunpack.c.h.b16 %v130
    %v271 = vunpack.c.l.b16 %v131
    %v272 = vunpack.c.h.b16 %v131
    %v273 = vunpack.c.l.b16 %v132
    %v274 = vunpack.c.h.b16 %v132
    %v275 = vpack.c.b16 %v215, %v211
    %v276 = vpack.c.b16 %v216, %v212
    %v277 = vpack.c.b16 %v217, %v213
    %v278 = vpack.c.b16 %v218, %v214
    %v279 = vpack.c.b16 %v223, %v219
    %v280 = vpack.c.b16 %v224, %v220
    %v281 = vpack.c.b16 %v225, %v221
    %v282 = vpack.c.b16 %v226, %v222
    %v283 = vpack.c.b16 %v231, %v227
    %v284 = vpack.c.b16 %v232, %v228
    %v285 = vpack.c.b16 %v233, %v229
    %v286 = vpack.c.b16 %v234, %v230
    %v287 = vpack.c.b16 %v239, %v235
    %v288 = vpack.c.b16 %v240, %v236
    %v289 = vpack.c.b16 %v241, %v237
    %v290 = vpack.c.b16 %v242, %v238
    %v291 = vpack.c.b16 %v247, %v243
    %v292 = vpack.c.b16 %v248, %v244
    %v293 = vpack.c.b16 %v249, %v245
    %v294 = vpack.c.b16 %v250, %v246
    %v295 = vpack.c.b16 %v255, %v251
    %v296 = vpack.c.b16 %v256, %v252
    %v297 = vpack.c.b16 %v257, %v253
    %v298 = vpack.c.b16 %v258, %v254
    %v299 = vpack.c.b16 %v263, %v259
    %v300 = vpack.c.b16 %v264, %v260
    %v301 = vpack.c.b16 %v265, %v261
    %v302 = vpack.c.b16 %v266, %v262
    %v303 = vpack.c.b16 %v271, %v267
    %v304 = vpack.c.b16 %v272, %v268
    %v305 = vpack.c.b16 %v273, %v269
    %v306 = vpack.c.b16 %v274, %v270
    %339 = vmatprep.subr.bf16.mxu0 %v304
    %340 = vmatpush1.bf16.msra.mxu0 %v303
    %341 = vmatprep.subr.bf16.mxu0 %v300
    %342 = vmatpush1.bf16.msra.mxu0 %v299
    %343 = vmatprep.subr.bf16.mxu0 %v296
    %344 = vmatpush1.bf16.msra.mxu0 %v295
    %345 = vmatprep.subr.bf16.mxu0 %v292
    %346 = vmatpush1.bf16.msra.mxu0 %v291
    %347 = vmatprep.subr.bf16.mxu0 %v288
    %348 = vmatpush1.bf16.msra.mxu0 %v287
    %349 = vmatprep.subr.bf16.mxu0 %v284
    %350 = vmatpush1.bf16.msra.mxu0 %v283
    %351 = vmatprep.subr.bf16.mxu0 %v280
    %352 = vmatpush1.bf16.msra.mxu0 %v279
    %353 = vmatprep.subr.bf16.mxu0 %v276
    %354 = vmatpush1.bf16.msra.mxu0 %v275
    %355 = vmatprep.subr.bf16.mxu0 0
    %356 = vmatpush2.bf16.msra.mxu0 0
    %357 = vmatprep.subr.bf16.mxu0 0
    %358 = vmatpush2.bf16.msra.mxu0 0
    %359 = vmatprep.subr.bf16.mxu0 0
    %360 = vmatpush2.bf16.msra.mxu0 0
    %361 = vmatprep.subr.bf16.mxu0 0
    %362 = vmatpush2.bf16.msra.mxu0 0
    %363 = vmatprep.subr.bf16.mxu0 0
    %364 = vmatpush2.bf16.msra.mxu0 0
    %365 = vmatprep.subr.bf16.mxu0 0
    %366 = vmatpush2.bf16.msra.mxu0 0
    %367 = vmatprep.subr.bf16.mxu0 0
    %368 = vmatpush2.bf16.msra.mxu0 0
    %369 = vmatprep.subr.bf16.mxu0 0
    %370 = vmatpush2.bf16.msra.mxu0 0
    %371 = vmatprep.mubr.bf16.mxu0 0
    %372 = vmatmul.mubr.bf16.gmra.mxu0 %v171
    %v373 = vpop.f32.mrf.mxu0
    %v374 = vadd.f32 %v138, %v373
    %v375 = vpop.f32.mrf.mxu0
    %v376 = vadd.f32 %v142, %v375
    %v377 = vpop.f32.mrf.mxu0
    %v378 = vadd.f32 %v138, %v377
    %v379 = vpop.f32.mrf.mxu0
    %v380 = vadd.f32 %v142, %v379
    %381 = vmatprep.mubr.bf16.mxu0 0
    %382 = vmatmul.mubr.bf16.gmra.mxu0 %v172
    %v383 = vpop.f32.mrf.mxu0
    %v384 = vadd.f32 %v138, %v383
    %v385 = vpop.f32.mrf.mxu0
    %v386 = vadd.f32 %v142, %v385
    %v387 = vpop.f32.mrf.mxu0
    %v388 = vadd.f32 %v138, %v387
    %v389 = vpop.f32.mrf.mxu0
    %v390 = vadd.f32 %v142, %v389
    %391 = vmatprep.mubr.bf16.mxu0 0
    %392 = vmatmul.mubr.bf16.gmra.mxu0 %v173
    %v393 = vpop.f32.mrf.mxu0
    %v394 = vadd.f32 %v138, %v393
    %v395 = vpop.f32.mrf.mxu0
    %v396 = vadd.f32 %v142, %v395
    %v397 = vpop.f32.mrf.mxu0
    %v398 = vadd.f32 %v138, %v397
    %v399 = vpop.f32.mrf.mxu0
    %v400 = vadd.f32 %v142, %v399
    %401 = vmatprep.mubr.bf16.mxu0 0
    %402 = vmatmul.mubr.bf16.gmra.mxu0 %v174
    %v403 = vpop.f32.mrf.mxu0
    %v404 = vadd.f32 %v138, %v403
    %v405 = vpop.f32.mrf.mxu0
    %v406 = vadd.f32 %v142, %v405
    %v407 = vpop.f32.mrf.mxu0
    %v408 = vadd.f32 %v138, %v407
    %v409 = vpop.f32.mrf.mxu0
    %v410 = vadd.f32 %v142, %v409
    %411 = vdwg.mxu0
    %412 = vmatprep.subr.bf16.mxu0 %v306
    %413 = vmatpush1.bf16.msra.mxu0 %v305
    %414 = vmatprep.subr.bf16.mxu0 %v302
    %415 = vmatpush1.bf16.msra.mxu0 %v301
    %416 = vmatprep.subr.bf16.mxu0 %v298
    %417 = vmatpush1.bf16.msra.mxu0 %v297
    %418 = vmatprep.subr.bf16.mxu0 %v294
    %419 = vmatpush1.bf16.msra.mxu0 %v293
    %420 = vmatprep.subr.bf16.mxu0 %v290
    %421 = vmatpush1.bf16.msra.mxu0 %v289
    %422 = vmatprep.subr.bf16.mxu0 %v286
    %423 = vmatpush1.bf16.msra.mxu0 %v285
    %424 = vmatprep.subr.bf16.mxu0 %v282
    %425 = vmatpush1.bf16.msra.mxu0 %v281
    %426 = vmatprep.subr.bf16.mxu0 %v278
    %427 = vmatpush1.bf16.msra.mxu0 %v277
    %428 = vmatprep.subr.bf16.mxu0 0
    %429 = vmatpush2.bf16.msra.mxu0 0
    %430 = vmatprep.subr.bf16.mxu0 0
    %431 = vmatpush2.bf16.msra.mxu0 0
    %432 = vmatprep.subr.bf16.mxu0 0
    %433 = vmatpush2.bf16.msra.mxu0 0
    %434 = vmatprep.subr.bf16.mxu0 0
    %435 = vmatpush2.bf16.msra.mxu0 0
    %436 = vmatprep.subr.bf16.mxu0 0
    %437 = vmatpush2.bf16.msra.mxu0 0
    %438 = vmatprep.subr.bf16.mxu0 0
    %439 = vmatpush2.bf16.msra.mxu0 0
    %440 = vmatprep.subr.bf16.mxu0 0
    %441 = vmatpush2.bf16.msra.mxu0 0
    %442 = vmatprep.subr.bf16.mxu0 0
    %443 = vmatpush2.bf16.msra.mxu0 0
    %444 = vmatprep.mubr.bf16.mxu0 0
    %445 = vmatmul.mubr.bf16.gmra.mxu0 %v171
    %v446 = vpop.f32.mrf.mxu0
    %v447 = vadd.f32 %v146, %v446
    %v448 = vpop.f32.mrf.mxu0
    %v449 = vadd.f32 %v150, %v448
    %v450 = vpop.f32.mrf.mxu0
    %v451 = vadd.f32 %v146, %v450
    %v452 = vpop.f32.mrf.mxu0
    %v453 = vadd.f32 %v150, %v452
    %454 = vmatprep.mubr.bf16.mxu0 0
    %455 = vmatmul.mubr.bf16.gmra.mxu0 %v172
    %v456 = vpop.f32.mrf.mxu0
    %v457 = vadd.f32 %v146, %v456
    %v458 = vpop.f32.mrf.mxu0
    %v459 = vadd.f32 %v150, %v458
    %v460 = vpop.f32.mrf.mxu0
    %v461 = vadd.f32 %v146, %v460
    %v462 = vpop.f32.mrf.mxu0
    %v463 = vadd.f32 %v150, %v462
    %464 = vmatprep.mubr.bf16.mxu0 0
    %465 = vmatmul.mubr.bf16.gmra.mxu0 %v173
    %v466 = vpop.f32.mrf.mxu0
    %v467 = vadd.f32 %v146, %v466
    %v468 = vpop.f32.mrf.mxu0
    %v469 = vadd.f32 %v150, %v468
    %v470 = vpop.f32.mrf.mxu0
    %v471 = vadd.f32 %v146, %v470
    %v472 = vpop.f32.mrf.mxu0
    %v473 = vadd.f32 %v150, %v472
    %474 = vmatprep.mubr.bf16.mxu0 0
    %475 = vmatmul.mubr.bf16.gmra.mxu0 %v174
    %v476 = vpop.f32.mrf.mxu0
    %v477 = vadd.f32 %v146, %v476
    %v478 = vpop.f32.mrf.mxu0
    %v479 = vadd.f32 %v150, %v478
    %v480 = vpop.f32.mrf.mxu0
    %v481 = vadd.f32 %v146, %v480
    %v482 = vpop.f32.mrf.mxu0
    %v483 = vadd.f32 %v150, %v482
    %484 = vdwg.mxu0
    %485 = vst [vmem:[#allocation3] sm:$0xff] %v374
    %486 = vst [vmem:[#allocation3 + $0x8] sm:$0xff] %v376
    %487 = vst [vmem:[#allocation3 + $0x10] sm:$0xff] %v447
    %488 = vst [vmem:[#allocation3 + $0x18] sm:$0xff] %v449
    %489 = vst [vmem:[#allocation3 + $0x20] sm:$0xff] %v378
    %490 = vst [vmem:[#allocation3 + $0x28] sm:$0xff] %v380
    %491 = vst [vmem:[#allocation3 + $0x30] sm:$0xff] %v451
    %492 = vst [vmem:[#allocation3 + $0x38] sm:$0xff] %v453
    %493 = vst [vmem:[#allocation3 + $0x40] sm:$0xff] %v384
    %494 = vst [vmem:[#allocation3 + $0x48] sm:$0xff] %v386
    %495 = vst [vmem:[#allocation3 + $0x50] sm:$0xff] %v457
    %496 = vst [vmem:[#allocation3 + $0x58] sm:$0xff] %v459
    %497 = vst [vmem:[#allocation3 + $0x60] sm:$0xff] %v388
    %498 = vst [vmem:[#allocation3 + $0x68] sm:$0xff] %v390
    %499 = vst [vmem:[#allocation3 + $0x70] sm:$0xff] %v461
    %500 = vst [vmem:[#allocation3 + $0x78] sm:$0xff] %v463
    %501 = vst [vmem:[#allocation3 + $0x80] sm:$0xff] %v394
    %502 = vst [vmem:[#allocation3 + $0x88] sm:$0xff] %v396
    %503 = vst [vmem:[#allocation3 + $0x90] sm:$0xff] %v467
    %504 = vst [vmem:[#allocation3 + $0x98] sm:$0xff] %v469
    %505 = vst [vmem:[#allocation3 + $0xa0] sm:$0xff] %v398
    %506 = vst [vmem:[#allocation3 + $0xa8] sm:$0xff] %v400
    %507 = vst [vmem:[#allocation3 + $0xb0] sm:$0xff] %v471
    %508 = vst [vmem:[#allocation3 + $0xb8] sm:$0xff] %v473
    %509 = vst [vmem:[#allocation3 + $0xc0] sm:$0xff] %v404
    %510 = vst [vmem:[#allocation3 + $0xc8] sm:$0xff] %v406
    %511 = vst [vmem:[#allocation3 + $0xd0] sm:$0xff] %v477
    %512 = vst [vmem:[#allocation3 + $0xd8] sm:$0xff] %v479
    %513 = vst [vmem:[#allocation3 + $0xe0] sm:$0xff] %v408
    %514 = vst [vmem:[#allocation3 + $0xe8] sm:$0xff] %v410
    %515 = vst [vmem:[#allocation3 + $0xf0] sm:$0xff] %v481
    %516 = vst [vmem:[#allocation3 + $0xf8] sm:$0xff] %v483
    %s517 = smul.u32 0, 4
    %s518 = smul.addr %s517, 8
    %s519 = scalar_lea.vmem [#allocation3], %s518
    %v520 = vld [vmem:[%s519] sm:$0xff]
    %v521 = vld [vmem:[%s519 + $0x8] sm:$0xff]
    %v522 = vld [vmem:[%s519 + $0x10] sm:$0xff]
    %v523 = vld [vmem:[%s519 + $0x18] sm:$0xff]
    %v524 = vld [vmem:[#allocation9] sm:$0xff]
    %v525 = vld [vmem:[#allocation9 + $0x8] sm:$0xff]
    %v526 = vld [vmem:[#allocation9 + $0x10] sm:$0xff]
    %v527 = vld [vmem:[#allocation9 + $0x18] sm:$0xff]
    %v528 = vld [vmem:[#allocation9 + $0x20] sm:$0xff]
    %v529 = vld [vmem:[#allocation9 + $0x28] sm:$0xff]
    %v530 = vld [vmem:[#allocation9 + $0x30] sm:$0xff]
    %v531 = vld [vmem:[#allocation9 + $0x38] sm:$0xff]
    %v532 = vld [vmem:[#allocation9 + $0x40] sm:$0xff]
    %v533 = vld [vmem:[#allocation9 + $0x48] sm:$0xff]
    %v534 = vld [vmem:[#allocation9 + $0x50] sm:$0xff]
    %v535 = vld [vmem:[#allocation9 + $0x58] sm:$0xff]
    %v536 = vld [vmem:[#allocation9 + $0x60] sm:$0xff]
    %v537 = vld [vmem:[#allocation9 + $0x68] sm:$0xff]
    %v538 = vld [vmem:[#allocation9 + $0x70] sm:$0xff]
    %v539 = vld [vmem:[#allocation9 + $0x78] sm:$0xff]
    %v540 = vld [vmem:[#allocation9 + $0x80] sm:$0xff]
    %v541 = vld [vmem:[#allocation9 + $0x88] sm:$0xff]
    %v542 = vld [vmem:[#allocation9 + $0x90] sm:$0xff]
    %v543 = vld [vmem:[#allocation9 + $0x98] sm:$0xff]
    %v544 = vld [vmem:[#allocation9 + $0xa0] sm:$0xff]
    %v545 = vld [vmem:[#allocation9 + $0xa8] sm:$0xff]
    %v546 = vld [vmem:[#allocation9 + $0xb0] sm:$0xff]
    %v547 = vld [vmem:[#allocation9 + $0xb8] sm:$0xff]
    %v548 = vld [vmem:[#allocation9 + $0xc0] sm:$0xff]
    %v549 = vld [vmem:[#allocation9 + $0xc8] sm:$0xff]
    %v550 = vld [vmem:[#allocation9 + $0xd0] sm:$0xff]
    %v551 = vld [vmem:[#allocation9 + $0xd8] sm:$0xff]
    %v552 = vld [vmem:[#allocation9 + $0xe0] sm:$0xff]
    %v553 = vld [vmem:[#allocation9 + $0xe8] sm:$0xff]
    %v554 = vld [vmem:[#allocation9 + $0xf0] sm:$0xff]
    %v555 = vld [vmem:[#allocation9 + $0xf8] sm:$0xff]
    %v588 = vunpack.c.l.b16 %v524
    %v589 = vunpack.c.h.b16 %v524
    %v590 = vunpack.c.l.b16 %v525
    %v591 = vunpack.c.h.b16 %v525
    %v592 = vunpack.c.l.b16 %v526
    %v593 = vunpack.c.h.b16 %v526
    %v594 = vunpack.c.l.b16 %v527
    %v595 = vunpack.c.h.b16 %v527
    %v596 = vunpack.c.l.b16 %v528
    %v597 = vunpack.c.h.b16 %v528
    %v598 = vunpack.c.l.b16 %v529
    %v599 = vunpack.c.h.b16 %v529
    %v600 = vunpack.c.l.b16 %v530
    %v601 = vunpack.c.h.b16 %v530
    %v602 = vunpack.c.l.b16 %v531
    %v603 = vunpack.c.h.b16 %v531
    %v604 = vunpack.c.l.b16 %v532
    %v605 = vunpack.c.h.b16 %v532
    %v606 = vunpack.c.l.b16 %v533
    %v607 = vunpack.c.h.b16 %v533
    %v608 = vunpack.c.l.b16 %v534
    %v609 = vunpack.c.h.b16 %v534
    %v610 = vunpack.c.l.b16 %v535
    %v611 = vunpack.c.h.b16 %v535
    %v612 = vunpack.c.l.b16 %v536
    %v613 = vunpack.c.h.b16 %v536
    %v614 = vunpack.c.l.b16 %v537
    %v615 = vunpack.c.h.b16 %v537
    %v616 = vunpack.c.l.b16 %v538
    %v617 = vunpack.c.h.b16 %v538
    %v618 = vunpack.c.l.b16 %v539
    %v619 = vunpack.c.h.b16 %v539
    %v620 = vunpack.c.l.b16 %v540
    %v621 = vunpack.c.h.b16 %v540
    %v622 = vunpack.c.l.b16 %v541
    %v623 = vunpack.c.h.b16 %v541
    %v624 = vunpack.c.l.b16 %v542
    %v625 = vunpack.c.h.b16 %v542
    %v626 = vunpack.c.l.b16 %v543
    %v627 = vunpack.c.h.b16 %v543
    %v628 = vunpack.c.l.b16 %v544
    %v629 = vunpack.c.h.b16 %v544
    %v630 = vunpack.c.l.b16 %v545
    %v631 = vunpack.c.h.b16 %v545
    %v632 = vunpack.c.l.b16 %v546
    %v633 = vunpack.c.h.b16 %v546
    %v634 = vunpack.c.l.b16 %v547
    %v635 = vunpack.c.h.b16 %v547
    %v636 = vunpack.c.l.b16 %v548
    %v637 = vunpack.c.h.b16 %v548
    %v638 = vunpack.c.l.b16 %v549
    %v639 = vunpack.c.h.b16 %v549
    %v640 = vunpack.c.l.b16 %v550
    %v641 = vunpack.c.h.b16 %v550
    %v642 = vunpack.c.l.b16 %v551
    %v643 = vunpack.c.h.b16 %v551
    %v644 = vunpack.c.l.b16 %v552
    %v645 = vunpack.c.h.b16 %v552
    %v646 = vunpack.c.l.b16 %v553
    %v647 = vunpack.c.h.b16 %v553
    %v648 = vunpack.c.l.b16 %v554
    %v649 = vunpack.c.h.b16 %v554
    %v650 = vunpack.c.l.b16 %v555
    %v651 = vunpack.c.h.b16 %v555
    %v652 = vpack.c.b16 %v592, %v588
    %v653 = vpack.c.b16 %v593, %v589
    %v654 = vpack.c.b16 %v594, %v590
    %v655 = vpack.c.b16 %v595, %v591
    %v656 = vpack.c.b16 %v600, %v596
    %v657 = vpack.c.b16 %v601, %v597
    %v658 = vpack.c.b16 %v602, %v598
    %v659 = vpack.c.b16 %v603, %v599
    %v660 = vpack.c.b16 %v608, %v604
    %v661 = vpack.c.b16 %v609, %v605
    %v662 = vpack.c.b16 %v610, %v606
    %v663 = vpack.c.b16 %v611, %v607
    %v664 = vpack.c.b16 %v616, %v612
    %v665 = vpack.c.b16 %v617, %v613
    %v666 = vpack.c.b16 %v618, %v614
    %v667 = vpack.c.b16 %v619, %v615
    %v668 = vpack.c.b16 %v624, %v620
    %v669 = vpack.c.b16 %v625, %v621
    %v670 = vpack.c.b16 %v626, %v622
    %v671 = vpack.c.b16 %v627, %v623
    %v672 = vpack.c.b16 %v632, %v628
    %v673 = vpack.c.b16 %v633, %v629
    %v674 = vpack.c.b16 %v634, %v630
    %v675 = vpack.c.b16 %v635, %v631
    %v676 = vpack.c.b16 %v640, %v636
    %v677 = vpack.c.b16 %v641, %v637
    %v678 = vpack.c.b16 %v642, %v638
    %v679 = vpack.c.b16 %v643, %v639
    %v680 = vpack.c.b16 %v648, %v644
    %v681 = vpack.c.b16 %v649, %v645
    %v682 = vpack.c.b16 %v650, %v646
    %v683 = vpack.c.b16 %v651, %v647
    %716 = vmatprep.subr.bf16.mxu0 %v681
    %717 = vmatpush1.bf16.msra.mxu0 %v680
    %718 = vmatprep.subr.bf16.mxu0 %v677
    %719 = vmatpush1.bf16.msra.mxu0 %v676
    %720 = vmatprep.subr.bf16.mxu0 %v673
    %721 = vmatpush1.bf16.msra.mxu0 %v672
    %722 = vmatprep.subr.bf16.mxu0 %v669
    %723 = vmatpush1.bf16.msra.mxu0 %v668
    %724 = vmatprep.subr.bf16.mxu0 %v665
    %725 = vmatpush1.bf16.msra.mxu0 %v664
    %726 = vmatprep.subr.bf16.mxu0 %v661
    %727 = vmatpush1.bf16.msra.mxu0 %v660
    %728 = vmatprep.subr.bf16.mxu0 %v657
    %729 = vmatpush1.bf16.msra.mxu0 %v656
    %730 = vmatprep.subr.bf16.mxu0 %v653
    %731 = vmatpush1.bf16.msra.mxu0 %v652
    %732 = vmatprep.subr.bf16.mxu0 0
    %733 = vmatpush2.bf16.msra.mxu0 0
    %734 = vmatprep.subr.bf16.mxu0 0
    %735 = vmatpush2.bf16.msra.mxu0 0
    %736 = vmatprep.subr.bf16.mxu0 0
    %737 = vmatpush2.bf16.msra.mxu0 0
    %738 = vmatprep.subr.bf16.mxu0 0
    %739 = vmatpush2.bf16.msra.mxu0 0
    %740 = vmatprep.subr.bf16.mxu0 0
    %741 = vmatpush2.bf16.msra.mxu0 0
    %742 = vmatprep.subr.bf16.mxu0 0
    %743 = vmatpush2.bf16.msra.mxu0 0
    %744 = vmatprep.subr.bf16.mxu0 0
    %745 = vmatpush2.bf16.msra.mxu0 0
    %746 = vmatprep.subr.bf16.mxu0 0
    %747 = vmatpush2.bf16.msra.mxu0 0
    %748 = vmatprep.mubr.bf16.mxu0 0
    %749 = vmatmul.mubr.bf16.gmra.mxu0 0
    %v750 = vpop.f32.mrf.mxu0
    %v751 = vadd.f32 0.0, %v750
    %v752 = vpop.f32.mrf.mxu0
    %v753 = vadd.f32 0.0, %v752
    %v754 = vpop.f32.mrf.mxu0
    %v755 = vpop.f32.mrf.mxu0
    %756 = vdwg.mxu0
    %757 = vmatprep.subr.bf16.mxu0 %v683
    %758 = vmatpush1.bf16.msra.mxu0 %v682
    %759 = vmatprep.subr.bf16.mxu0 %v679
    %760 = vmatpush1.bf16.msra.mxu0 %v678
    %761 = vmatprep.subr.bf16.mxu0 %v675
    %762 = vmatpush1.bf16.msra.mxu0 %v674
    %763 = vmatprep.subr.bf16.mxu0 %v671
    %764 = vmatpush1.bf16.msra.mxu0 %v670
    %765 = vmatprep.subr.bf16.mxu0 %v667
    %766 = vmatpush1.bf16.msra.mxu0 %v666
    %767 = vmatprep.subr.bf16.mxu0 %v663
    %768 = vmatpush1.bf16.msra.mxu0 %v662
    %769 = vmatprep.subr.bf16.mxu0 %v659
    %770 = vmatpush1.bf16.msra.mxu0 %v658
    %771 = vmatprep.subr.bf16.mxu0 %v655
    %772 = vmatpush1.bf16.msra.mxu0 %v654
    %773 = vmatprep.subr.bf16.mxu0 0
    %774 = vmatpush2.bf16.msra.mxu0 0
    %775 = vmatprep.subr.bf16.mxu0 0
    %776 = vmatpush2.bf16.msra.mxu0 0
    %777 = vmatprep.subr.bf16.mxu0 0
    %778 = vmatpush2.bf16.msra.mxu0 0
    %779 = vmatprep.subr.bf16.mxu0 0
    %780 = vmatpush2.bf16.msra.mxu0 0
    %781 = vmatprep.subr.bf16.mxu0 0
    %782 = vmatpush2.bf16.msra.mxu0 0
    %783 = vmatprep.subr.bf16.mxu0 0
    %784 = vmatpush2.bf16.msra.mxu0 0
    %785 = vmatprep.subr.bf16.mxu0 0
    %786 = vmatpush2.bf16.msra.mxu0 0
    %787 = vmatprep.subr.bf16.mxu0 0
    %788 = vmatpush2.bf16.msra.mxu0 0
    %789 = vmatprep.mubr.bf16.mxu0 0
    %790 = vmatmul.mubr.bf16.gmra.mxu0 0
    %v791 = vpop.f32.mrf.mxu0
    %v792 = vadd.f32 0.0, %v791
    %v793 = vpop.f32.mrf.mxu0
    %v794 = vadd.f32 0.0, %v793
    %v795 = vpop.f32.mrf.mxu0
    %v796 = vpop.f32.mrf.mxu0
    %797 = vdwg.mxu0
    %v798 = vadd.f32 %v520, %v751
    %v799 = vadd.f32 %v521, %v753
    %v800 = vadd.f32 %v522, %v792
    %v801 = vadd.f32 %v523, %v794
    %v802 = vmul.f32 %v798, 0.5
    %v803 = vtanh.pop %v802
    %v804 = vmul.f32 %v803, 0.5
    %v805 = vadd.f32 %v804, 0.5
    %v806 = vmul.f32 %v799, 0.5
    %v807 = vtanh.pop %v806
    %v808 = vmul.f32 %v807, 0.5
    %v809 = vadd.f32 %v808, 0.5
    %v810 = vtanh.pop %v800
    %v811 = vmul.f32 %v801, 0.5
    %v812 = vtanh.pop %v811
    %v813 = vmul.f32 %v812, 0.5
    %v814 = vadd.f32 %v813, 0.5
    %v815 = vmul.f32 %v809, 0.0
    %v816 = vmul.f32 %v805, %v810
    %v817 = vadd.f32 %v815, %v816
    %v818 = vtanh.pop %v817
    %v819 = vmul.f32 %v814, %v818
    %v820 = vpack.c.bf16 %v819, %v819
    %821 = vst [vmem:[#allocation2] sm:$0xf] %v820
    %s822 = smul.u32 1, 4
    %s823 = smul.addr %s822, 8
    %s824 = scalar_lea.vmem [#allocation3], %s823
    %v825 = vld [vmem:[%s824] sm:$0xff]
    %v826 = vld [vmem:[%s824 + $0x8] sm:$0xff]
    %v827 = vld [vmem:[%s824 + $0x10] sm:$0xff]
    %v828 = vld [vmem:[%s824 + $0x18] sm:$0xff]
    %v829 = vld [vmem:[#allocation9] sm:$0xff]
    %v830 = vld [vmem:[#allocation9 + $0x8] sm:$0xff]
    %v831 = vld [vmem:[#allocation9 + $0x10] sm:$0xff]
    %v832 = vld [vmem:[#allocation9 + $0x18] sm:$0xff]
    %v833 = vld [vmem:[#allocation9 + $0x20] sm:$0xff]
    %v834 = vld [vmem:[#allocation9 + $0x28] sm:$0xff]
    %v835 = vld [vmem:[#allocation9 + $0x30] sm:$0xff]
    %v836 = vld [vmem:[#allocation9 + $0x38] sm:$0xff]
    %v837 = vld [vmem:[#allocation9 + $0x40] sm:$0xff]
    %v838 = vld [vmem:[#allocation9 + $0x48] sm:$0xff]
    %v839 = vld [vmem:[#allocation9 + $0x50] sm:$0xff]
    %v840 = vld [vmem:[#allocation9 + $0x58] sm:$0xff]
    %v841 = vld [vmem:[#allocation9 + $0x60] sm:$0xff]
    %v842 = vld [vmem:[#allocation9 + $0x68] sm:$0xff]
    %v843 = vld [vmem:[#allocation9 + $0x70] sm:$0xff]
    %v844 = vld [vmem:[#allocation9 + $0x78] sm:$0xff]
    %v845 = vld [vmem:[#allocation9 + $0x80] sm:$0xff]
    %v846 = vld [vmem:[#allocation9 + $0x88] sm:$0xff]
    %v847 = vld [vmem:[#allocation9 + $0x90] sm:$0xff]
    %v848 = vld [vmem:[#allocation9 + $0x98] sm:$0xff]
    %v849 = vld [vmem:[#allocation9 + $0xa0] sm:$0xff]
    %v850 = vld [vmem:[#allocation9 + $0xa8] sm:$0xff]
    %v851 = vld [vmem:[#allocation9 + $0xb0] sm:$0xff]
    %v852 = vld [vmem:[#allocation9 + $0xb8] sm:$0xff]
    %v853 = vld [vmem:[#allocation9 + $0xc0] sm:$0xff]
    %v854 = vld [vmem:[#allocation9 + $0xc8] sm:$0xff]
    %v855 = vld [vmem:[#allocation9 + $0xd0] sm:$0xff]
    %v856 = vld [vmem:[#allocation9 + $0xd8] sm:$0xff]
    %v857 = vld [vmem:[#allocation9 + $0xe0] sm:$0xff]
    %v858 = vld [vmem:[#allocation9 + $0xe8] sm:$0xff]
    %v859 = vld [vmem:[#allocation9 + $0xf0] sm:$0xff]
    %v860 = vld [vmem:[#allocation9 + $0xf8] sm:$0xff]
    %v893 = vunpack.c.l.b16 %v829
    %v894 = vunpack.c.h.b16 %v829
    %v895 = vunpack.c.l.b16 %v830
    %v896 = vunpack.c.h.b16 %v830
    %v897 = vunpack.c.l.b16 %v831
    %v898 = vunpack.c.h.b16 %v831
    %v899 = vunpack.c.l.b16 %v832
    %v900 = vunpack.c.h.b16 %v832
    %v901 = vunpack.c.l.b16 %v833
    %v902 = vunpack.c.h.b16 %v833
    %v903 = vunpack.c.l.b16 %v834
    %v904 = vunpack.c.h.b16 %v834
    %v905 = vunpack.c.l.b16 %v835
    %v906 = vunpack.c.h.b16 %v835
    %v907 = vunpack.c.l.b16 %v836
    %v908 = vunpack.c.h.b16 %v836
    %v909 = vunpack.c.l.b16 %v837
    %v910 = vunpack.c.h.b16 %v837
    %v911 = vunpack.c.l.b16 %v838
    %v912 = vunpack.c.h.b16 %v838
    %v913 = vunpack.c.l.b16 %v839
    %v914 = vunpack.c.h.b16 %v839
    %v915 = vunpack.c.l.b16 %v840
    %v916 = vunpack.c.h.b16 %v840
    %v917 = vunpack.c.l.b16 %v841
    %v918 = vunpack.c.h.b16 %v841
    %v919 = vunpack.c.l.b16 %v842
    %v920 = vunpack.c.h.b16 %v842
    %v921 = vunpack.c.l.b16 %v843
    %v922 = vunpack.c.h.b16 %v843
    %v923 = vunpack.c.l.b16 %v844
    %v924 = vunpack.c.h.b16 %v844
    %v925 = vunpack.c.l.b16 %v845
    %v926 = vunpack.c.h.b16 %v845
    %v927 = vunpack.c.l.b16 %v846
    %v928 = vunpack.c.h.b16 %v846
    %v929 = vunpack.c.l.b16 %v847
    %v930 = vunpack.c.h.b16 %v847
    %v931 = vunpack.c.l.b16 %v848
    %v932 = vunpack.c.h.b16 %v848
    %v933 = vunpack.c.l.b16 %v849
    %v934 = vunpack.c.h.b16 %v849
    %v935 = vunpack.c.l.b16 %v850
    %v936 = vunpack.c.h.b16 %v850
    %v937 = vunpack.c.l.b16 %v851
    %v938 = vunpack.c.h.b16 %v851
    %v939 = vunpack.c.l.b16 %v852
    %v940 = vunpack.c.h.b16 %v852
    %v941 = vunpack.c.l.b16 %v853
    %v942 = vunpack.c.h.b16 %v853
    %v943 = vunpack.c.l.b16 %v854
    %v944 = vunpack.c.h.b16 %v854
    %v945 = vunpack.c.l.b16 %v855
    %v946 = vunpack.c.h.b16 %v855
    %v947 = vunpack.c.l.b16 %v856
    %v948 = vunpack.c.h.b16 %v856
    %v949 = vunpack.c.l.b16 %v857
    %v950 = vunpack.c.h.b16 %v857
    %v951 = vunpack.c.l.b16 %v858
    %v952 = vunpack.c.h.b16 %v858
    %v953 = vunpack.c.l.b16 %v859
    %v954 = vunpack.c.h.b16 %v859
    %v955 = vunpack.c.l.b16 %v860
    %v956 = vunpack.c.h.b16 %v860
    %v957 = vpack.c.b16 %v897, %v893
    %v958 = vpack.c.b16 %v898, %v894
    %v959 = vpack.c.b16 %v899, %v895
    %v960 = vpack.c.b16 %v900, %v896
    %v961 = vpack.c.b16 %v905, %v901
    %v962 = vpack.c.b16 %v906, %v902
    %v963 = vpack.c.b16 %v907, %v903
    %v964 = vpack.c.b16 %v908, %v904
    %v965 = vpack.c.b16 %v913, %v909
    %v966 = vpack.c.b16 %v914, %v910
    %v967 = vpack.c.b16 %v915, %v911
    %v968 = vpack.c.b16 %v916, %v912
    %v969 = vpack.c.b16 %v921, %v917
    %v970 = vpack.c.b16 %v922, %v918
    %v971 = vpack.c.b16 %v923, %v919
    %v972 = vpack.c.b16 %v924, %v920
    %v973 = vpack.c.b16 %v929, %v925
    %v974 = vpack.c.b16 %v930, %v926
    %v975 = vpack.c.b16 %v931, %v927
    %v976 = vpack.c.b16 %v932, %v928
    %v977 = vpack.c.b16 %v937, %v933
    %v978 = vpack.c.b16 %v938, %v934
    %v979 = vpack.c.b16 %v939, %v935
    %v980 = vpack.c.b16 %v940, %v936
    %v981 = vpack.c.b16 %v945, %v941
    %v982 = vpack.c.b16 %v946, %v942
    %v983 = vpack.c.b16 %v947, %v943
    %v984 = vpack.c.b16 %v948, %v944
    %v985 = vpack.c.b16 %v953, %v949
    %v986 = vpack.c.b16 %v954, %v950
    %v987 = vpack.c.b16 %v955, %v951
    %v988 = vpack.c.b16 %v956, %v952
    %1021 = vmatprep.subr.bf16.mxu0 %v986
    %1022 = vmatpush1.bf16.msra.mxu0 %v985
    %1023 = vmatprep.subr.bf16.mxu0 %v982
    %1024 = vmatpush1.bf16.msra.mxu0 %v981
    %1025 = vmatprep.subr.bf16.mxu0 %v978
    %1026 = vmatpush1.bf16.msra.mxu0 %v977
    %1027 = vmatprep.subr.bf16.mxu0 %v974
    %1028 = vmatpush1.bf16.msra.mxu0 %v973
    %1029 = vmatprep.subr.bf16.mxu0 %v970
    %1030 = vmatpush1.bf16.msra.mxu0 %v969
    %1031 = vmatprep.subr.bf16.mxu0 %v966
    %1032 = vmatpush1.bf16.msra.mxu0 %v965
    %1033 = vmatprep.subr.bf16.mxu0 %v962
    %1034 = vmatpush1.bf16.msra.mxu0 %v961
    %1035 = vmatprep.subr.bf16.mxu0 %v958
    %1036 = vmatpush1.bf16.msra.mxu0 %v957
    %1037 = vmatprep.subr.bf16.mxu0 0
    %1038 = vmatpush2.bf16.msra.mxu0 0
    %1039 = vmatprep.subr.bf16.mxu0 0
    %1040 = vmatpush2.bf16.msra.mxu0 0
    %1041 = vmatprep.subr.bf16.mxu0 0
    %1042 = vmatpush2.bf16.msra.mxu0 0
    %1043 = vmatprep.subr.bf16.mxu0 0
    %1044 = vmatpush2.bf16.msra.mxu0 0
    %1045 = vmatprep.subr.bf16.mxu0 0
    %1046 = vmatpush2.bf16.msra.mxu0 0
    %1047 = vmatprep.subr.bf16.mxu0 0
    %1048 = vmatpush2.bf16.msra.mxu0 0
    %1049 = vmatprep.subr.bf16.mxu0 0
    %1050 = vmatpush2.bf16.msra.mxu0 0
    %1051 = vmatprep.subr.bf16.mxu0 0
    %1052 = vmatpush2.bf16.msra.mxu0 0
    %1053 = vmatprep.mubr.bf16.mxu0 0
    %1054 = vmatmul.mubr.bf16.gmra.mxu0 %v820
    %v1055 = vpop.f32.mrf.mxu0
    %v1056 = vadd.f32 0.0, %v1055
    %v1057 = vpop.f32.mrf.mxu0
    %v1058 = vadd.f32 0.0, %v1057
    %v1059 = vpop.f32.mrf.mxu0
    %v1060 = vpop.f32.mrf.mxu0
    %1061 = vdwg.mxu0
    %1062 = vmatprep.subr.bf16.mxu0 %v988
    %1063 = vmatpush1.bf16.msra.mxu0 %v987
    %1064 = vmatprep.subr.bf16.mxu0 %v984
    %1065 = vmatpush1.bf16.msra.mxu0 %v983
    %1066 = vmatprep.subr.bf16.mxu0 %v980
    %1067 = vmatpush1.bf16.msra.mxu0 %v979
    %1068 = vmatprep.subr.bf16.mxu0 %v976
    %1069 = vmatpush1.bf16.msra.mxu0 %v975
    %1070 = vmatprep.subr.bf16.mxu0 %v972
    %1071 = vmatpush1.bf16.msra.mxu0 %v971
    %1072 = vmatprep.subr.bf16.mxu0 %v968
    %1073 = vmatpush1.bf16.msra.mxu0 %v967
    %1074 = vmatprep.subr.bf16.mxu0 %v964
    %1075 = vmatpush1.bf16.msra.mxu0 %v963
    %1076 = vmatprep.subr.bf16.mxu0 %v960
    %1077 = vmatpush1.bf16.msra.mxu0 %v959
    %1078 = vmatprep.subr.bf16.mxu0 0
    %1079 = vmatpush2.bf16.msra.mxu0 0
    %1080 = vmatprep.subr.bf16.mxu0 0
    %1081 = vmatpush2.bf16.msra.mxu0 0
    %1082 = vmatprep.subr.bf16.mxu0 0
    %1083 = vmatpush2.bf16.msra.mxu0 0
    %1084 = vmatprep.subr.bf16.mxu0 0
    %1085 = vmatpush2.bf16.msra.mxu0 0
    %1086 = vmatprep.subr.bf16.mxu0 0
    %1087 = vmatpush2.bf16.msra.mxu0 0
    %1088 = vmatprep.subr.bf16.mxu0 0
    %1089 = vmatpush2.bf16.msra.mxu0 0
    %1090 = vmatprep.subr.bf16.mxu0 0
    %1091 = vmatpush2.bf16.msra.mxu0 0
    %1092 = vmatprep.subr.bf16.mxu0 0
    %1093 = vmatpush2.bf16.msra.mxu0 0
    %1094 = vmatprep.mubr.bf16.mxu0 0
    %1095 = vmatmul.mubr.bf16.gmra.mxu0 %v820
    %v1096 = vpop.f32.mrf.mxu0
    %v1097 = vadd.f32 0.0, %v1096
    %v1098 = vpop.f32.mrf.mxu0
    %v1099 = vadd.f32 0.0, %v1098
    %v1100 = vpop.f32.mrf.mxu0
    %v1101 = vpop.f32.mrf.mxu0
    %1102 = vdwg.mxu0
    %v1103 = vadd.f32 %v825, %v1056
    %v1104 = vadd.f32 %v826, %v1058
    %v1105 = vadd.f32 %v827, %v1097
    %v1106 = vadd.f32 %v828, %v1099
    %v1107 = vmul.f32 %v1103, 0.5
    %v1108 = vtanh.pop %v1107
    %v1109 = vmul.f32 %v1108, 0.5
    %v1110 = vadd.f32 %v1109, 0.5
    %v1111 = vmul.f32 %v1104, 0.5
    %v1112 = vtanh.pop %v1111
    %v1113 = vmul.f32 %v1112, 0.5
    %v1114 = vadd.f32 %v1113, 0.5
    %v1115 = vtanh.pop %v1105
    %v1116 = vmul.f32 %v1106, 0.5
    %v1117 = vtanh.pop %v1116
    %v1118 = vmul.f32 %v1117, 0.5
    %v1119 = vadd.f32 %v1118, 0.5
    %v1120 = vmul.f32 %v1114, %v817
    %v1121 = vmul.f32 %v1110, %v1115
    %v1122 = vadd.f32 %v1120, %v1121
    %v1123 = vtanh.pop %v1122
    %v1124 = vmul.f32 %v1119, %v1123
    %v1125 = vpack.c.bf16 %v1124, %v1124
    %s1126 = scalar_lea.vmem [#allocation2], 4
    %1127 = vst [vmem:[%s1126] sm:$0xf] %v1125
    %s1128 = smul.u32 2, 4
    %s1129 = smul.addr %s1128, 8
    %s1130 = scalar_lea.vmem [#allocation3], %s1129
    %v1131 = vld [vmem:[%s1130] sm:$0xff]
    %v1132 = vld [vmem:[%s1130 + $0x8] sm:$0xff]
    %v1133 = vld [vmem:[%s1130 + $0x10] sm:$0xff]
    %v1134 = vld [vmem:[%s1130 + $0x18] sm:$0xff]
    %v1135 = vld [vmem:[#allocation9] sm:$0xff]
    %v1136 = vld [vmem:[#allocation9 + $0x8] sm:$0xff]
    %v1137 = vld [vmem:[#allocation9 + $0x10] sm:$0xff]
    %v1138 = vld [vmem:[#allocation9 + $0x18] sm:$0xff]
    %v1139 = vld [vmem:[#allocation9 + $0x20] sm:$0xff]
    %v1140 = vld [vmem:[#allocation9 + $0x28] sm:$0xff]
    %v1141 = vld [vmem:[#allocation9 + $0x30] sm:$0xff]
    %v1142 = vld [vmem:[#allocation9 + $0x38] sm:$0xff]
    %v1143 = vld [vmem:[#allocation9 + $0x40] sm:$0xff]
    %v1144 = vld [vmem:[#allocation9 + $0x48] sm:$0xff]
    %v1145 = vld [vmem:[#allocation9 + $0x50] sm:$0xff]
    %v1146 = vld [vmem:[#allocation9 + $0x58] sm:$0xff]
    %v1147 = vld [vmem:[#allocation9 + $0x60] sm:$0xff]
    %v1148 = vld [vmem:[#allocation9 + $0x68] sm:$0xff]
    %v1149 = vld [vmem:[#allocation9 + $0x70] sm:$0xff]
    %v1150 = vld [vmem:[#allocation9 + $0x78] sm:$0xff]
    %v1151 = vld [vmem:[#allocation9 + $0x80] sm:$0xff]
    %v1152 = vld [vmem:[#allocation9 + $0x88] sm:$0xff]
    %v1153 = vld [vmem:[#allocation9 + $0x90] sm:$0xff]
    %v1154 = vld [vmem:[#allocation9 + $0x98] sm:$0xff]
    %v1155 = vld [vmem:[#allocation9 + $0xa0] sm:$0xff]
    %v1156 = vld [vmem:[#allocation9 + $0xa8] sm:$0xff]
    %v1157 = vld [vmem:[#allocation9 + $0xb0] sm:$0xff]
    %v1158 = vld [vmem:[#allocation9 + $0xb8] sm:$0xff]
    %v1159 = vld [vmem:[#allocation9 + $0xc0] sm:$0xff]
    %v1160 = vld [vmem:[#allocation9 + $0xc8] sm:$0xff]
    %v1161 = vld [vmem:[#allocation9 + $0xd0] sm:$0xff]
    %v1162 = vld [vmem:[#allocation9 + $0xd8] sm:$0xff]
    %v1163 = vld [vmem:[#allocation9 + $0xe0] sm:$0xff]
    %v1164 = vld [vmem:[#allocation9 + $0xe8] sm:$0xff]
    %v1165 = vld [vmem:[#allocation9 + $0xf0] sm:$0xff]
    %v1166 = vld [vmem:[#allocation9 + $0xf8] sm:$0xff]
    %v1199 = vunpack.c.l.b16 %v1135
    %v1200 = vunpack.c.h.b16 %v1135
    %v1201 = vunpack.c.l.b16 %v1136
    %v1202 = vunpack.c.h.b16 %v1136
    %v1203 = vunpack.c.l.b16 %v1137
    %v1204 = vunpack.c.h.b16 %v1137
    %v1205 = vunpack.c.l.b16 %v1138
    %v1206 = vunpack.c.h.b16 %v1138
    %v1207 = vunpack.c.l.b16 %v1139
    %v1208 = vunpack.c.h.b16 %v1139
    %v1209 = vunpack.c.l.b16 %v1140
    %v1210 = vunpack.c.h.b16 %v1140
    %v1211 = vunpack.c.l.b16 %v1141
    %v1212 = vunpack.c.h.b16 %v1141
    %v1213 = vunpack.c.l.b16 %v1142
    %v1214 = vunpack.c.h.b16 %v1142
    %v1215 = vunpack.c.l.b16 %v1143
    %v1216 = vunpack.c.h.b16 %v1143
    %v1217 = vunpack.c.l.b16 %v1144
    %v1218 = vunpack.c.h.b16 %v1144
    %v1219 = vunpack.c.l.b16 %v1145
    %v1220 = vunpack.c.h.b16 %v1145
    %v1221 = vunpack.c.l.b16 %v1146
    %v1222 = vunpack.c.h.b16 %v1146
    %v1223 = vunpack.c.l.b16 %v1147
    %v1224 = vunpack.c.h.b16 %v1147
    %v1225 = vunpack.c.l.b16 %v1148
    %v1226 = vunpack.c.h.b16 %v1148
    %v1227 = vunpack.c.l.b16 %v1149
    %v1228 = vunpack.c.h.b16 %v1149
    %v1229 = vunpack.c.l.b16 %v1150
    %v1230 = vunpack.c.h.b16 %v1150
    %v1231 = vunpack.c.l.b16 %v1151
    %v1232 = vunpack.c.h.b16 %v1151
    %v1233 = vunpack.c.l.b16 %v1152
    %v1234 = vunpack.c.h.b16 %v1152
    %v1235 = vunpack.c.l.b16 %v1153
    %v1236 = vunpack.c.h.b16 %v1153
    %v1237 = vunpack.c.l.b16 %v1154
    %v1238 = vunpack.c.h.b16 %v1154
    %v1239 = vunpack.c.l.b16 %v1155
    %v1240 = vunpack.c.h.b16 %v1155
    %v1241 = vunpack.c.l.b16 %v1156
    %v1242 = vunpack.c.h.b16 %v1156
    %v1243 = vunpack.c.l.b16 %v1157
    %v1244 = vunpack.c.h.b16 %v1157
    %v1245 = vunpack.c.l.b16 %v1158
    %v1246 = vunpack.c.h.b16 %v1158
    %v1247 = vunpack.c.l.b16 %v1159
    %v1248 = vunpack.c.h.b16 %v1159
    %v1249 = vunpack.c.l.b16 %v1160
    %v1250 = vunpack.c.h.b16 %v1160
    %v1251 = vunpack.c.l.b16 %v1161
    %v1252 = vunpack.c.h.b16 %v1161
    %v1253 = vunpack.c.l.b16 %v1162
    %v1254 = vunpack.c.h.b16 %v1162
    %v1255 = vunpack.c.l.b16 %v1163
    %v1256 = vunpack.c.h.b16 %v1163
    %v1257 = vunpack.c.l.b16 %v1164
    %v1258 = vunpack.c.h.b16 %v1164
    %v1259 = vunpack.c.l.b16 %v1165
    %v1260 = vunpack.c.h.b16 %v1165
    %v1261 = vunpack.c.l.b16 %v1166
    %v1262 = vunpack.c.h.b16 %v1166
    %v1263 = vpack.c.b16 %v1203, %v1199
    %v1264 = vpack.c.b16 %v1204, %v1200
    %v1265 = vpack.c.b16 %v1205, %v1201
    %v1266 = vpack.c.b16 %v1206, %v1202
    %v1267 = vpack.c.b16 %v1211, %v1207
    %v1268 = vpack.c.b16 %v1212, %v1208
    %v1269 = vpack.c.b16 %v1213, %v1209
    %v1270 = vpack.c.b16 %v1214, %v1210
    %v1271 = vpack.c.b16 %v1219, %v1215
    %v1272 = vpack.c.b16 %v1220, %v1216
    %v1273 = vpack.c.b16 %v1221, %v1217
    %v1274 = vpack.c.b16 %v1222, %v1218
    %v1275 = vpack.c.b16 %v1227, %v1223
    %v1276 = vpack.c.b16 %v1228, %v1224
    %v1277 = vpack.c.b16 %v1229, %v1225
    %v1278 = vpack.c.b16 %v1230, %v1226
    %v1279 = vpack.c.b16 %v1235, %v1231
    %v1280 = vpack.c.b16 %v1236, %v1232
    %v1281 = vpack.c.b16 %v1237, %v1233
    %v1282 = vpack.c.b16 %v1238, %v1234
    %v1283 = vpack.c.b16 %v1243, %v1239
    %v1284 = vpack.c.b16 %v1244, %v1240
    %v1285 = vpack.c.b16 %v1245, %v1241
    %v1286 = vpack.c.b16 %v1246, %v1242
    %v1287 = vpack.c.b16 %v1251, %v1247
    %v1288 = vpack.c.b16 %v1252, %v1248
    %v1289 = vpack.c.b16 %v1253, %v1249
    %v1290 = vpack.c.b16 %v1254, %v1250
    %v1291 = vpack.c.b16 %v1259, %v1255
    %v1292 = vpack.c.b16 %v1260, %v1256
    %v1293 = vpack.c.b16 %v1261, %v1257
    %v1294 = vpack.c.b16 %v1262, %v1258
    %1327 = vmatprep.subr.bf16.mxu0 %v1292
    %1328 = vmatpush1.bf16.msra.mxu0 %v1291
    %1329 = vmatprep.subr.bf16.mxu0 %v1288
    %1330 = vmatpush1.bf16.msra.mxu0 %v1287
    %1331 = vmatprep.subr.bf16.mxu0 %v1284
    %1332 = vmatpush1.bf16.msra.mxu0 %v1283
    %1333 = vmatprep.subr.bf16.mxu0 %v1280
    %1334 = vmatpush1.bf16.msra.mxu0 %v1279
    %1335 = vmatprep.subr.bf16.mxu0 %v1276
    %1336 = vmatpush1.bf16.msra.mxu0 %v1275
    %1337 = vmatprep.subr.bf16.mxu0 %v1272
    %1338 = vmatpush1.bf16.msra.mxu0 %v1271
    %1339 = vmatprep.subr.bf16.mxu0 %v1268
    %1340 = vmatpush1.bf16.msra.mxu0 %v1267
    %1341 = vmatprep.subr.bf16.mxu0 %v1264
    %1342 = vmatpush1.bf16.msra.mxu0 %v1263
    %1343 = vmatprep.subr.bf16.mxu0 0
    %1344 = vmatpush2.bf16.msra.mxu0 0
    %1345 = vmatprep.subr.bf16.mxu0 0
    %1346 = vmatpush2.bf16.msra.mxu0 0
    %1347 = vmatprep.subr.bf16.mxu0 0
    %1348 = vmatpush2.bf16.msra.mxu0 0
    %1349 = vmatprep.subr.bf16.mxu0 0
    %1350 = vmatpush2.bf16.msra.mxu0 0
    %1351 = vmatprep.subr.bf16.mxu0 0
    %1352 = vmatpush2.bf16.msra.mxu0 0
    %1353 = vmatprep.subr.bf16.mxu0 0
    %1354 = vmatpush2.bf16.msra.mxu0 0
    %1355 = vmatprep.subr.bf16.mxu0 0
    %1356 = vmatpush2.bf16.msra.mxu0 0
    %1357 = vmatprep.subr.bf16.mxu0 0
    %1358 = vmatpush2.bf16.msra.mxu0 0
    %1359 = vmatprep.mubr.bf16.mxu0 0
    %1360 = vmatmul.mubr.bf16.gmra.mxu0 %v1125
    %v1361 = vpop.f32.mrf.mxu0
    %v1362 = vadd.f32 0.0, %v1361
    %v1363 = vpop.f32.mrf.mxu0
    %v1364 = vadd.f32 0.0, %v1363
    %v1365 = vpop.f32.mrf.mxu0
    %v1366 = vpop.f32.mrf.mxu0
    %1367 = vdwg.mxu0
    %1368 = vmatprep.subr.bf16.mxu0 %v1294
    %1369 = vmatpush1.bf16.msra.mxu0 %v1293
    %1370 = vmatprep.subr.bf16.mxu0 %v1290
    %1371 = vmatpush1.bf16.msra.mxu0 %v1289
    %1372 = vmatprep.subr.bf16.mxu0 %v1286
    %1373 = vmatpush1.bf16.msra.mxu0 %v1285
    %1374 = vmatprep.subr.bf16.mxu0 %v1282
    %1375 = vmatpush1.bf16.msra.mxu0 %v1281
    %1376 = vmatprep.subr.bf16.mxu0 %v1278
    %1377 = vmatpush1.bf16.msra.mxu0 %v1277
    %1378 = vmatprep.subr.bf16.mxu0 %v1274
    %1379 = vmatpush1.bf16.msra.mxu0 %v1273
    %1380 = vmatprep.subr.bf16.mxu0 %v1270
    %1381 = vmatpush1.bf16.msra.mxu0 %v1269
    %1382 = vmatprep.subr.bf16.mxu0 %v1266
    %1383 = vmatpush1.bf16.msra.mxu0 %v1265
    %1384 = vmatprep.subr.bf16.mxu0 0
    %1385 = vmatpush2.bf16.msra.mxu0 0
    %1386 = vmatprep.subr.bf16.mxu0 0
    %1387 = vmatpush2.bf16.msra.mxu0 0
    %1388 = vmatprep.subr.bf16.mxu0 0
    %1389 = vmatpush2.bf16.msra.mxu0 0
    %1390 = vmatprep.subr.bf16.mxu0 0
    %1391 = vmatpush2.bf16.msra.mxu0 0
    %1392 = vmatprep.subr.bf16.mxu0 0
    %1393 = vmatpush2.bf16.msra.mxu0 0
    %1394 = vmatprep.subr.bf16.mxu0 0
    %1395 = vmatpush2.bf16.msra.mxu0 0
    %1396 = vmatprep.subr.bf16.mxu0 0
    %1397 = vmatpush2.bf16.msra.mxu0 0
    %1398 = vmatprep.subr.bf16.mxu0 0
    %1399 = vmatpush2.bf16.msra.mxu0 0
    %1400 = vmatprep.mubr.bf16.mxu0 0
    %1401 = vmatmul.mubr.bf16.gmra.mxu0 %v1125
    %v1402 = vpop.f32.mrf.mxu0
    %v1403 = vadd.f32 0.0, %v1402
    %v1404 = vpop.f32.mrf.mxu0
    %v1405 = vadd.f32 0.0, %v1404
    %v1406 = vpop.f32.mrf.mxu0
    %v1407 = vpop.f32.mrf.mxu0
    %1408 = vdwg.mxu0
    %v1409 = vadd.f32 %v1131, %v1362
    %v1410 = vadd.f32 %v1132, %v1364
    %v1411 = vadd.f32 %v1133, %v1403
    %v1412 = vadd.f32 %v1134, %v1405
    %v1413 = vmul.f32 %v1409, 0.5
    %v1414 = vtanh.pop %v1413
    %v1415 = vmul.f32 %v1414, 0.5
    %v1416 = vadd.f32 %v1415, 0.5
    %v1417 = vmul.f32 %v1410, 0.5
    %v1418 = vtanh.pop %v1417
    %v1419 = vmul.f32 %v1418, 0.5
    %v1420 = vadd.f32 %v1419, 0.5
    %v1421 = vtanh.pop %v1411
    %v1422 = vmul.f32 %v1412, 0.5
    %v1423 = vtanh.pop %v1422
    %v1424 = vmul.f32 %v1423, 0.5
    %v1425 = vadd.f32 %v1424, 0.5
    %v1426 = vmul.f32 %v1420, %v1122
    %v1427 = vmul.f32 %v1416, %v1421
    %v1428 = vadd.f32 %v1426, %v1427
    %v1429 = vtanh.pop %v1428
    %v1430 = vmul.f32 %v1425, %v1429
    %v1431 = vpack.c.bf16 %v1430, %v1430
    %s1432 = scalar_lea.vmem [#allocation2], 8
    %1433 = vst [vmem:[%s1432] sm:$0xf] %v1431
    %s1434 = smul.u32 3, 4
    %s1435 = smul.addr %s1434, 8
    %s1436 = scalar_lea.vmem [#allocation3], %s1435
    %v1437 = vld [vmem:[%s1436] sm:$0xff]
    %v1438 = vld [vmem:[%s1436 + $0x8] sm:$0xff]
    %v1439 = vld [vmem:[%s1436 + $0x10] sm:$0xff]
    %v1440 = vld [vmem:[%s1436 + $0x18] sm:$0xff]
    %v1441 = vld [vmem:[#allocation9] sm:$0xff]
    %v1442 = vld [vmem:[#allocation9 + $0x8] sm:$0xff]
    %v1443 = vld [vmem:[#allocation9 + $0x10] sm:$0xff]
    %v1444 = vld [vmem:[#allocation9 + $0x18] sm:$0xff]
    %v1445 = vld [vmem:[#allocation9 + $0x20] sm:$0xff]
    %v1446 = vld [vmem:[#allocation9 + $0x28] sm:$0xff]
    %v1447 = vld [vmem:[#allocation9 + $0x30] sm:$0xff]
    %v1448 = vld [vmem:[#allocation9 + $0x38] sm:$0xff]
    %v1449 = vld [vmem:[#allocation9 + $0x40] sm:$0xff]
    %v1450 = vld [vmem:[#allocation9 + $0x48] sm:$0xff]
    %v1451 = vld [vmem:[#allocation9 + $0x50] sm:$0xff]
    %v1452 = vld [vmem:[#allocation9 + $0x58] sm:$0xff]
    %v1453 = vld [vmem:[#allocation9 + $0x60] sm:$0xff]
    %v1454 = vld [vmem:[#allocation9 + $0x68] sm:$0xff]
    %v1455 = vld [vmem:[#allocation9 + $0x70] sm:$0xff]
    %v1456 = vld [vmem:[#allocation9 + $0x78] sm:$0xff]
    %v1457 = vld [vmem:[#allocation9 + $0x80] sm:$0xff]
    %v1458 = vld [vmem:[#allocation9 + $0x88] sm:$0xff]
    %v1459 = vld [vmem:[#allocation9 + $0x90] sm:$0xff]
    %v1460 = vld [vmem:[#allocation9 + $0x98] sm:$0xff]
    %v1461 = vld [vmem:[#allocation9 + $0xa0] sm:$0xff]
    %v1462 = vld [vmem:[#allocation9 + $0xa8] sm:$0xff]
    %v1463 = vld [vmem:[#allocation9 + $0xb0] sm:$0xff]
    %v1464 = vld [vmem:[#allocation9 + $0xb8] sm:$0xff]
    %v1465 = vld [vmem:[#allocation9 + $0xc0] sm:$0xff]
    %v1466 = vld [vmem:[#allocation9 + $0xc8] sm:$0xff]
    %v1467 = vld [vmem:[#allocation9 + $0xd0] sm:$0xff]
    %v1468 = vld [vmem:[#allocation9 + $0xd8] sm:$0xff]
    %v1469 = vld [vmem:[#allocation9 + $0xe0] sm:$0xff]
    %v1470 = vld [vmem:[#allocation9 + $0xe8] sm:$0xff]
    %v1471 = vld [vmem:[#allocation9 + $0xf0] sm:$0xff]
    %v1472 = vld [vmem:[#allocation9 + $0xf8] sm:$0xff]
    %v1505 = vunpack.c.l.b16 %v1441
    %v1506 = vunpack.c.h.b16 %v1441
    %v1507 = vunpack.c.l.b16 %v1442
    %v1508 = vunpack.c.h.b16 %v1442
    %v1509 = vunpack.c.l.b16 %v1443
    %v1510 = vunpack.c.h.b16 %v1443
    %v1511 = vunpack.c.l.b16 %v1444
    %v1512 = vunpack.c.h.b16 %v1444
    %v1513 = vunpack.c.l.b16 %v1445
    %v1514 = vunpack.c.h.b16 %v1445
    %v1515 = vunpack.c.l.b16 %v1446
    %v1516 = vunpack.c.h.b16 %v1446
    %v1517 = vunpack.c.l.b16 %v1447
    %v1518 = vunpack.c.h.b16 %v1447
    %v1519 = vunpack.c.l.b16 %v1448
    %v1520 = vunpack.c.h.b16 %v1448
    %v1521 = vunpack.c.l.b16 %v1449
    %v1522 = vunpack.c.h.b16 %v1449
    %v1523 = vunpack.c.l.b16 %v1450
    %v1524 = vunpack.c.h.b16 %v1450
    %v1525 = vunpack.c.l.b16 %v1451
    %v1526 = vunpack.c.h.b16 %v1451
    %v1527 = vunpack.c.l.b16 %v1452
    %v1528 = vunpack.c.h.b16 %v1452
    %v1529 = vunpack.c.l.b16 %v1453
    %v1530 = vunpack.c.h.b16 %v1453
    %v1531 = vunpack.c.l.b16 %v1454
    %v1532 = vunpack.c.h.b16 %v1454
    %v1533 = vunpack.c.l.b16 %v1455
    %v1534 = vunpack.c.h.b16 %v1455
    %v1535 = vunpack.c.l.b16 %v1456
    %v1536 = vunpack.c.h.b16 %v1456
    %v1537 = vunpack.c.l.b16 %v1457
    %v1538 = vunpack.c.h.b16 %v1457
    %v1539 = vunpack.c.l.b16 %v1458
    %v1540 = vunpack.c.h.b16 %v1458
    %v1541 = vunpack.c.l.b16 %v1459
    %v1542 = vunpack.c.h.b16 %v1459
    %v1543 = vunpack.c.l.b16 %v1460
    %v1544 = vunpack.c.h.b16 %v1460
    %v1545 = vunpack.c.l.b16 %v1461
    %v1546 = vunpack.c.h.b16 %v1461
    %v1547 = vunpack.c.l.b16 %v1462
    %v1548 = vunpack.c.h.b16 %v1462
    %v1549 = vunpack.c.l.b16 %v1463
    %v1550 = vunpack.c.h.b16 %v1463
    %v1551 = vunpack.c.l.b16 %v1464
    %v1552 = vunpack.c.h.b16 %v1464
    %v1553 = vunpack.c.l.b16 %v1465
    %v1554 = vunpack.c.h.b16 %v1465
    %v1555 = vunpack.c.l.b16 %v1466
    %v1556 = vunpack.c.h.b16 %v1466
    %v1557 = vunpack.c.l.b16 %v1467
    %v1558 = vunpack.c.h.b16 %v1467
    %v1559 = vunpack.c.l.b16 %v1468
    %v1560 = vunpack.c.h.b16 %v1468
    %v1561 = vunpack.c.l.b16 %v1469
    %v1562 = vunpack.c.h.b16 %v1469
    %v1563 = vunpack.c.l.b16 %v1470
    %v1564 = vunpack.c.h.b16 %v1470
    %v1565 = vunpack.c.l.b16 %v1471
    %v1566 = vunpack.c.h.b16 %v1471
    %v1567 = vunpack.c.l.b16 %v1472
    %v1568 = vunpack.c.h.b16 %v1472
    %v1569 = vpack.c.b16 %v1509, %v1505
    %v1570 = vpack.c.b16 %v1510, %v1506
    %v1571 = vpack.c.b16 %v1511, %v1507
    %v1572 = vpack.c.b16 %v1512, %v1508
    %v1573 = vpack.c.b16 %v1517, %v1513
    %v1574 = vpack.c.b16 %v1518, %v1514
    %v1575 = vpack.c.b16 %v1519, %v1515
    %v1576 = vpack.c.b16 %v1520, %v1516
    %v1577 = vpack.c.b16 %v1525, %v1521
    %v1578 = vpack.c.b16 %v1526, %v1522
    %v1579 = vpack.c.b16 %v1527, %v1523
    %v1580 = vpack.c.b16 %v1528, %v1524
    %v1581 = vpack.c.b16 %v1533, %v1529
    %v1582 = vpack.c.b16 %v1534, %v1530
    %v1583 = vpack.c.b16 %v1535, %v1531
    %v1584 = vpack.c.b16 %v1536, %v1532
    %v1585 = vpack.c.b16 %v1541, %v1537
    %v1586 = vpack.c.b16 %v1542, %v1538
    %v1587 = vpack.c.b16 %v1543, %v1539
    %v1588 = vpack.c.b16 %v1544, %v1540
    %v1589 = vpack.c.b16 %v1549, %v1545
    %v1590 = vpack.c.b16 %v1550, %v1546
    %v1591 = vpack.c.b16 %v1551, %v1547
    %v1592 = vpack.c.b16 %v1552, %v1548
    %v1593 = vpack.c.b16 %v1557, %v1553
    %v1594 = vpack.c.b16 %v1558, %v1554
    %v1595 = vpack.c.b16 %v1559, %v1555
    %v1596 = vpack.c.b16 %v1560, %v1556
    %v1597 = vpack.c.b16 %v1565, %v1561
    %v1598 = vpack.c.b16 %v1566, %v1562
    %v1599 = vpack.c.b16 %v1567, %v1563
    %v1600 = vpack.c.b16 %v1568, %v1564
    %1633 = vmatprep.subr.bf16.mxu0 %v1598
    %1634 = vmatpush1.bf16.msra.mxu0 %v1597
    %1635 = vmatprep.subr.bf16.mxu0 %v1594
    %1636 = vmatpush1.bf16.msra.mxu0 %v1593
    %1637 = vmatprep.subr.bf16.mxu0 %v1590
    %1638 = vmatpush1.bf16.msra.mxu0 %v1589
    %1639 = vmatprep.subr.bf16.mxu0 %v1586
    %1640 = vmatpush1.bf16.msra.mxu0 %v1585
    %1641 = vmatprep.subr.bf16.mxu0 %v1582
    %1642 = vmatpush1.bf16.msra.mxu0 %v1581
    %1643 = vmatprep.subr.bf16.mxu0 %v1578
    %1644 = vmatpush1.bf16.msra.mxu0 %v1577
    %1645 = vmatprep.subr.bf16.mxu0 %v1574
    %1646 = vmatpush1.bf16.msra.mxu0 %v1573
    %1647 = vmatprep.subr.bf16.mxu0 %v1570
    %1648 = vmatpush1.bf16.msra.mxu0 %v1569
    %1649 = vmatprep.subr.bf16.mxu0 0
    %1650 = vmatpush2.bf16.msra.mxu0 0
    %1651 = vmatprep.subr.bf16.mxu0 0
    %1652 = vmatpush2.bf16.msra.mxu0 0
    %1653 = vmatprep.subr.bf16.mxu0 0
    %1654 = vmatpush2.bf16.msra.mxu0 0
    %1655 = vmatprep.subr.bf16.mxu0 0
    %1656 = vmatpush2.bf16.msra.mxu0 0
    %1657 = vmatprep.subr.bf16.mxu0 0
    %1658 = vmatpush2.bf16.msra.mxu0 0
    %1659 = vmatprep.subr.bf16.mxu0 0
    %1660 = vmatpush2.bf16.msra.mxu0 0
    %1661 = vmatprep.subr.bf16.mxu0 0
    %1662 = vmatpush2.bf16.msra.mxu0 0
    %1663 = vmatprep.subr.bf16.mxu0 0
    %1664 = vmatpush2.bf16.msra.mxu0 0
    %1665 = vmatprep.mubr.bf16.mxu0 0
    %1666 = vmatmul.mubr.bf16.gmra.mxu0 %v1431
    %v1667 = vpop.f32.mrf.mxu0
    %v1668 = vadd.f32 0.0, %v1667
    %v1669 = vpop.f32.mrf.mxu0
    %v1670 = vadd.f32 0.0, %v1669
    %v1671 = vpop.f32.mrf.mxu0
    %v1672 = vpop.f32.mrf.mxu0
    %1673 = vdwg.mxu0
    %1674 = vmatprep.subr.bf16.mxu0 %v1600
    %1675 = vmatpush1.bf16.msra.mxu0 %v1599
    %1676 = vmatprep.subr.bf16.mxu0 %v1596
    %1677 = vmatpush1.bf16.msra.mxu0 %v1595
    %1678 = vmatprep.subr.bf16.mxu0 %v1592
    %1679 = vmatpush1.bf16.msra.mxu0 %v1591
    %1680 = vmatprep.subr.bf16.mxu0 %v1588
    %1681 = vmatpush1.bf16.msra.mxu0 %v1587
    %1682 = vmatprep.subr.bf16.mxu0 %v1584
    %1683 = vmatpush1.bf16.msra.mxu0 %v1583
    %1684 = vmatprep.subr.bf16.mxu0 %v1580
    %1685 = vmatpush1.bf16.msra.mxu0 %v1579
    %1686 = vmatprep.subr.bf16.mxu0 %v1576
    %1687 = vmatpush1.bf16.msra.mxu0 %v1575
    %1688 = vmatprep.subr.bf16.mxu0 %v1572
    %1689 = vmatpush1.bf16.msra.mxu0 %v1571
    %1690 = vmatprep.subr.bf16.mxu0 0
    %1691 = vmatpush2.bf16.msra.mxu0 0
    %1692 = vmatprep.subr.bf16.mxu0 0
    %1693 = vmatpush2.bf16.msra.mxu0 0
    %1694 = vmatprep.subr.bf16.mxu0 0
    %1695 = vmatpush2.bf16.msra.mxu0 0
    %1696 = vmatprep.subr.bf16.mxu0 0
    %1697 = vmatpush2.bf16.msra.mxu0 0
    %1698 = vmatprep.subr.bf16.mxu0 0
    %1699 = vmatpush2.bf16.msra.mxu0 0
    %1700 = vmatprep.subr.bf16.mxu0 0
    %1701 = vmatpush2.bf16.msra.mxu0 0
    %1702 = vmatprep.subr.bf16.mxu0 0
    %1703 = vmatpush2.bf16.msra.mxu0 0
    %1704 = vmatprep.subr.bf16.mxu0 0
    %1705 = vmatpush2.bf16.msra.mxu0 0
    %1706 = vmatprep.mubr.bf16.mxu0 0
    %1707 = vmatmul.mubr.bf16.gmra.mxu0 %v1431
    %v1708 = vpop.f32.mrf.mxu0
    %v1709 = vadd.f32 0.0, %v1708
    %v1710 = vpop.f32.mrf.mxu0
    %v1711 = vadd.f32 0.0, %v1710
    %v1712 = vpop.f32.mrf.mxu0
    %v1713 = vpop.f32.mrf.mxu0
    %1714 = vdwg.mxu0
    %v1715 = vadd.f32 %v1437, %v1668
    %v1716 = vadd.f32 %v1438, %v1670
    %v1717 = vadd.f32 %v1439, %v1709
    %v1718 = vadd.f32 %v1440, %v1711
    %v1719 = vmul.f32 %v1715, 0.5
    %v1720 = vtanh.pop %v1719
    %v1721 = vmul.f32 %v1720, 0.5
    %v1722 = vadd.f32 %v1721, 0.5
    %v1723 = vmul.f32 %v1716, 0.5
    %v1724 = vtanh.pop %v1723
    %v1725 = vmul.f32 %v1724, 0.5
    %v1726 = vadd.f32 %v1725, 0.5
    %v1727 = vtanh.pop %v1717
    %v1728 = vmul.f32 %v1718, 0.5
    %v1729 = vtanh.pop %v1728
    %v1730 = vmul.f32 %v1729, 0.5
    %v1731 = vadd.f32 %v1730, 0.5
    %v1732 = vmul.f32 %v1726, %v1428
    %v1733 = vmul.f32 %v1722, %v1727
    %v1734 = vadd.f32 %v1732, %v1733
    %v1735 = vtanh.pop %v1734
    %v1736 = vmul.f32 %v1731, %v1735
    %v1737 = vpack.c.bf16 %v1736, %v1736
    %s1738 = scalar_lea.vmem [#allocation2], 12
    %1739 = vst [vmem:[%s1738] sm:$0xf] %v1737
    %s1740 = smul.u32 4, 4
    %s1741 = smul.addr %s1740, 8
    %s1742 = scalar_lea.vmem [#allocation3], %s1741
    %v1743 = vld [vmem:[%s1742] sm:$0xff]
    %v1744 = vld [vmem:[%s1742 + $0x8] sm:$0xff]
    %v1745 = vld [vmem:[%s1742 + $0x10] sm:$0xff]
    %v1746 = vld [vmem:[%s1742 + $0x18] sm:$0xff]
    %v1747 = vld [vmem:[#allocation9] sm:$0xff]
    %v1748 = vld [vmem:[#allocation9 + $0x8] sm:$0xff]
    %v1749 = vld [vmem:[#allocation9 + $0x10] sm:$0xff]
    %v1750 = vld [vmem:[#allocation9 + $0x18] sm:$0xff]
    %v1751 = vld [vmem:[#allocation9 + $0x20] sm:$0xff]
    %v1752 = vld [vmem:[#allocation9 + $0x28] sm:$0xff]
    %v1753 = vld [vmem:[#allocation9 + $0x30] sm:$0xff]
    %v1754 = vld [vmem:[#allocation9 + $0x38] sm:$0xff]
    %v1755 = vld [vmem:[#allocation9 + $0x40] sm:$0xff]
    %v1756 = vld [vmem:[#allocation9 + $0x48] sm:$0xff]
    %v1757 = vld [vmem:[#allocation9 + $0x50] sm:$0xff]
    %v1758 = vld [vmem:[#allocation9 + $0x58] sm:$0xff]
    %v1759 = vld [vmem:[#allocation9 + $0x60] sm:$0xff]
    %v1760 = vld [vmem:[#allocation9 + $0x68] sm:$0xff]
    %v1761 = vld [vmem:[#allocation9 + $0x70] sm:$0xff]
    %v1762 = vld [vmem:[#allocation9 + $0x78] sm:$0xff]
    %v1763 = vld [vmem:[#allocation9 + $0x80] sm:$0xff]
    %v1764 = vld [vmem:[#allocation9 + $0x88] sm:$0xff]
    %v1765 = vld [vmem:[#allocation9 + $0x90] sm:$0xff]
    %v1766 = vld [vmem:[#allocation9 + $0x98] sm:$0xff]
    %v1767 = vld [vmem:[#allocation9 + $0xa0] sm:$0xff]
    %v1768 = vld [vmem:[#allocation9 + $0xa8] sm:$0xff]
    %v1769 = vld [vmem:[#allocation9 + $0xb0] sm:$0xff]
    %v1770 = vld [vmem:[#allocation9 + $0xb8] sm:$0xff]
    %v1771 = vld [vmem:[#allocation9 + $0xc0] sm:$0xff]
    %v1772 = vld [vmem:[#allocation9 + $0xc8] sm:$0xff]
    %v1773 = vld [vmem:[#allocation9 + $0xd0] sm:$0xff]
    %v1774 = vld [vmem:[#allocation9 + $0xd8] sm:$0xff]
    %v1775 = vld [vmem:[#allocation9 + $0xe0] sm:$0xff]
    %v1776 = vld [vmem:[#allocation9 + $0xe8] sm:$0xff]
    %v1777 = vld [vmem:[#allocation9 + $0xf0] sm:$0xff]
    %v1778 = vld [vmem:[#allocation9 + $0xf8] sm:$0xff]
    %v1811 = vunpack.c.l.b16 %v1747
    %v1812 = vunpack.c.h.b16 %v1747
    %v1813 = vunpack.c.l.b16 %v1748
    %v1814 = vunpack.c.h.b16 %v1748
    %v1815 = vunpack.c.l.b16 %v1749
    %v1816 = vunpack.c.h.b16 %v1749
    %v1817 = vunpack.c.l.b16 %v1750
    %v1818 = vunpack.c.h.b16 %v1750
    %v1819 = vunpack.c.l.b16 %v1751
    %v1820 = vunpack.c.h.b16 %v1751
    %v1821 = vunpack.c.l.b16 %v1752
    %v1822 = vunpack.c.h.b16 %v1752
    %v1823 = vunpack.c.l.b16 %v1753
    %v1824 = vunpack.c.h.b16 %v1753
    %v1825 = vunpack.c.l.b16 %v1754
    %v1826 = vunpack.c.h.b16 %v1754
    %v1827 = vunpack.c.l.b16 %v1755
    %v1828 = vunpack.c.h.b16 %v1755
    %v1829 = vunpack.c.l.b16 %v1756
    %v1830 = vunpack.c.h.b16 %v1756
    %v1831 = vunpack.c.l.b16 %v1757
    %v1832 = vunpack.c.h.b16 %v1757
    %v1833 = vunpack.c.l.b16 %v1758
    %v1834 = vunpack.c.h.b16 %v1758
    %v1835 = vunpack.c.l.b16 %v1759
    %v1836 = vunpack.c.h.b16 %v1759
    %v1837 = vunpack.c.l.b16 %v1760
    %v1838 = vunpack.c.h.b16 %v1760
    %v1839 = vunpack.c.l.b16 %v1761
    %v1840 = vunpack.c.h.b16 %v1761
    %v1841 = vunpack.c.l.b16 %v1762
    %v1842 = vunpack.c.h.b16 %v1762
    %v1843 = vunpack.c.l.b16 %v1763
    %v1844 = vunpack.c.h.b16 %v1763
    %v1845 = vunpack.c.l.b16 %v1764
    %v1846 = vunpack.c.h.b16 %v1764
    %v1847 = vunpack.c.l.b16 %v1765
    %v1848 = vunpack.c.h.b16 %v1765
    %v1849 = vunpack.c.l.b16 %v1766
    %v1850 = vunpack.c.h.b16 %v1766
    %v1851 = vunpack.c.l.b16 %v1767
    %v1852 = vunpack.c.h.b16 %v1767
    %v1853 = vunpack.c.l.b16 %v1768
    %v1854 = vunpack.c.h.b16 %v1768
    %v1855 = vunpack.c.l.b16 %v1769
    %v1856 = vunpack.c.h.b16 %v1769
    %v1857 = vunpack.c.l.b16 %v1770
    %v1858 = vunpack.c.h.b16 %v1770
    %v1859 = vunpack.c.l.b16 %v1771
    %v1860 = vunpack.c.h.b16 %v1771
    %v1861 = vunpack.c.l.b16 %v1772
    %v1862 = vunpack.c.h.b16 %v1772
    %v1863 = vunpack.c.l.b16 %v1773
    %v1864 = vunpack.c.h.b16 %v1773
    %v1865 = vunpack.c.l.b16 %v1774
    %v1866 = vunpack.c.h.b16 %v1774
    %v1867 = vunpack.c.l.b16 %v1775
    %v1868 = vunpack.c.h.b16 %v1775
    %v1869 = vunpack.c.l.b16 %v1776
    %v1870 = vunpack.c.h.b16 %v1776
    %v1871 = vunpack.c.l.b16 %v1777
    %v1872 = vunpack.c.h.b16 %v1777
    %v1873 = vunpack.c.l.b16 %v1778
    %v1874 = vunpack.c.h.b16 %v1778
    %v1875 = vpack.c.b16 %v1815, %v1811
    %v1876 = vpack.c.b16 %v1816, %v1812
    %v1877 = vpack.c.b16 %v1817, %v1813
    %v1878 = vpack.c.b16 %v1818, %v1814
    %v1879 = vpack.c.b16 %v1823, %v1819
    %v1880 = vpack.c.b16 %v1824, %v1820
    %v1881 = vpack.c.b16 %v1825, %v1821
    %v1882 = vpack.c.b16 %v1826, %v1822
    %v1883 = vpack.c.b16 %v1831, %v1827
    %v1884 = vpack.c.b16 %v1832, %v1828
    %v1885 = vpack.c.b16 %v1833, %v1829
    %v1886 = vpack.c.b16 %v1834, %v1830
    %v1887 = vpack.c.b16 %v1839, %v1835
    %v1888 = vpack.c.b16 %v1840, %v1836
    %v1889 = vpack.c.b16 %v1841, %v1837
    %v1890 = vpack.c.b16 %v1842, %v1838
    %v1891 = vpack.c.b16 %v1847, %v1843
    %v1892 = vpack.c.b16 %v1848, %v1844
    %v1893 = vpack.c.b16 %v1849, %v1845
    %v1894 = vpack.c.b16 %v1850, %v1846
    %v1895 = vpack.c.b16 %v1855, %v1851
    %v1896 = vpack.c.b16 %v1856, %v1852
    %v1897 = vpack.c.b16 %v1857, %v1853
    %v1898 = vpack.c.b16 %v1858, %v1854
    %v1899 = vpack.c.b16 %v1863, %v1859
    %v1900 = vpack.c.b16 %v1864, %v1860
    %v1901 = vpack.c.b16 %v1865, %v1861
    %v1902 = vpack.c.b16 %v1866, %v1862
    %v1903 = vpack.c.b16 %v1871, %v1867
    %v1904 = vpack.c.b16 %v1872, %v1868
    %v1905 = vpack.c.b16 %v1873, %v1869
    %v1906 = vpack.c.b16 %v1874, %v1870
    %1939 = vmatprep.subr.bf16.mxu0 %v1904
    %1940 = vmatpush1.bf16.msra.mxu0 %v1903
    %1941 = vmatprep.subr.bf16.mxu0 %v1900
    %1942 = vmatpush1.bf16.msra.mxu0 %v1899
    %1943 = vmatprep.subr.bf16.mxu0 %v1896
    %1944 = vmatpush1.bf16.msra.mxu0 %v1895
    %1945 = vmatprep.subr.bf16.mxu0 %v1892
    %1946 = vmatpush1.bf16.msra.mxu0 %v1891
    %1947 = vmatprep.subr.bf16.mxu0 %v1888
    %1948 = vmatpush1.bf16.msra.mxu0 %v1887
    %1949 = vmatprep.subr.bf16.mxu0 %v1884
    %1950 = vmatpush1.bf16.msra.mxu0 %v1883
    %1951 = vmatprep.subr.bf16.mxu0 %v1880
    %1952 = vmatpush1.bf16.msra.mxu0 %v1879
    %1953 = vmatprep.subr.bf16.mxu0 %v1876
    %1954 = vmatpush1.bf16.msra.mxu0 %v1875
    %1955 = vmatprep.subr.bf16.mxu0 0
    %1956 = vmatpush2.bf16.msra.mxu0 0
    %1957 = vmatprep.subr.bf16.mxu0 0
    %1958 = vmatpush2.bf16.msra.mxu0 0
    %1959 = vmatprep.subr.bf16.mxu0 0
    %1960 = vmatpush2.bf16.msra.mxu0 0
    %1961 = vmatprep.subr.bf16.mxu0 0
    %1962 = vmatpush2.bf16.msra.mxu0 0
    %1963 = vmatprep.subr.bf16.mxu0 0
    %1964 = vmatpush2.bf16.msra.mxu0 0
    %1965 = vmatprep.subr.bf16.mxu0 0
    %1966 = vmatpush2.bf16.msra.mxu0 0
    %1967 = vmatprep.subr.bf16.mxu0 0
    %1968 = vmatpush2.bf16.msra.mxu0 0
    %1969 = vmatprep.subr.bf16.mxu0 0
    %1970 = vmatpush2.bf16.msra.mxu0 0
    %1971 = vmatprep.mubr.bf16.mxu0 0
    %1972 = vmatmul.mubr.bf16.gmra.mxu0 %v1737
    %v1973 = vpop.f32.mrf.mxu0
    %v1974 = vadd.f32 0.0, %v1973
    %v1975 = vpop.f32.mrf.mxu0
    %v1976 = vadd.f32 0.0, %v1975
    %v1977 = vpop.f32.mrf.mxu0
    %v1978 = vpop.f32.mrf.mxu0
    %1979 = vdwg.mxu0
    %1980 = vmatprep.subr.bf16.mxu0 %v1906
    %1981 = vmatpush1.bf16.msra.mxu0 %v1905
    %1982 = vmatprep.subr.bf16.mxu0 %v1902
    %1983 = vmatpush1.bf16.msra.mxu0 %v1901
    %1984 = vmatprep.subr.bf16.mxu0 %v1898
    %1985 = vmatpush1.bf16.msra.mxu0 %v1897
    %1986 = vmatprep.subr.bf16.mxu0 %v1894
    %1987 = vmatpush1.bf16.msra.mxu0 %v1893
    %1988 = vmatprep.subr.bf16.mxu0 %v1890
    %1989 = vmatpush1.bf16.msra.mxu0 %v1889
    %1990 = vmatprep.subr.bf16.mxu0 %v1886
    %1991 = vmatpush1.bf16.msra.mxu0 %v1885
    %1992 = vmatprep.subr.bf16.mxu0 %v1882
    %1993 = vmatpush1.bf16.msra.mxu0 %v1881
    %1994 = vmatprep.subr.bf16.mxu0 %v1878
    %1995 = vmatpush1.bf16.msra.mxu0 %v1877
    %1996 = vmatprep.subr.bf16.mxu0 0
    %1997 = vmatpush2.bf16.msra.mxu0 0
    %1998 = vmatprep.subr.bf16.mxu0 0
    %1999 = vmatpush2.bf16.msra.mxu0 0
    %2000 = vmatprep.subr.bf16.mxu0 0
    %2001 = vmatpush2.bf16.msra.mxu0 0
    %2002 = vmatprep.subr.bf16.mxu0 0
    %2003 = vmatpush2.bf16.msra.mxu0 0
    %2004 = vmatprep.subr.bf16.mxu0 0
    %2005 = vmatpush2.bf16.msra.mxu0 0
    %2006 = vmatprep.subr.bf16.mxu0 0
    %2007 = vmatpush2.bf16.msra.mxu0 0
    %2008 = vmatprep.subr.bf16.mxu0 0
    %2009 = vmatpush2.bf16.msra.mxu0 0
    %2010 = vmatprep.subr.bf16.mxu0 0
    %2011 = vmatpush2.bf16.msra.mxu0 0
    %2012 = vmatprep.mubr.bf16.mxu0 0
    %2013 = vmatmul.mubr.bf16.gmra.mxu0 %v1737
    %v2014 = vpop.f32.mrf.mxu0
    %v2015 = vadd.f32 0.0, %v2014
    %v2016 = vpop.f32.mrf.mxu0
    %v2017 = vadd.f32 0.0, %v2016
    %v2018 = vpop.f32.mrf.mxu0
    %v2019 = vpop.f32.mrf.mxu0
    %2020 = vdwg.mxu0
    %v2021 = vadd.f32 %v1743, %v1974
    %v2022 = vadd.f32 %v1744, %v1976
    %v2023 = vadd.f32 %v1745, %v2015
    %v2024 = vadd.f32 %v1746, %v2017
    %v2025 = vmul.f32 %v2021, 0.5
    %v2026 = vtanh.pop %v2025
    %v2027 = vmul.f32 %v2026, 0.5
    %v2028 = vadd.f32 %v2027, 0.5
    %v2029 = vmul.f32 %v2022, 0.5
    %v2030 = vtanh.pop %v2029
    %v2031 = vmul.f32 %v2030, 0.5
    %v2032 = vadd.f32 %v2031, 0.5
    %v2033 = vtanh.pop %v2023
    %v2034 = vmul.f32 %v2024, 0.5
    %v2035 = vtanh.pop %v2034
    %v2036 = vmul.f32 %v2035, 0.5
    %v2037 = vadd.f32 %v2036, 0.5
    %v2038 = vmul.f32 %v2032, %v1734
    %v2039 = vmul.f32 %v2028, %v2033
    %v2040 = vadd.f32 %v2038, %v2039
    %v2041 = vtanh.pop %v2040
    %v2042 = vmul.f32 %v2037, %v2041
    %v2043 = vpack.c.bf16 %v2042, %v2042
    %s2044 = scalar_lea.vmem [#allocation2], 16
    %2045 = vst [vmem:[%s2044] sm:$0xf] %v2043
    %s2046 = smul.u32 5, 4
    %s2047 = smul.addr %s2046, 8
    %s2048 = scalar_lea.vmem [#allocation3], %s2047
    %v2049 = vld [vmem:[%s2048] sm:$0xff]
    %v2050 = vld [vmem:[%s2048 + $0x8] sm:$0xff]
    %v2051 = vld [vmem:[%s2048 + $0x10] sm:$0xff]
    %v2052 = vld [vmem:[%s2048 + $0x18] sm:$0xff]
    %v2053 = vld [vmem:[#allocation9] sm:$0xff]
    %v2054 = vld [vmem:[#allocation9 + $0x8] sm:$0xff]
    %v2055 = vld [vmem:[#allocation9 + $0x10] sm:$0xff]
    %v2056 = vld [vmem:[#allocation9 + $0x18] sm:$0xff]
    %v2057 = vld [vmem:[#allocation9 + $0x20] sm:$0xff]
    %v2058 = vld [vmem:[#allocation9 + $0x28] sm:$0xff]
    %v2059 = vld [vmem:[#allocation9 + $0x30] sm:$0xff]
    %v2060 = vld [vmem:[#allocation9 + $0x38] sm:$0xff]
    %v2061 = vld [vmem:[#allocation9 + $0x40] sm:$0xff]
    %v2062 = vld [vmem:[#allocation9 + $0x48] sm:$0xff]
    %v2063 = vld [vmem:[#allocation9 + $0x50] sm:$0xff]
    %v2064 = vld [vmem:[#allocation9 + $0x58] sm:$0xff]
    %v2065 = vld [vmem:[#allocation9 + $0x60] sm:$0xff]
    %v2066 = vld [vmem:[#allocation9 + $0x68] sm:$0xff]
    %v2067 = vld [vmem:[#allocation9 + $0x70] sm:$0xff]
    %v2068 = vld [vmem:[#allocation9 + $0x78] sm:$0xff]
    %v2069 = vld [vmem:[#allocation9 + $0x80] sm:$0xff]
    %v2070 = vld [vmem:[#allocation9 + $0x88] sm:$0xff]
    %v2071 = vld [vmem:[#allocation9 + $0x90] sm:$0xff]
    %v2072 = vld [vmem:[#allocation9 + $0x98] sm:$0xff]
    %v2073 = vld [vmem:[#allocation9 + $0xa0] sm:$0xff]
    %v2074 = vld [vmem:[#allocation9 + $0xa8] sm:$0xff]
    %v2075 = vld [vmem:[#allocation9 + $0xb0] sm:$0xff]
    %v2076 = vld [vmem:[#allocation9 + $0xb8] sm:$0xff]
    %v2077 = vld [vmem:[#allocation9 + $0xc0] sm:$0xff]
    %v2078 = vld [vmem:[#allocation9 + $0xc8] sm:$0xff]
    %v2079 = vld [vmem:[#allocation9 + $0xd0] sm:$0xff]
    %v2080 = vld [vmem:[#allocation9 + $0xd8] sm:$0xff]
    %v2081 = vld [vmem:[#allocation9 + $0xe0] sm:$0xff]
    %v2082 = vld [vmem:[#allocation9 + $0xe8] sm:$0xff]
    %v2083 = vld [vmem:[#allocation9 + $0xf0] sm:$0xff]
    %v2084 = vld [vmem:[#allocation9 + $0xf8] sm:$0xff]
    %v2117 = vunpack.c.l.b16 %v2053
    %v2118 = vunpack.c.h.b16 %v2053
    %v2119 = vunpack.c.l.b16 %v2054
    %v2120 = vunpack.c.h.b16 %v2054
    %v2121 = vunpack.c.l.b16 %v2055
    %v2122 = vunpack.c.h.b16 %v2055
    %v2123 = vunpack.c.l.b16 %v2056
    %v2124 = vunpack.c.h.b16 %v2056
    %v2125 = vunpack.c.l.b16 %v2057
    %v2126 = vunpack.c.h.b16 %v2057
    %v2127 = vunpack.c.l.b16 %v2058
    %v2128 = vunpack.c.h.b16 %v2058
    %v2129 = vunpack.c.l.b16 %v2059
    %v2130 = vunpack.c.h.b16 %v2059
    %v2131 = vunpack.c.l.b16 %v2060
    %v2132 = vunpack.c.h.b16 %v2060
    %v2133 = vunpack.c.l.b16 %v2061
    %v2134 = vunpack.c.h.b16 %v2061
    %v2135 = vunpack.c.l.b16 %v2062
    %v2136 = vunpack.c.h.b16 %v2062
    %v2137 = vunpack.c.l.b16 %v2063
    %v2138 = vunpack.c.h.b16 %v2063
    %v2139 = vunpack.c.l.b16 %v2064
    %v2140 = vunpack.c.h.b16 %v2064
    %v2141 = vunpack.c.l.b16 %v2065
    %v2142 = vunpack.c.h.b16 %v2065
    %v2143 = vunpack.c.l.b16 %v2066
    %v2144 = vunpack.c.h.b16 %v2066
    %v2145 = vunpack.c.l.b16 %v2067
    %v2146 = vunpack.c.h.b16 %v2067
    %v2147 = vunpack.c.l.b16 %v2068
    %v2148 = vunpack.c.h.b16 %v2068
    %v2149 = vunpack.c.l.b16 %v2069
    %v2150 = vunpack.c.h.b16 %v2069
    %v2151 = vunpack.c.l.b16 %v2070
    %v2152 = vunpack.c.h.b16 %v2070
    %v2153 = vunpack.c.l.b16 %v2071
    %v2154 = vunpack.c.h.b16 %v2071
    %v2155 = vunpack.c.l.b16 %v2072
    %v2156 = vunpack.c.h.b16 %v2072
    %v2157 = vunpack.c.l.b16 %v2073
    %v2158 = vunpack.c.h.b16 %v2073
    %v2159 = vunpack.c.l.b16 %v2074
    %v2160 = vunpack.c.h.b16 %v2074
    %v2161 = vunpack.c.l.b16 %v2075
    %v2162 = vunpack.c.h.b16 %v2075
    %v2163 = vunpack.c.l.b16 %v2076
    %v2164 = vunpack.c.h.b16 %v2076
    %v2165 = vunpack.c.l.b16 %v2077
    %v2166 = vunpack.c.h.b16 %v2077
    %v2167 = vunpack.c.l.b16 %v2078
    %v2168 = vunpack.c.h.b16 %v2078
    %v2169 = vunpack.c.l.b16 %v2079
    %v2170 = vunpack.c.h.b16 %v2079
    %v2171 = vunpack.c.l.b16 %v2080
    %v2172 = vunpack.c.h.b16 %v2080
    %v2173 = vunpack.c.l.b16 %v2081
    %v2174 = vunpack.c.h.b16 %v2081
    %v2175 = vunpack.c.l.b16 %v2082
    %v2176 = vunpack.c.h.b16 %v2082
    %v2177 = vunpack.c.l.b16 %v2083
    %v2178 = vunpack.c.h.b16 %v2083
    %v2179 = vunpack.c.l.b16 %v2084
    %v2180 = vunpack.c.h.b16 %v2084
    %v2181 = vpack.c.b16 %v2121, %v2117
    %v2182 = vpack.c.b16 %v2122, %v2118
    %v2183 = vpack.c.b16 %v2123, %v2119
    %v2184 = vpack.c.b16 %v2124, %v2120
    %v2185 = vpack.c.b16 %v2129, %v2125
    %v2186 = vpack.c.b16 %v2130, %v2126
    %v2187 = vpack.c.b16 %v2131, %v2127
    %v2188 = vpack.c.b16 %v2132, %v2128
    %v2189 = vpack.c.b16 %v2137, %v2133
    %v2190 = vpack.c.b16 %v2138, %v2134
    %v2191 = vpack.c.b16 %v2139, %v2135
    %v2192 = vpack.c.b16 %v2140, %v2136
    %v2193 = vpack.c.b16 %v2145, %v2141
    %v2194 = vpack.c.b16 %v2146, %v2142
    %v2195 = vpack.c.b16 %v2147, %v2143
    %v2196 = vpack.c.b16 %v2148, %v2144
    %v2197 = vpack.c.b16 %v2153, %v2149
    %v2198 = vpack.c.b16 %v2154, %v2150
    %v2199 = vpack.c.b16 %v2155, %v2151
    %v2200 = vpack.c.b16 %v2156, %v2152
    %v2201 = vpack.c.b16 %v2161, %v2157
    %v2202 = vpack.c.b16 %v2162, %v2158
    %v2203 = vpack.c.b16 %v2163, %v2159
    %v2204 = vpack.c.b16 %v2164, %v2160
    %v2205 = vpack.c.b16 %v2169, %v2165
    %v2206 = vpack.c.b16 %v2170, %v2166
    %v2207 = vpack.c.b16 %v2171, %v2167
    %v2208 = vpack.c.b16 %v2172, %v2168
    %v2209 = vpack.c.b16 %v2177, %v2173
    %v2210 = vpack.c.b16 %v2178, %v2174
    %v2211 = vpack.c.b16 %v2179, %v2175
    %v2212 = vpack.c.b16 %v2180, %v2176
    %2245 = vmatprep.subr.bf16.mxu0 %v2210
    %2246 = vmatpush1.bf16.msra.mxu0 %v2209
    %2247 = vmatprep.subr.bf16.mxu0 %v2206
    %2248 = vmatpush1.bf16.msra.mxu0 %v2205
    %2249 = vmatprep.subr.bf16.mxu0 %v2202
    %2250 = vmatpush1.bf16.msra.mxu0 %v2201
    %2251 = vmatprep.subr.bf16.mxu0 %v2198
    %2252 = vmatpush1.bf16.msra.mxu0 %v2197
    %2253 = vmatprep.subr.bf16.mxu0 %v2194
    %2254 = vmatpush1.bf16.msra.mxu0 %v2193
    %2255 = vmatprep.subr.bf16.mxu0 %v2190
    %2256 = vmatpush1.bf16.msra.mxu0 %v2189
    %2257 = vmatprep.subr.bf16.mxu0 %v2186
    %2258 = vmatpush1.bf16.msra.mxu0 %v2185
    %2259 = vmatprep.subr.bf16.mxu0 %v2182
    %2260 = vmatpush1.bf16.msra.mxu0 %v2181
    %2261 = vmatprep.subr.bf16.mxu0 0
    %2262 = vmatpush2.bf16.msra.mxu0 0
    %2263 = vmatprep.subr.bf16.mxu0 0
    %2264 = vmatpush2.bf16.msra.mxu0 0
    %2265 = vmatprep.subr.bf16.mxu0 0
    %2266 = vmatpush2.bf16.msra.mxu0 0
    %2267 = vmatprep.subr.bf16.mxu0 0
    %2268 = vmatpush2.bf16.msra.mxu0 0
    %2269 = vmatprep.subr.bf16.mxu0 0
    %2270 = vmatpush2.bf16.msra.mxu0 0
    %2271 = vmatprep.subr.bf16.mxu0 0
    %2272 = vmatpush2.bf16.msra.mxu0 0
    %2273 = vmatprep.subr.bf16.mxu0 0
    %2274 = vmatpush2.bf16.msra.mxu0 0
    %2275 = vmatprep.subr.bf16.mxu0 0
    %2276 = vmatpush2.bf16.msra.mxu0 0
    %2277 = vmatprep.mubr.bf16.mxu0 0
    %2278 = vmatmul.mubr.bf16.gmra.mxu0 %v2043
    %v2279 = vpop.f32.mrf.mxu0
    %v2280 = vadd.f32 0.0, %v2279
    %v2281 = vpop.f32.mrf.mxu0
    %v2282 = vadd.f32 0.0, %v2281
    %v2283 = vpop.f32.mrf.mxu0
    %v2284 = vpop.f32.mrf.mxu0
    %2285 = vdwg.mxu0
    %2286 = vmatprep.subr.bf16.mxu0 %v2212
    %2287 = vmatpush1.bf16.msra.mxu0 %v2211
    %2288 = vmatprep.subr.bf16.mxu0 %v2208
    %2289 = vmatpush1.bf16.msra.mxu0 %v2207
    %2290 = vmatprep.subr.bf16.mxu0 %v2204
    %2291 = vmatpush1.bf16.msra.mxu0 %v2203
    %2292 = vmatprep.subr.bf16.mxu0 %v2200
    %2293 = vmatpush1.bf16.msra.mxu0 %v2199
    %2294 = vmatprep.subr.bf16.mxu0 %v2196
    %2295 = vmatpush1.bf16.msra.mxu0 %v2195
    %2296 = vmatprep.subr.bf16.mxu0 %v2192
    %2297 = vmatpush1.bf16.msra.mxu0 %v2191
    %2298 = vmatprep.subr.bf16.mxu0 %v2188
    %2299 = vmatpush1.bf16.msra.mxu0 %v2187
    %2300 = vmatprep.subr.bf16.mxu0 %v2184
    %2301 = vmatpush1.bf16.msra.mxu0 %v2183
    %2302 = vmatprep.subr.bf16.mxu0 0
    %2303 = vmatpush2.bf16.msra.mxu0 0
    %2304 = vmatprep.subr.bf16.mxu0 0
    %2305 = vmatpush2.bf16.msra.mxu0 0
    %2306 = vmatprep.subr.bf16.mxu0 0
    %2307 = vmatpush2.bf16.msra.mxu0 0
    %2308 = vmatprep.subr.bf16.mxu0 0
    %2309 = vmatpush2.bf16.msra.mxu0 0
    %2310 = vmatprep.subr.bf16.mxu0 0
    %2311 = vmatpush2.bf16.msra.mxu0 0
    %2312 = vmatprep.subr.bf16.mxu0 0
    %2313 = vmatpush2.bf16.msra.mxu0 0
    %2314 = vmatprep.subr.bf16.mxu0 0
    %2315 = vmatpush2.bf16.msra.mxu0 0
    %2316 = vmatprep.subr.bf16.mxu0 0
    %2317 = vmatpush2.bf16.msra.mxu0 0
    %2318 = vmatprep.mubr.bf16.mxu0 0
    %2319 = vmatmul.mubr.bf16.gmra.mxu0 %v2043
    %v2320 = vpop.f32.mrf.mxu0
    %v2321 = vadd.f32 0.0, %v2320
    %v2322 = vpop.f32.mrf.mxu0
    %v2323 = vadd.f32 0.0, %v2322
    %v2324 = vpop.f32.mrf.mxu0
    %v2325 = vpop.f32.mrf.mxu0
    %2326 = vdwg.mxu0
    %v2327 = vadd.f32 %v2049, %v2280
    %v2328 = vadd.f32 %v2050, %v2282
    %v2329 = vadd.f32 %v2051, %v2321
    %v2330 = vadd.f32 %v2052, %v2323
    %v2331 = vmul.f32 %v2327, 0.5
    %v2332 = vtanh.pop %v2331
    %v2333 = vmul.f32 %v2332, 0.5
    %v2334 = vadd.f32 %v2333, 0.5
    %v2335 = vmul.f32 %v2328, 0.5
    %v2336 = vtanh.pop %v2335
    %v2337 = vmul.f32 %v2336, 0.5
    %v2338 = vadd.f32 %v2337, 0.5
    %v2339 = vtanh.pop %v2329
    %v2340 = vmul.f32 %v2330, 0.5
    %v2341 = vtanh.pop %v2340
    %v2342 = vmul.f32 %v2341, 0.5
    %v2343 = vadd.f32 %v2342, 0.5
    %v2344 = vmul.f32 %v2338, %v2040
    %v2345 = vmul.f32 %v2334, %v2339
    %v2346 = vadd.f32 %v2344, %v2345
    %v2347 = vtanh.pop %v2346
    %v2348 = vmul.f32 %v2343, %v2347
    %v2349 = vpack.c.bf16 %v2348, %v2348
    %s2350 = scalar_lea.vmem [#allocation2], 20
    %2351 = vst [vmem:[%s2350] sm:$0xf] %v2349
    %s2352 = smul.u32 6, 4
    %s2353 = smul.addr %s2352, 8
    %s2354 = scalar_lea.vmem [#allocation3], %s2353
    %v2355 = vld [vmem:[%s2354] sm:$0xff]
    %v2356 = vld [vmem:[%s2354 + $0x8] sm:$0xff]
    %v2357 = vld [vmem:[%s2354 + $0x10] sm:$0xff]
    %v2358 = vld [vmem:[%s2354 + $0x18] sm:$0xff]
    %v2359 = vld [vmem:[#allocation9] sm:$0xff]
    %v2360 = vld [vmem:[#allocation9 + $0x8] sm:$0xff]
    %v2361 = vld [vmem:[#allocation9 + $0x10] sm:$0xff]
    %v2362 = vld [vmem:[#allocation9 + $0x18] sm:$0xff]
    %v2363 = vld [vmem:[#allocation9 + $0x20] sm:$0xff]
    %v2364 = vld [vmem:[#allocation9 + $0x28] sm:$0xff]
    %v2365 = vld [vmem:[#allocation9 + $0x30] sm:$0xff]
    %v2366 = vld [vmem:[#allocation9 + $0x38] sm:$0xff]
    %v2367 = vld [vmem:[#allocation9 + $0x40] sm:$0xff]
    %v2368 = vld [vmem:[#allocation9 + $0x48] sm:$0xff]
    %v2369 = vld [vmem:[#allocation9 + $0x50] sm:$0xff]
    %v2370 = vld [vmem:[#allocation9 + $0x58] sm:$0xff]
    %v2371 = vld [vmem:[#allocation9 + $0x60] sm:$0xff]
    %v2372 = vld [vmem:[#allocation9 + $0x68] sm:$0xff]
    %v2373 = vld [vmem:[#allocation9 + $0x70] sm:$0xff]
    %v2374 = vld [vmem:[#allocation9 + $0x78] sm:$0xff]
    %v2375 = vld [vmem:[#allocation9 + $0x80] sm:$0xff]
    %v2376 = vld [vmem:[#allocation9 + $0x88] sm:$0xff]
    %v2377 = vld [vmem:[#allocation9 + $0x90] sm:$0xff]
    %v2378 = vld [vmem:[#allocation9 + $0x98] sm:$0xff]
    %v2379 = vld [vmem:[#allocation9 + $0xa0] sm:$0xff]
    %v2380 = vld [vmem:[#allocation9 + $0xa8] sm:$0xff]
    %v2381 = vld [vmem:[#allocation9 + $0xb0] sm:$0xff]
    %v2382 = vld [vmem:[#allocation9 + $0xb8] sm:$0xff]
    %v2383 = vld [vmem:[#allocation9 + $0xc0] sm:$0xff]
    %v2384 = vld [vmem:[#allocation9 + $0xc8] sm:$0xff]
    %v2385 = vld [vmem:[#allocation9 + $0xd0] sm:$0xff]
    %v2386 = vld [vmem:[#allocation9 + $0xd8] sm:$0xff]
    %v2387 = vld [vmem:[#allocation9 + $0xe0] sm:$0xff]
    %v2388 = vld [vmem:[#allocation9 + $0xe8] sm:$0xff]
    %v2389 = vld [vmem:[#allocation9 + $0xf0] sm:$0xff]
    %v2390 = vld [vmem:[#allocation9 + $0xf8] sm:$0xff]
    %v2423 = vunpack.c.l.b16 %v2359
    %v2424 = vunpack.c.h.b16 %v2359
    %v2425 = vunpack.c.l.b16 %v2360
    %v2426 = vunpack.c.h.b16 %v2360
    %v2427 = vunpack.c.l.b16 %v2361
    %v2428 = vunpack.c.h.b16 %v2361
    %v2429 = vunpack.c.l.b16 %v2362
    %v2430 = vunpack.c.h.b16 %v2362
    %v2431 = vunpack.c.l.b16 %v2363
    %v2432 = vunpack.c.h.b16 %v2363
    %v2433 = vunpack.c.l.b16 %v2364
    %v2434 = vunpack.c.h.b16 %v2364
    %v2435 = vunpack.c.l.b16 %v2365
    %v2436 = vunpack.c.h.b16 %v2365
    %v2437 = vunpack.c.l.b16 %v2366
    %v2438 = vunpack.c.h.b16 %v2366
    %v2439 = vunpack.c.l.b16 %v2367
    %v2440 = vunpack.c.h.b16 %v2367
    %v2441 = vunpack.c.l.b16 %v2368
    %v2442 = vunpack.c.h.b16 %v2368
    %v2443 = vunpack.c.l.b16 %v2369
    %v2444 = vunpack.c.h.b16 %v2369
    %v2445 = vunpack.c.l.b16 %v2370
    %v2446 = vunpack.c.h.b16 %v2370
    %v2447 = vunpack.c.l.b16 %v2371
    %v2448 = vunpack.c.h.b16 %v2371
    %v2449 = vunpack.c.l.b16 %v2372
    %v2450 = vunpack.c.h.b16 %v2372
    %v2451 = vunpack.c.l.b16 %v2373
    %v2452 = vunpack.c.h.b16 %v2373
    %v2453 = vunpack.c.l.b16 %v2374
    %v2454 = vunpack.c.h.b16 %v2374
    %v2455 = vunpack.c.l.b16 %v2375
    %v2456 = vunpack.c.h.b16 %v2375
    %v2457 = vunpack.c.l.b16 %v2376
    %v2458 = vunpack.c.h.b16 %v2376
    %v2459 = vunpack.c.l.b16 %v2377
    %v2460 = vunpack.c.h.b16 %v2377
    %v2461 = vunpack.c.l.b16 %v2378
    %v2462 = vunpack.c.h.b16 %v2378
    %v2463 = vunpack.c.l.b16 %v2379
    %v2464 = vunpack.c.h.b16 %v2379
    %v2465 = vunpack.c.l.b16 %v2380
    %v2466 = vunpack.c.h.b16 %v2380
    %v2467 = vunpack.c.l.b16 %v2381
    %v2468 = vunpack.c.h.b16 %v2381
    %v2469 = vunpack.c.l.b16 %v2382
    %v2470 = vunpack.c.h.b16 %v2382
    %v2471 = vunpack.c.l.b16 %v2383
    %v2472 = vunpack.c.h.b16 %v2383
    %v2473 = vunpack.c.l.b16 %v2384
    %v2474 = vunpack.c.h.b16 %v2384
    %v2475 = vunpack.c.l.b16 %v2385
    %v2476 = vunpack.c.h.b16 %v2385
    %v2477 = vunpack.c.l.b16 %v2386
    %v2478 = vunpack.c.h.b16 %v2386
    %v2479 = vunpack.c.l.b16 %v2387
    %v2480 = vunpack.c.h.b16 %v2387
    %v2481 = vunpack.c.l.b16 %v2388
    %v2482 = vunpack.c.h.b16 %v2388
    %v2483 = vunpack.c.l.b16 %v2389
    %v2484 = vunpack.c.h.b16 %v2389
    %v2485 = vunpack.c.l.b16 %v2390
    %v2486 = vunpack.c.h.b16 %v2390
    %v2487 = vpack.c.b16 %v2427, %v2423
    %v2488 = vpack.c.b16 %v2428, %v2424
    %v2489 = vpack.c.b16 %v2429, %v2425
    %v2490 = vpack.c.b16 %v2430, %v2426
    %v2491 = vpack.c.b16 %v2435, %v2431
    %v2492 = vpack.c.b16 %v2436, %v2432
    %v2493 = vpack.c.b16 %v2437, %v2433
    %v2494 = vpack.c.b16 %v2438, %v2434
    %v2495 = vpack.c.b16 %v2443, %v2439
    %v2496 = vpack.c.b16 %v2444, %v2440
    %v2497 = vpack.c.b16 %v2445, %v2441
    %v2498 = vpack.c.b16 %v2446, %v2442
    %v2499 = vpack.c.b16 %v2451, %v2447
    %v2500 = vpack.c.b16 %v2452, %v2448
    %v2501 = vpack.c.b16 %v2453, %v2449
    %v2502 = vpack.c.b16 %v2454, %v2450
    %v2503 = vpack.c.b16 %v2459, %v2455
    %v2504 = vpack.c.b16 %v2460, %v2456
    %v2505 = vpack.c.b16 %v2461, %v2457
    %v2506 = vpack.c.b16 %v2462, %v2458
    %v2507 = vpack.c.b16 %v2467, %v2463
    %v2508 = vpack.c.b16 %v2468, %v2464
    %v2509 = vpack.c.b16 %v2469, %v2465
    %v2510 = vpack.c.b16 %v2470, %v2466
    %v2511 = vpack.c.b16 %v2475, %v2471
    %v2512 = vpack.c.b16 %v2476, %v2472
    %v2513 = vpack.c.b16 %v2477, %v2473
    %v2514 = vpack.c.b16 %v2478, %v2474
    %v2515 = vpack.c.b16 %v2483, %v2479
    %v2516 = vpack.c.b16 %v2484, %v2480
    %v2517 = vpack.c.b16 %v2485, %v2481
    %v2518 = vpack.c.b16 %v2486, %v2482
    %2551 = vmatprep.subr.bf16.mxu0 %v2516
    %2552 = vmatpush1.bf16.msra.mxu0 %v2515
    %2553 = vmatprep.subr.bf16.mxu0 %v2512
    %2554 = vmatpush1.bf16.msra.mxu0 %v2511
    %2555 = vmatprep.subr.bf16.mxu0 %v2508
    %2556 = vmatpush1.bf16.msra.mxu0 %v2507
    %2557 = vmatprep.subr.bf16.mxu0 %v2504
    %2558 = vmatpush1.bf16.msra.mxu0 %v2503
    %2559 = vmatprep.subr.bf16.mxu0 %v2500
    %2560 = vmatpush1.bf16.msra.mxu0 %v2499
    %2561 = vmatprep.subr.bf16.mxu0 %v2496
    %2562 = vmatpush1.bf16.msra.mxu0 %v2495
    %2563 = vmatprep.subr.bf16.mxu0 %v2492
    %2564 = vmatpush1.bf16.msra.mxu0 %v2491
    %2565 = vmatprep.subr.bf16.mxu0 %v2488
    %2566 = vmatpush1.bf16.msra.mxu0 %v2487
    %2567 = vmatprep.subr.bf16.mxu0 0
    %2568 = vmatpush2.bf16.msra.mxu0 0
    %2569 = vmatprep.subr.bf16.mxu0 0
    %2570 = vmatpush2.bf16.msra.mxu0 0
    %2571 = vmatprep.subr.bf16.mxu0 0
    %2572 = vmatpush2.bf16.msra.mxu0 0
    %2573 = vmatprep.subr.bf16.mxu0 0
    %2574 = vmatpush2.bf16.msra.mxu0 0
    %2575 = vmatprep.subr.bf16.mxu0 0
    %2576 = vmatpush2.bf16.msra.mxu0 0
    %2577 = vmatprep.subr.bf16.mxu0 0
    %2578 = vmatpush2.bf16.msra.mxu0 0
    %2579 = vmatprep.subr.bf16.mxu0 0
    %2580 = vmatpush2.bf16.msra.mxu0 0
    %2581 = vmatprep.subr.bf16.mxu0 0
    %2582 = vmatpush2.bf16.msra.mxu0 0
    %2583 = vmatprep.mubr.bf16.mxu0 0
    %2584 = vmatmul.mubr.bf16.gmra.mxu0 %v2349
    %v2585 = vpop.f32.mrf.mxu0
    %v2586 = vadd.f32 0.0, %v2585
    %v2587 = vpop.f32.mrf.mxu0
    %v2588 = vadd.f32 0.0, %v2587
    %v2589 = vpop.f32.mrf.mxu0
    %v2590 = vpop.f32.mrf.mxu0
    %2591 = vdwg.mxu0
    %2592 = vmatprep.subr.bf16.mxu0 %v2518
    %2593 = vmatpush1.bf16.msra.mxu0 %v2517
    %2594 = vmatprep.subr.bf16.mxu0 %v2514
    %2595 = vmatpush1.bf16.msra.mxu0 %v2513
    %2596 = vmatprep.subr.bf16.mxu0 %v2510
    %2597 = vmatpush1.bf16.msra.mxu0 %v2509
    %2598 = vmatprep.subr.bf16.mxu0 %v2506
    %2599 = vmatpush1.bf16.msra.mxu0 %v2505
    %2600 = vmatprep.subr.bf16.mxu0 %v2502
    %2601 = vmatpush1.bf16.msra.mxu0 %v2501
    %2602 = vmatprep.subr.bf16.mxu0 %v2498
    %2603 = vmatpush1.bf16.msra.mxu0 %v2497
    %2604 = vmatprep.subr.bf16.mxu0 %v2494
    %2605 = vmatpush1.bf16.msra.mxu0 %v2493
    %2606 = vmatprep.subr.bf16.mxu0 %v2490
    %2607 = vmatpush1.bf16.msra.mxu0 %v2489
    %2608 = vmatprep.subr.bf16.mxu0 0
    %2609 = vmatpush2.bf16.msra.mxu0 0
    %2610 = vmatprep.subr.bf16.mxu0 0
    %2611 = vmatpush2.bf16.msra.mxu0 0
    %2612 = vmatprep.subr.bf16.mxu0 0
    %2613 = vmatpush2.bf16.msra.mxu0 0
    %2614 = vmatprep.subr.bf16.mxu0 0
    %2615 = vmatpush2.bf16.msra.mxu0 0
    %2616 = vmatprep.subr.bf16.mxu0 0
    %2617 = vmatpush2.bf16.msra.mxu0 0
    %2618 = vmatprep.subr.bf16.mxu0 0
    %2619 = vmatpush2.bf16.msra.mxu0 0
    %2620 = vmatprep.subr.bf16.mxu0 0
    %2621 = vmatpush2.bf16.msra.mxu0 0
    %2622 = vmatprep.subr.bf16.mxu0 0
    %2623 = vmatpush2.bf16.msra.mxu0 0
    %2624 = vmatprep.mubr.bf16.mxu0 0
    %2625 = vmatmul.mubr.bf16.gmra.mxu0 %v2349
    %v2626 = vpop.f32.mrf.mxu0
    %v2627 = vadd.f32 0.0, %v2626
    %v2628 = vpop.f32.mrf.mxu0
    %v2629 = vadd.f32 0.0, %v2628
    %v2630 = vpop.f32.mrf.mxu0
    %v2631 = vpop.f32.mrf.mxu0
    %2632 = vdwg.mxu0
    %v2633 = vadd.f32 %v2355, %v2586
    %v2634 = vadd.f32 %v2356, %v2588
    %v2635 = vadd.f32 %v2357, %v2627
    %v2636 = vadd.f32 %v2358, %v2629
    %v2637 = vmul.f32 %v2633, 0.5
    %v2638 = vtanh.pop %v2637
    %v2639 = vmul.f32 %v2638, 0.5
    %v2640 = vadd.f32 %v2639, 0.5
    %v2641 = vmul.f32 %v2634, 0.5
    %v2642 = vtanh.pop %v2641
    %v2643 = vmul.f32 %v2642, 0.5
    %v2644 = vadd.f32 %v2643, 0.5
    %v2645 = vtanh.pop %v2635
    %v2646 = vmul.f32 %v2636, 0.5
    %v2647 = vtanh.pop %v2646
    %v2648 = vmul.f32 %v2647, 0.5
    %v2649 = vadd.f32 %v2648, 0.5
    %v2650 = vmul.f32 %v2644, %v2346
    %v2651 = vmul.f32 %v2640, %v2645
    %v2652 = vadd.f32 %v2650, %v2651
    %v2653 = vtanh.pop %v2652
    %v2654 = vmul.f32 %v2649, %v2653
    %v2655 = vpack.c.bf16 %v2654, %v2654
    %s2656 = scalar_lea.vmem [#allocation2], 24
    %2657 = vst [vmem:[%s2656] sm:$0xf] %v2655
    %s2658 = smul.u32 7, 4
    %s2659 = smul.addr %s2658, 8
    %s2660 = scalar_lea.vmem [#allocation3], %s2659
    %v2661 = vld [vmem:[%s2660] sm:$0xff]
    %v2662 = vld [vmem:[%s2660 + $0x8] sm:$0xff]
    %v2663 = vld [vmem:[%s2660 + $0x10] sm:$0xff]
    %v2664 = vld [vmem:[%s2660 + $0x18] sm:$0xff]
    %v2665 = vld [vmem:[#allocation9] sm:$0xff]
    %v2666 = vld [vmem:[#allocation9 + $0x8] sm:$0xff]
    %v2667 = vld [vmem:[#allocation9 + $0x10] sm:$0xff]
    %v2668 = vld [vmem:[#allocation9 + $0x18] sm:$0xff]
    %v2669 = vld [vmem:[#allocation9 + $0x20] sm:$0xff]
    %v2670 = vld [vmem:[#allocation9 + $0x28] sm:$0xff]
    %v2671 = vld [vmem:[#allocation9 + $0x30] sm:$0xff]
    %v2672 = vld [vmem:[#allocation9 + $0x38] sm:$0xff]
    %v2673 = vld [vmem:[#allocation9 + $0x40] sm:$0xff]
    %v2674 = vld [vmem:[#allocation9 + $0x48] sm:$0xff]
    %v2675 = vld [vmem:[#allocation9 + $0x50] sm:$0xff]
    %v2676 = vld [vmem:[#allocation9 + $0x58] sm:$0xff]
    %v2677 = vld [vmem:[#allocation9 + $0x60] sm:$0xff]
    %v2678 = vld [vmem:[#allocation9 + $0x68] sm:$0xff]
    %v2679 = vld [vmem:[#allocation9 + $0x70] sm:$0xff]
    %v2680 = vld [vmem:[#allocation9 + $0x78] sm:$0xff]
    %v2681 = vld [vmem:[#allocation9 + $0x80] sm:$0xff]
    %v2682 = vld [vmem:[#allocation9 + $0x88] sm:$0xff]
    %v2683 = vld [vmem:[#allocation9 + $0x90] sm:$0xff]
    %v2684 = vld [vmem:[#allocation9 + $0x98] sm:$0xff]
    %v2685 = vld [vmem:[#allocation9 + $0xa0] sm:$0xff]
    %v2686 = vld [vmem:[#allocation9 + $0xa8] sm:$0xff]
    %v2687 = vld [vmem:[#allocation9 + $0xb0] sm:$0xff]
    %v2688 = vld [vmem:[#allocation9 + $0xb8] sm:$0xff]
    %v2689 = vld [vmem:[#allocation9 + $0xc0] sm:$0xff]
    %v2690 = vld [vmem:[#allocation9 + $0xc8] sm:$0xff]
    %v2691 = vld [vmem:[#allocation9 + $0xd0] sm:$0xff]
    %v2692 = vld [vmem:[#allocation9 + $0xd8] sm:$0xff]
    %v2693 = vld [vmem:[#allocation9 + $0xe0] sm:$0xff]
    %v2694 = vld [vmem:[#allocation9 + $0xe8] sm:$0xff]
    %v2695 = vld [vmem:[#allocation9 + $0xf0] sm:$0xff]
    %v2696 = vld [vmem:[#allocation9 + $0xf8] sm:$0xff]
    %v2729 = vunpack.c.l.b16 %v2665
    %v2730 = vunpack.c.h.b16 %v2665
    %v2731 = vunpack.c.l.b16 %v2666
    %v2732 = vunpack.c.h.b16 %v2666
    %v2733 = vunpack.c.l.b16 %v2667
    %v2734 = vunpack.c.h.b16 %v2667
    %v2735 = vunpack.c.l.b16 %v2668
    %v2736 = vunpack.c.h.b16 %v2668
    %v2737 = vunpack.c.l.b16 %v2669
    %v2738 = vunpack.c.h.b16 %v2669
    %v2739 = vunpack.c.l.b16 %v2670
    %v2740 = vunpack.c.h.b16 %v2670
    %v2741 = vunpack.c.l.b16 %v2671
    %v2742 = vunpack.c.h.b16 %v2671
    %v2743 = vunpack.c.l.b16 %v2672
    %v2744 = vunpack.c.h.b16 %v2672
    %v2745 = vunpack.c.l.b16 %v2673
    %v2746 = vunpack.c.h.b16 %v2673
    %v2747 = vunpack.c.l.b16 %v2674
    %v2748 = vunpack.c.h.b16 %v2674
    %v2749 = vunpack.c.l.b16 %v2675
    %v2750 = vunpack.c.h.b16 %v2675
    %v2751 = vunpack.c.l.b16 %v2676
    %v2752 = vunpack.c.h.b16 %v2676
    %v2753 = vunpack.c.l.b16 %v2677
    %v2754 = vunpack.c.h.b16 %v2677
    %v2755 = vunpack.c.l.b16 %v2678
    %v2756 = vunpack.c.h.b16 %v2678
    %v2757 = vunpack.c.l.b16 %v2679
    %v2758 = vunpack.c.h.b16 %v2679
    %v2759 = vunpack.c.l.b16 %v2680
    %v2760 = vunpack.c.h.b16 %v2680
    %v2761 = vunpack.c.l.b16 %v2681
    %v2762 = vunpack.c.h.b16 %v2681
    %v2763 = vunpack.c.l.b16 %v2682
    %v2764 = vunpack.c.h.b16 %v2682
    %v2765 = vunpack.c.l.b16 %v2683
    %v2766 = vunpack.c.h.b16 %v2683
    %v2767 = vunpack.c.l.b16 %v2684
    %v2768 = vunpack.c.h.b16 %v2684
    %v2769 = vunpack.c.l.b16 %v2685
    %v2770 = vunpack.c.h.b16 %v2685
    %v2771 = vunpack.c.l.b16 %v2686
    %v2772 = vunpack.c.h.b16 %v2686
    %v2773 = vunpack.c.l.b16 %v2687
    %v2774 = vunpack.c.h.b16 %v2687
    %v2775 = vunpack.c.l.b16 %v2688
    %v2776 = vunpack.c.h.b16 %v2688
    %v2777 = vunpack.c.l.b16 %v2689
    %v2778 = vunpack.c.h.b16 %v2689
    %v2779 = vunpack.c.l.b16 %v2690
    %v2780 = vunpack.c.h.b16 %v2690
    %v2781 = vunpack.c.l.b16 %v2691
    %v2782 = vunpack.c.h.b16 %v2691
    %v2783 = vunpack.c.l.b16 %v2692
    %v2784 = vunpack.c.h.b16 %v2692
    %v2785 = vunpack.c.l.b16 %v2693
    %v2786 = vunpack.c.h.b16 %v2693
    %v2787 = vunpack.c.l.b16 %v2694
    %v2788 = vunpack.c.h.b16 %v2694
    %v2789 = vunpack.c.l.b16 %v2695
    %v2790 = vunpack.c.h.b16 %v2695
    %v2791 = vunpack.c.l.b16 %v2696
    %v2792 = vunpack.c.h.b16 %v2696
    %v2793 = vpack.c.b16 %v2733, %v2729
    %v2794 = vpack.c.b16 %v2734, %v2730
    %v2795 = vpack.c.b16 %v2735, %v2731
    %v2796 = vpack.c.b16 %v2736, %v2732
    %v2797 = vpack.c.b16 %v2741, %v2737
    %v2798 = vpack.c.b16 %v2742, %v2738
    %v2799 = vpack.c.b16 %v2743, %v2739
    %v2800 = vpack.c.b16 %v2744, %v2740
    %v2801 = vpack.c.b16 %v2749, %v2745
    %v2802 = vpack.c.b16 %v2750, %v2746
    %v2803 = vpack.c.b16 %v2751, %v2747
    %v2804 = vpack.c.b16 %v2752, %v2748
    %v2805 = vpack.c.b16 %v2757, %v2753
    %v2806 = vpack.c.b16 %v2758, %v2754
    %v2807 = vpack.c.b16 %v2759, %v2755
    %v2808 = vpack.c.b16 %v2760, %v2756
    %v2809 = vpack.c.b16 %v2765, %v2761
    %v2810 = vpack.c.b16 %v2766, %v2762
    %v2811 = vpack.c.b16 %v2767, %v2763
    %v2812 = vpack.c.b16 %v2768, %v2764
    %v2813 = vpack.c.b16 %v2773, %v2769
    %v2814 = vpack.c.b16 %v2774, %v2770
    %v2815 = vpack.c.b16 %v2775, %v2771
    %v2816 = vpack.c.b16 %v2776, %v2772
    %v2817 = vpack.c.b16 %v2781, %v2777
    %v2818 = vpack.c.b16 %v2782, %v2778
    %v2819 = vpack.c.b16 %v2783, %v2779
    %v2820 = vpack.c.b16 %v2784, %v2780
    %v2821 = vpack.c.b16 %v2789, %v2785
    %v2822 = vpack.c.b16 %v2790, %v2786
    %v2823 = vpack.c.b16 %v2791, %v2787
    %v2824 = vpack.c.b16 %v2792, %v2788
    %2857 = vmatprep.subr.bf16.mxu0 %v2822
    %2858 = vmatpush1.bf16.msra.mxu0 %v2821
    %2859 = vmatprep.subr.bf16.mxu0 %v2818
    %2860 = vmatpush1.bf16.msra.mxu0 %v2817
    %2861 = vmatprep.subr.bf16.mxu0 %v2814
    %2862 = vmatpush1.bf16.msra.mxu0 %v2813
    %2863 = vmatprep.subr.bf16.mxu0 %v2810
    %2864 = vmatpush1.bf16.msra.mxu0 %v2809
    %2865 = vmatprep.subr.bf16.mxu0 %v2806
    %2866 = vmatpush1.bf16.msra.mxu0 %v2805
    %2867 = vmatprep.subr.bf16.mxu0 %v2802
    %2868 = vmatpush1.bf16.msra.mxu0 %v2801
    %2869 = vmatprep.subr.bf16.mxu0 %v2798
    %2870 = vmatpush1.bf16.msra.mxu0 %v2797
    %2871 = vmatprep.subr.bf16.mxu0 %v2794
    %2872 = vmatpush1.bf16.msra.mxu0 %v2793
    %2873 = vmatprep.subr.bf16.mxu0 0
    %2874 = vmatpush2.bf16.msra.mxu0 0
    %2875 = vmatprep.subr.bf16.mxu0 0
    %2876 = vmatpush2.bf16.msra.mxu0 0
    %2877 = vmatprep.subr.bf16.mxu0 0
    %2878 = vmatpush2.bf16.msra.mxu0 0
    %2879 = vmatprep.subr.bf16.mxu0 0
    %2880 = vmatpush2.bf16.msra.mxu0 0
    %2881 = vmatprep.subr.bf16.mxu0 0
    %2882 = vmatpush2.bf16.msra.mxu0 0
    %2883 = vmatprep.subr.bf16.mxu0 0
    %2884 = vmatpush2.bf16.msra.mxu0 0
    %2885 = vmatprep.subr.bf16.mxu0 0
    %2886 = vmatpush2.bf16.msra.mxu0 0
    %2887 = vmatprep.subr.bf16.mxu0 0
    %2888 = vmatpush2.bf16.msra.mxu0 0
    %2889 = vmatprep.mubr.bf16.mxu0 0
    %2890 = vmatmul.mubr.bf16.gmra.mxu0 %v2655
    %v2891 = vpop.f32.mrf.mxu0
    %v2892 = vadd.f32 0.0, %v2891
    %v2893 = vpop.f32.mrf.mxu0
    %v2894 = vadd.f32 0.0, %v2893
    %v2895 = vpop.f32.mrf.mxu0
    %v2896 = vpop.f32.mrf.mxu0
    %2897 = vdwg.mxu0
    %2898 = vmatprep.subr.bf16.mxu0 %v2824
    %2899 = vmatpush1.bf16.msra.mxu0 %v2823
    %2900 = vmatprep.subr.bf16.mxu0 %v2820
    %2901 = vmatpush1.bf16.msra.mxu0 %v2819
    %2902 = vmatprep.subr.bf16.mxu0 %v2816
    %2903 = vmatpush1.bf16.msra.mxu0 %v2815
    %2904 = vmatprep.subr.bf16.mxu0 %v2812
    %2905 = vmatpush1.bf16.msra.mxu0 %v2811
    %2906 = vmatprep.subr.bf16.mxu0 %v2808
    %2907 = vmatpush1.bf16.msra.mxu0 %v2807
    %2908 = vmatprep.subr.bf16.mxu0 %v2804
    %2909 = vmatpush1.bf16.msra.mxu0 %v2803
    %2910 = vmatprep.subr.bf16.mxu0 %v2800
    %2911 = vmatpush1.bf16.msra.mxu0 %v2799
    %2912 = vmatprep.subr.bf16.mxu0 %v2796
    %2913 = vmatpush1.bf16.msra.mxu0 %v2795
    %2914 = vmatprep.subr.bf16.mxu0 0
    %2915 = vmatpush2.bf16.msra.mxu0 0
    %2916 = vmatprep.subr.bf16.mxu0 0
    %2917 = vmatpush2.bf16.msra.mxu0 0
    %2918 = vmatprep.subr.bf16.mxu0 0
    %2919 = vmatpush2.bf16.msra.mxu0 0
    %2920 = vmatprep.subr.bf16.mxu0 0
    %2921 = vmatpush2.bf16.msra.mxu0 0
    %2922 = vmatprep.subr.bf16.mxu0 0
    %2923 = vmatpush2.bf16.msra.mxu0 0
    %2924 = vmatprep.subr.bf16.mxu0 0
    %2925 = vmatpush2.bf16.msra.mxu0 0
    %2926 = vmatprep.subr.bf16.mxu0 0
    %2927 = vmatpush2.bf16.msra.mxu0 0
    %2928 = vmatprep.subr.bf16.mxu0 0
    %2929 = vmatpush2.bf16.msra.mxu0 0
    %2930 = vmatprep.mubr.bf16.mxu0 0
    %2931 = vmatmul.mubr.bf16.gmra.mxu0 %v2655
    %v2932 = vpop.f32.mrf.mxu0
    %v2933 = vadd.f32 0.0, %v2932
    %v2934 = vpop.f32.mrf.mxu0
    %v2935 = vadd.f32 0.0, %v2934
    %v2936 = vpop.f32.mrf.mxu0
    %v2937 = vpop.f32.mrf.mxu0
    %2938 = vdwg.mxu0
    %v2939 = vadd.f32 %v2661, %v2892
    %v2940 = vadd.f32 %v2662, %v2894
    %v2941 = vadd.f32 %v2663, %v2933
    %v2942 = vadd.f32 %v2664, %v2935
    %v2943 = vmul.f32 %v2939, 0.5
    %v2944 = vtanh.pop %v2943
    %v2945 = vmul.f32 %v2944, 0.5
    %v2946 = vadd.f32 %v2945, 0.5
    %v2947 = vmul.f32 %v2940, 0.5
    %v2948 = vtanh.pop %v2947
    %v2949 = vmul.f32 %v2948, 0.5
    %v2950 = vadd.f32 %v2949, 0.5
    %v2951 = vtanh.pop %v2941
    %v2952 = vmul.f32 %v2942, 0.5
    %v2953 = vtanh.pop %v2952
    %v2954 = vmul.f32 %v2953, 0.5
    %v2955 = vadd.f32 %v2954, 0.5
    %v2956 = vmul.f32 %v2950, %v2652
    %v2957 = vmul.f32 %v2946, %v2951
    %v2958 = vadd.f32 %v2956, %v2957
    %v2959 = vtanh.pop %v2958
    %v2960 = vmul.f32 %v2955, %v2959
    %v2961 = vpack.c.bf16 %v2960, %v2960
    %s2962 = scalar_lea.vmem [#allocation2], 28
    %2963 = vst [vmem:[%s2962] sm:$0xf] %v2961
    %v2964 = vld [vmem:[#allocation2] sm:$0xf]
    %v2965 = vld [vmem:[#allocation2 + $0x4] sm:$0xf]
    %v2966 = vld [vmem:[#allocation2 + $0x8] sm:$0xf]
    %v2967 = vld [vmem:[#allocation2 + $0xc] sm:$0xf]
    %v2968 = vld [vmem:[#allocation2 + $0x10] sm:$0xf]
    %v2969 = vld [vmem:[#allocation2 + $0x14] sm:$0xf]
    %v2970 = vld [vmem:[#allocation2 + $0x18] sm:$0xf]
    %v2971 = vld [vmem:[#allocation2 + $0x1c] sm:$0xf]
    %s2972 = scalar_lea.vmem [#allocation7], 256
    %v2973 = vld [vmem:[%s2972] sm:$0xff]
    %v2974 = vld [vmem:[%s2972 + $0x8] sm:$0xff]
    %v2975 = vld [vmem:[%s2972 + $0x10] sm:$0xff]
    %v2976 = vld [vmem:[%s2972 + $0x18] sm:$0xff]
    %v2977 = vld [vmem:[%s2972 + $0x20] sm:$0xff]
    %v2978 = vld [vmem:[%s2972 + $0x28] sm:$0xff]
    %v2979 = vld [vmem:[%s2972 + $0x30] sm:$0xff]
    %v2980 = vld [vmem:[%s2972 + $0x38] sm:$0xff]
    %v2981 = vld [vmem:[%s2972 + $0x40] sm:$0xff]
    %v2982 = vld [vmem:[%s2972 + $0x48] sm:$0xff]
    %v2983 = vld [vmem:[%s2972 + $0x50] sm:$0xff]
    %v2984 = vld [vmem:[%s2972 + $0x58] sm:$0xff]
    %v2985 = vld [vmem:[%s2972 + $0x60] sm:$0xff]
    %v2986 = vld [vmem:[%s2972 + $0x68] sm:$0xff]
    %v2987 = vld [vmem:[%s2972 + $0x70] sm:$0xff]
    %v2988 = vld [vmem:[%s2972 + $0x78] sm:$0xff]
    %v2989 = vld [vmem:[%s2972 + $0x80] sm:$0xff]
    %v2990 = vld [vmem:[%s2972 + $0x88] sm:$0xff]
    %v2991 = vld [vmem:[%s2972 + $0x90] sm:$0xff]
    %v2992 = vld [vmem:[%s2972 + $0x98] sm:$0xff]
    %v2993 = vld [vmem:[%s2972 + $0xa0] sm:$0xff]
    %v2994 = vld [vmem:[%s2972 + $0xa8] sm:$0xff]
    %v2995 = vld [vmem:[%s2972 + $0xb0] sm:$0xff]
    %v2996 = vld [vmem:[%s2972 + $0xb8] sm:$0xff]
    %v2997 = vld [vmem:[%s2972 + $0xc0] sm:$0xff]
    %v2998 = vld [vmem:[%s2972 + $0xc8] sm:$0xff]
    %v2999 = vld [vmem:[%s2972 + $0xd0] sm:$0xff]
    %v3000 = vld [vmem:[%s2972 + $0xd8] sm:$0xff]
    %v3001 = vld [vmem:[%s2972 + $0xe0] sm:$0xff]
    %v3002 = vld [vmem:[%s2972 + $0xe8] sm:$0xff]
    %v3003 = vld [vmem:[%s2972 + $0xf0] sm:$0xff]
    %v3004 = vld [vmem:[%s2972 + $0xf8] sm:$0xff]
    %s3005 = scalar_lea.vmem [#allocation10], 4
    %v3006 = vld [vmem:[%s3005] sm:$0xf]
    %v3008 = vlaneseq
    %v3009 = vshrl.u32 %v3008, 7
    %v3010 = vsub.s32 0, %v3009
    %v3011 = vrot.slane %v3006, %v3010
    %v3012 = vlaneseq
    %v3013 = vshrl.u32 %v3012, 7
    %v3014 = vsub.s32 1, %v3013
    %v3015 = vrot.slane %v3006, %v3014
    %v3016 = vlaneseq
    %v3017 = vshrl.u32 %v3016, 7
    %v3018 = vsub.s32 2, %v3017
    %v3019 = vrot.slane %v3006, %v3018
    %v3020 = vlaneseq
    %v3021 = vshrl.u32 %v3020, 7
    %v3022 = vsub.s32 3, %v3021
    %v3023 = vrot.slane %v3006, %v3022
    %v3036 = vunpack.c.l.b16 %v2964
    %v3037 = vunpack.c.l.b16 %v2965
    %v3038 = vunpack.c.l.b16 %v2966
    %v3039 = vunpack.c.l.b16 %v2967
    %v3040 = vunpack.c.l.b16 %v2968
    %v3041 = vunpack.c.l.b16 %v2969
    %v3042 = vunpack.c.l.b16 %v2970
    %v3043 = vunpack.c.l.b16 %v2971
    %v3044 = vpack.c.b16 %v3037, %v3036
    %v3045 = vpack.c.b16 %v3039, %v3038
    %v3046 = vpack.c.b16 %v3041, %v3040
    %v3047 = vpack.c.b16 %v3043, %v3042
    %v3084 = vunpack.c.l.b16 %v2973
    %v3085 = vunpack.c.h.b16 %v2973
    %v3086 = vunpack.c.l.b16 %v2974
    %v3087 = vunpack.c.h.b16 %v2974
    %v3088 = vunpack.c.l.b16 %v2975
    %v3089 = vunpack.c.h.b16 %v2975
    %v3090 = vunpack.c.l.b16 %v2976
    %v3091 = vunpack.c.h.b16 %v2976
    %v3092 = vunpack.c.l.b16 %v2977
    %v3093 = vunpack.c.h.b16 %v2977
    %v3094 = vunpack.c.l.b16 %v2978
    %v3095 = vunpack.c.h.b16 %v2978
    %v3096 = vunpack.c.l.b16 %v2979
    %v3097 = vunpack.c.h.b16 %v2979
    %v3098 = vunpack.c.l.b16 %v2980
    %v3099 = vunpack.c.h.b16 %v2980
    %v3100 = vunpack.c.l.b16 %v2981
    %v3101 = vunpack.c.h.b16 %v2981
    %v3102 = vunpack.c.l.b16 %v2982
    %v3103 = vunpack.c.h.b16 %v2982
    %v3104 = vunpack.c.l.b16 %v2983
    %v3105 = vunpack.c.h.b16 %v2983
    %v3106 = vunpack.c.l.b16 %v2984
    %v3107 = vunpack.c.h.b16 %v2984
    %v3108 = vunpack.c.l.b16 %v2985
    %v3109 = vunpack.c.h.b16 %v2985
    %v3110 = vunpack.c.l.b16 %v2986
    %v3111 = vunpack.c.h.b16 %v2986
    %v3112 = vunpack.c.l.b16 %v2987
    %v3113 = vunpack.c.h.b16 %v2987
    %v3114 = vunpack.c.l.b16 %v2988
    %v3115 = vunpack.c.h.b16 %v2988
    %v3116 = vunpack.c.l.b16 %v2989
    %v3117 = vunpack.c.h.b16 %v2989
    %v3118 = vunpack.c.l.b16 %v2990
    %v3119 = vunpack.c.h.b16 %v2990
    %v3120 = vunpack.c.l.b16 %v2991
    %v3121 = vunpack.c.h.b16 %v2991
    %v3122 = vunpack.c.l.b16 %v2992
    %v3123 = vunpack.c.h.b16 %v2992
    %v3124 = vunpack.c.l.b16 %v2993
    %v3125 = vunpack.c.h.b16 %v2993
    %v3126 = vunpack.c.l.b16 %v2994
    %v3127 = vunpack.c.h.b16 %v2994
    %v3128 = vunpack.c.l.b16 %v2995
    %v3129 = vunpack.c.h.b16 %v2995
    %v3130 = vunpack.c.l.b16 %v2996
    %v3131 = vunpack.c.h.b16 %v2996
    %v3132 = vunpack.c.l.b16 %v2997
    %v3133 = vunpack.c.h.b16 %v2997
    %v3134 = vunpack.c.l.b16 %v2998
    %v3135 = vunpack.c.h.b16 %v2998
    %v3136 = vunpack.c.l.b16 %v2999
    %v3137 = vunpack.c.h.b16 %v2999
    %v3138 = vunpack.c.l.b16 %v3000
    %v3139 = vunpack.c.h.b16 %v3000
    %v3140 = vunpack.c.l.b16 %v3001
    %v3141 = vunpack.c.h.b16 %v3001
    %v3142 = vunpack.c.l.b16 %v3002
    %v3143 = vunpack.c.h.b16 %v3002
    %v3144 = vunpack.c.l.b16 %v3003
    %v3145 = vunpack.c.h.b16 %v3003
    %v3146 = vunpack.c.l.b16 %v3004
    %v3147 = vunpack.c.h.b16 %v3004
    %v3148 = vpack.c.b16 %v3088, %v3084
    %v3149 = vpack.c.b16 %v3089, %v3085
    %v3150 = vpack.c.b16 %v3090, %v3086
    %v3151 = vpack.c.b16 %v3091, %v3087
    %v3152 = vpack.c.b16 %v3096, %v3092
    %v3153 = vpack.c.b16 %v3097, %v3093
    %v3154 = vpack.c.b16 %v3098, %v3094
    %v3155 = vpack.c.b16 %v3099, %v3095
    %v3156 = vpack.c.b16 %v3104, %v3100
    %v3157 = vpack.c.b16 %v3105, %v3101
    %v3158 = vpack.c.b16 %v3106, %v3102
    %v3159 = vpack.c.b16 %v3107, %v3103
    %v3160 = vpack.c.b16 %v3112, %v3108
    %v3161 = vpack.c.b16 %v3113, %v3109
    %v3162 = vpack.c.b16 %v3114, %v3110
    %v3163 = vpack.c.b16 %v3115, %v3111
    %v3164 = vpack.c.b16 %v3120, %v3116
    %v3165 = vpack.c.b16 %v3121, %v3117
    %v3166 = vpack.c.b16 %v3122, %v3118
    %v3167 = vpack.c.b16 %v3123, %v3119
    %v3168 = vpack.c.b16 %v3128, %v3124
    %v3169 = vpack.c.b16 %v3129, %v3125
    %v3170 = vpack.c.b16 %v3130, %v3126
    %v3171 = vpack.c.b16 %v3131, %v3127
    %v3172 = vpack.c.b16 %v3136, %v3132
    %v3173 = vpack.c.b16 %v3137, %v3133
    %v3174 = vpack.c.b16 %v3138, %v3134
    %v3175 = vpack.c.b16 %v3139, %v3135
    %v3176 = vpack.c.b16 %v3144, %v3140
    %v3177 = vpack.c.b16 %v3145, %v3141
    %v3178 = vpack.c.b16 %v3146, %v3142
    %v3179 = vpack.c.b16 %v3147, %v3143
    %3212 = vmatprep.subr.bf16.mxu0 %v3177
    %3213 = vmatpush1.bf16.msra.mxu0 %v3176
    %3214 = vmatprep.subr.bf16.mxu0 %v3173
    %3215 = vmatpush1.bf16.msra.mxu0 %v3172
    %3216 = vmatprep.subr.bf16.mxu0 %v3169
    %3217 = vmatpush1.bf16.msra.mxu0 %v3168
    %3218 = vmatprep.subr.bf16.mxu0 %v3165
    %3219 = vmatpush1.bf16.msra.mxu0 %v3164
    %3220 = vmatprep.subr.bf16.mxu0 %v3161
    %3221 = vmatpush1.bf16.msra.mxu0 %v3160
    %3222 = vmatprep.subr.bf16.mxu0 %v3157
    %3223 = vmatpush1.bf16.msra.mxu0 %v3156
    %3224 = vmatprep.subr.bf16.mxu0 %v3153
    %3225 = vmatpush1.bf16.msra.mxu0 %v3152
    %3226 = vmatprep.subr.bf16.mxu0 %v3149
    %3227 = vmatpush1.bf16.msra.mxu0 %v3148
    %3228 = vmatprep.subr.bf16.mxu0 0
    %3229 = vmatpush2.bf16.msra.mxu0 0
    %3230 = vmatprep.subr.bf16.mxu0 0
    %3231 = vmatpush2.bf16.msra.mxu0 0
    %3232 = vmatprep.subr.bf16.mxu0 0
    %3233 = vmatpush2.bf16.msra.mxu0 0
    %3234 = vmatprep.subr.bf16.mxu0 0
    %3235 = vmatpush2.bf16.msra.mxu0 0
    %3236 = vmatprep.subr.bf16.mxu0 0
    %3237 = vmatpush2.bf16.msra.mxu0 0
    %3238 = vmatprep.subr.bf16.mxu0 0
    %3239 = vmatpush2.bf16.msra.mxu0 0
    %3240 = vmatprep.subr.bf16.mxu0 0
    %3241 = vmatpush2.bf16.msra.mxu0 0
    %3242 = vmatprep.subr.bf16.mxu0 0
    %3243 = vmatpush2.bf16.msra.mxu0 0
    %3244 = vmatprep.mubr.bf16.mxu0 0
    %3245 = vmatmul.mubr.bf16.gmra.mxu0 %v3044
    %v3246 = vpop.f32.mrf.mxu0
    %v3247 = vadd.f32 %v3011, %v3246
    %v3248 = vpop.f32.mrf.mxu0
    %v3249 = vadd.f32 %v3015, %v3248
    %v3250 = vpop.f32.mrf.mxu0
    %v3251 = vadd.f32 %v3011, %v3250
    %v3252 = vpop.f32.mrf.mxu0
    %v3253 = vadd.f32 %v3015, %v3252
    %3254 = vmatprep.mubr.bf16.mxu0 0
    %3255 = vmatmul.mubr.bf16.gmra.mxu0 %v3045
    %v3256 = vpop.f32.mrf.mxu0
    %v3257 = vadd.f32 %v3011, %v3256
    %v3258 = vpop.f32.mrf.mxu0
    %v3259 = vadd.f32 %v3015, %v3258
    %v3260 = vpop.f32.mrf.mxu0
    %v3261 = vadd.f32 %v3011, %v3260
    %v3262 = vpop.f32.mrf.mxu0
    %v3263 = vadd.f32 %v3015, %v3262
    %3264 = vmatprep.mubr.bf16.mxu0 0
    %3265 = vmatmul.mubr.bf16.gmra.mxu0 %v3046
    %v3266 = vpop.f32.mrf.mxu0
    %v3267 = vadd.f32 %v3011, %v3266
    %v3268 = vpop.f32.mrf.mxu0
    %v3269 = vadd.f32 %v3015, %v3268
    %v3270 = vpop.f32.mrf.mxu0
    %v3271 = vadd.f32 %v3011, %v3270
    %v3272 = vpop.f32.mrf.mxu0
    %v3273 = vadd.f32 %v3015, %v3272
    %3274 = vmatprep.mubr.bf16.mxu0 0
    %3275 = vmatmul.mubr.bf16.gmra.mxu0 %v3047
    %v3276 = vpop.f32.mrf.mxu0
    %v3277 = vadd.f32 %v3011, %v3276
    %v3278 = vpop.f32.mrf.mxu0
    %v3279 = vadd.f32 %v3015, %v3278
    %v3280 = vpop.f32.mrf.mxu0
    %v3281 = vadd.f32 %v3011, %v3280
    %v3282 = vpop.f32.mrf.mxu0
    %v3283 = vadd.f32 %v3015, %v3282
    %3284 = vdwg.mxu0
    %3285 = vmatprep.subr.bf16.mxu0 %v3179
    %3286 = vmatpush1.bf16.msra.mxu0 %v3178
    %3287 = vmatprep.subr.bf16.mxu0 %v3175
    %3288 = vmatpush1.bf16.msra.mxu0 %v3174
    %3289 = vmatprep.subr.bf16.mxu0 %v3171
    %3290 = vmatpush1.bf16.msra.mxu0 %v3170
    %3291 = vmatprep.subr.bf16.mxu0 %v3167
    %3292 = vmatpush1.bf16.msra.mxu0 %v3166
    %3293 = vmatprep.subr.bf16.mxu0 %v3163
    %3294 = vmatpush1.bf16.msra.mxu0 %v3162
    %3295 = vmatprep.subr.bf16.mxu0 %v3159
    %3296 = vmatpush1.bf16.msra.mxu0 %v3158
    %3297 = vmatprep.subr.bf16.mxu0 %v3155
    %3298 = vmatpush1.bf16.msra.mxu0 %v3154
    %3299 = vmatprep.subr.bf16.mxu0 %v3151
    %3300 = vmatpush1.bf16.msra.mxu0 %v3150
    %3301 = vmatprep.subr.bf16.mxu0 0
    %3302 = vmatpush2.bf16.msra.mxu0 0
    %3303 = vmatprep.subr.bf16.mxu0 0
    %3304 = vmatpush2.bf16.msra.mxu0 0
    %3305 = vmatprep.subr.bf16.mxu0 0
    %3306 = vmatpush2.bf16.msra.mxu0 0
    %3307 = vmatprep.subr.bf16.mxu0 0
    %3308 = vmatpush2.bf16.msra.mxu0 0
    %3309 = vmatprep.subr.bf16.mxu0 0
    %3310 = vmatpush2.bf16.msra.mxu0 0
    %3311 = vmatprep.subr.bf16.mxu0 0
    %3312 = vmatpush2.bf16.msra.mxu0 0
    %3313 = vmatprep.subr.bf16.mxu0 0
    %3314 = vmatpush2.bf16.msra.mxu0 0
    %3315 = vmatprep.subr.bf16.mxu0 0
    %3316 = vmatpush2.bf16.msra.mxu0 0
    %3317 = vmatprep.mubr.bf16.mxu0 0
    %3318 = vmatmul.mubr.bf16.gmra.mxu0 %v3044
    %v3319 = vpop.f32.mrf.mxu0
    %v3320 = vadd.f32 %v3019, %v3319
    %v3321 = vpop.f32.mrf.mxu0
    %v3322 = vadd.f32 %v3023, %v3321
    %v3323 = vpop.f32.mrf.mxu0
    %v3324 = vadd.f32 %v3019, %v3323
    %v3325 = vpop.f32.mrf.mxu0
    %v3326 = vadd.f32 %v3023, %v3325
    %3327 = vmatprep.mubr.bf16.mxu0 0
    %3328 = vmatmul.mubr.bf16.gmra.mxu0 %v3045
    %v3329 = vpop.f32.mrf.mxu0
    %v3330 = vadd.f32 %v3019, %v3329
    %v3331 = vpop.f32.mrf.mxu0
    %v3332 = vadd.f32 %v3023, %v3331
    %v3333 = vpop.f32.mrf.mxu0
    %v3334 = vadd.f32 %v3019, %v3333
    %v3335 = vpop.f32.mrf.mxu0
    %v3336 = vadd.f32 %v3023, %v3335
    %3337 = vmatprep.mubr.bf16.mxu0 0
    %3338 = vmatmul.mubr.bf16.gmra.mxu0 %v3046
    %v3339 = vpop.f32.mrf.mxu0
    %v3340 = vadd.f32 %v3019, %v3339
    %v3341 = vpop.f32.mrf.mxu0
    %v3342 = vadd.f32 %v3023, %v3341
    %v3343 = vpop.f32.mrf.mxu0
    %v3344 = vadd.f32 %v3019, %v3343
    %v3345 = vpop.f32.mrf.mxu0
    %v3346 = vadd.f32 %v3023, %v3345
    %3347 = vmatprep.mubr.bf16.mxu0 0
    %3348 = vmatmul.mubr.bf16.gmra.mxu0 %v3047
    %v3349 = vpop.f32.mrf.mxu0
    %v3350 = vadd.f32 %v3019, %v3349
    %v3351 = vpop.f32.mrf.mxu0
    %v3352 = vadd.f32 %v3023, %v3351
    %v3353 = vpop.f32.mrf.mxu0
    %v3354 = vadd.f32 %v3019, %v3353
    %v3355 = vpop.f32.mrf.mxu0
    %v3356 = vadd.f32 %v3023, %v3355
    %3357 = vdwg.mxu0
    %3358 = vst [vmem:[#allocation3] sm:$0xff] %v3247
    %3359 = vst [vmem:[#allocation3 + $0x8] sm:$0xff] %v3249
    %3360 = vst [vmem:[#allocation3 + $0x10] sm:$0xff] %v3320
    %3361 = vst [vmem:[#allocation3 + $0x18] sm:$0xff] %v3322
    %3362 = vst [vmem:[#allocation3 + $0x20] sm:$0xff] %v3251
    %3363 = vst [vmem:[#allocation3 + $0x28] sm:$0xff] %v3253
    %3364 = vst [vmem:[#allocation3 + $0x30] sm:$0xff] %v3324
    %3365 = vst [vmem:[#allocation3 + $0x38] sm:$0xff] %v3326
    %3366 = vst [vmem:[#allocation3 + $0x40] sm:$0xff] %v3257
    %3367 = vst [vmem:[#allocation3 + $0x48] sm:$0xff] %v3259
    %3368 = vst [vmem:[#allocation3 + $0x50] sm:$0xff] %v3330
    %3369 = vst [vmem:[#allocation3 + $0x58] sm:$0xff] %v3332
    %3370 = vst [vmem:[#allocation3 + $0x60] sm:$0xff] %v3261
    %3371 = vst [vmem:[#allocation3 + $0x68] sm:$0xff] %v3263
    %3372 = vst [vmem:[#allocation3 + $0x70] sm:$0xff] %v3334
    %3373 = vst [vmem:[#allocation3 + $0x78] sm:$0xff] %v3336
    %3374 = vst [vmem:[#allocation3 + $0x80] sm:$0xff] %v3267
    %3375 = vst [vmem:[#allocation3 + $0x88] sm:$0xff] %v3269
    %3376 = vst [vmem:[#allocation3 + $0x90] sm:$0xff] %v3340
    %3377 = vst [vmem:[#allocation3 + $0x98] sm:$0xff] %v3342
    %3378 = vst [vmem:[#allocation3 + $0xa0] sm:$0xff] %v3271
    %3379 = vst [vmem:[#allocation3 + $0xa8] sm:$0xff] %v3273
    %3380 = vst [vmem:[#allocation3 + $0xb0] sm:$0xff] %v3344
    %3381 = vst [vmem:[#allocation3 + $0xb8] sm:$0xff] %v3346
    %3382 = vst [vmem:[#allocation3 + $0xc0] sm:$0xff] %v3277
    %3383 = vst [vmem:[#allocation3 + $0xc8] sm:$0xff] %v3279
    %3384 = vst [vmem:[#allocation3 + $0xd0] sm:$0xff] %v3350
    %3385 = vst [vmem:[#allocation3 + $0xd8] sm:$0xff] %v3352
    %3386 = vst [vmem:[#allocation3 + $0xe0] sm:$0xff] %v3281
    %3387 = vst [vmem:[#allocation3 + $0xe8] sm:$0xff] %v3283
    %3388 = vst [vmem:[#allocation3 + $0xf0] sm:$0xff] %v3354
    %3389 = vst [vmem:[#allocation3 + $0xf8] sm:$0xff] %v3356
    %v3390 = vld [vmem:[%s519] sm:$0xff]
    %v3391 = vld [vmem:[%s519 + $0x8] sm:$0xff]
    %v3392 = vld [vmem:[%s519 + $0x10] sm:$0xff]
    %v3393 = vld [vmem:[%s519 + $0x18] sm:$0xff]
    %s3394 = scalar_lea.vmem [#allocation9], 256
    %v3395 = vld [vmem:[%s3394] sm:$0xff]
    %v3396 = vld [vmem:[%s3394 + $0x8] sm:$0xff]
    %v3397 = vld [vmem:[%s3394 + $0x10] sm:$0xff]
    %v3398 = vld [vmem:[%s3394 + $0x18] sm:$0xff]
    %v3399 = vld [vmem:[%s3394 + $0x20] sm:$0xff]
    %v3400 = vld [vmem:[%s3394 + $0x28] sm:$0xff]
    %v3401 = vld [vmem:[%s3394 + $0x30] sm:$0xff]
    %v3402 = vld [vmem:[%s3394 + $0x38] sm:$0xff]
    %v3403 = vld [vmem:[%s3394 + $0x40] sm:$0xff]
    %v3404 = vld [vmem:[%s3394 + $0x48] sm:$0xff]
    %v3405 = vld [vmem:[%s3394 + $0x50] sm:$0xff]
    %v3406 = vld [vmem:[%s3394 + $0x58] sm:$0xff]
    %v3407 = vld [vmem:[%s3394 + $0x60] sm:$0xff]
    %v3408 = vld [vmem:[%s3394 + $0x68] sm:$0xff]
    %v3409 = vld [vmem:[%s3394 + $0x70] sm:$0xff]
    %v3410 = vld [vmem:[%s3394 + $0x78] sm:$0xff]
    %v3411 = vld [vmem:[%s3394 + $0x80] sm:$0xff]
    %v3412 = vld [vmem:[%s3394 + $0x88] sm:$0xff]
    %v3413 = vld [vmem:[%s3394 + $0x90] sm:$0xff]
    %v3414 = vld [vmem:[%s3394 + $0x98] sm:$0xff]
    %v3415 = vld [vmem:[%s3394 + $0xa0] sm:$0xff]
    %v3416 = vld [vmem:[%s3394 + $0xa8] sm:$0xff]
    %v3417 = vld [vmem:[%s3394 + $0xb0] sm:$0xff]
    %v3418 = vld [vmem:[%s3394 + $0xb8] sm:$0xff]
    %v3419 = vld [vmem:[%s3394 + $0xc0] sm:$0xff]
    %v3420 = vld [vmem:[%s3394 + $0xc8] sm:$0xff]
    %v3421 = vld [vmem:[%s3394 + $0xd0] sm:$0xff]
    %v3422 = vld [vmem:[%s3394 + $0xd8] sm:$0xff]
    %v3423 = vld [vmem:[%s3394 + $0xe0] sm:$0xff]
    %v3424 = vld [vmem:[%s3394 + $0xe8] sm:$0xff]
    %v3425 = vld [vmem:[%s3394 + $0xf0] sm:$0xff]
    %v3426 = vld [vmem:[%s3394 + $0xf8] sm:$0xff]
    %v3459 = vunpack.c.l.b16 %v3395
    %v3460 = vunpack.c.h.b16 %v3395
    %v3461 = vunpack.c.l.b16 %v3396
    %v3462 = vunpack.c.h.b16 %v3396
    %v3463 = vunpack.c.l.b16 %v3397
    %v3464 = vunpack.c.h.b16 %v3397
    %v3465 = vunpack.c.l.b16 %v3398
    %v3466 = vunpack.c.h.b16 %v3398
    %v3467 = vunpack.c.l.b16 %v3399
    %v3468 = vunpack.c.h.b16 %v3399
    %v3469 = vunpack.c.l.b16 %v3400
    %v3470 = vunpack.c.h.b16 %v3400
    %v3471 = vunpack.c.l.b16 %v3401
    %v3472 = vunpack.c.h.b16 %v3401
    %v3473 = vunpack.c.l.b16 %v3402
    %v3474 = vunpack.c.h.b16 %v3402
    %v3475 = vunpack.c.l.b16 %v3403
    %v3476 = vunpack.c.h.b16 %v3403
    %v3477 = vunpack.c.l.b16 %v3404
    %v3478 = vunpack.c.h.b16 %v3404
    %v3479 = vunpack.c.l.b16 %v3405
    %v3480 = vunpack.c.h.b16 %v3405
    %v3481 = vunpack.c.l.b16 %v3406
    %v3482 = vunpack.c.h.b16 %v3406
    %v3483 = vunpack.c.l.b16 %v3407
    %v3484 = vunpack.c.h.b16 %v3407
    %v3485 = vunpack.c.l.b16 %v3408
    %v3486 = vunpack.c.h.b16 %v3408
    %v3487 = vunpack.c.l.b16 %v3409
    %v3488 = vunpack.c.h.b16 %v3409
    %v3489 = vunpack.c.l.b16 %v3410
    %v3490 = vunpack.c.h.b16 %v3410
    %v3491 = vunpack.c.l.b16 %v3411
    %v3492 = vunpack.c.h.b16 %v3411
    %v3493 = vunpack.c.l.b16 %v3412
    %v3494 = vunpack.c.h.b16 %v3412
    %v3495 = vunpack.c.l.b16 %v3413
    %v3496 = vunpack.c.h.b16 %v3413
    %v3497 = vunpack.c.l.b16 %v3414
    %v3498 = vunpack.c.h.b16 %v3414
    %v3499 = vunpack.c.l.b16 %v3415
    %v3500 = vunpack.c.h.b16 %v3415
    %v3501 = vunpack.c.l.b16 %v3416
    %v3502 = vunpack.c.h.b16 %v3416
    %v3503 = vunpack.c.l.b16 %v3417
    %v3504 = vunpack.c.h.b16 %v3417
    %v3505 = vunpack.c.l.b16 %v3418
    %v3506 = vunpack.c.h.b16 %v3418
    %v3507 = vunpack.c.l.b16 %v3419
    %v3508 = vunpack.c.h.b16 %v3419
    %v3509 = vunpack.c.l.b16 %v3420
    %v3510 = vunpack.c.h.b16 %v3420
    %v3511 = vunpack.c.l.b16 %v3421
    %v3512 = vunpack.c.h.b16 %v3421
    %v3513 = vunpack.c.l.b16 %v3422
    %v3514 = vunpack.c.h.b16 %v3422
    %v3515 = vunpack.c.l.b16 %v3423
    %v3516 = vunpack.c.h.b16 %v3423
    %v3517 = vunpack.c.l.b16 %v3424
    %v3518 = vunpack.c.h.b16 %v3424
    %v3519 = vunpack.c.l.b16 %v3425
    %v3520 = vunpack.c.h.b16 %v3425
    %v3521 = vunpack.c.l.b16 %v3426
    %v3522 = vunpack.c.h.b16 %v3426
    %v3523 = vpack.c.b16 %v3463, %v3459
    %v3524 = vpack.c.b16 %v3464, %v3460
    %v3525 = vpack.c.b16 %v3465, %v3461
    %v3526 = vpack.c.b16 %v3466, %v3462
    %v3527 = vpack.c.b16 %v3471, %v3467
    %v3528 = vpack.c.b16 %v3472, %v3468
    %v3529 = vpack.c.b16 %v3473, %v3469
    %v3530 = vpack.c.b16 %v3474, %v3470
    %v3531 = vpack.c.b16 %v3479, %v3475
    %v3532 = vpack.c.b16 %v3480, %v3476
    %v3533 = vpack.c.b16 %v3481, %v3477
    %v3534 = vpack.c.b16 %v3482, %v3478
    %v3535 = vpack.c.b16 %v3487, %v3483
    %v3536 = vpack.c.b16 %v3488, %v3484
    %v3537 = vpack.c.b16 %v3489, %v3485
    %v3538 = vpack.c.b16 %v3490, %v3486
    %v3539 = vpack.c.b16 %v3495, %v3491
    %v3540 = vpack.c.b16 %v3496, %v3492
    %v3541 = vpack.c.b16 %v3497, %v3493
    %v3542 = vpack.c.b16 %v3498, %v3494
    %v3543 = vpack.c.b16 %v3503, %v3499
    %v3544 = vpack.c.b16 %v3504, %v3500
    %v3545 = vpack.c.b16 %v3505, %v3501
    %v3546 = vpack.c.b16 %v3506, %v3502
    %v3547 = vpack.c.b16 %v3511, %v3507
    %v3548 = vpack.c.b16 %v3512, %v3508
    %v3549 = vpack.c.b16 %v3513, %v3509
    %v3550 = vpack.c.b16 %v3514, %v3510
    %v3551 = vpack.c.b16 %v3519, %v3515
    %v3552 = vpack.c.b16 %v3520, %v3516
    %v3553 = vpack.c.b16 %v3521, %v3517
    %v3554 = vpack.c.b16 %v3522, %v3518
    %3587 = vmatprep.subr.bf16.mxu0 %v3552
    %3588 = vmatpush1.bf16.msra.mxu0 %v3551
    %3589 = vmatprep.subr.bf16.mxu0 %v3548
    %3590 = vmatpush1.bf16.msra.mxu0 %v3547
    %3591 = vmatprep.subr.bf16.mxu0 %v3544
    %3592 = vmatpush1.bf16.msra.mxu0 %v3543
    %3593 = vmatprep.subr.bf16.mxu0 %v3540
    %3594 = vmatpush1.bf16.msra.mxu0 %v3539
    %3595 = vmatprep.subr.bf16.mxu0 %v3536
    %3596 = vmatpush1.bf16.msra.mxu0 %v3535
    %3597 = vmatprep.subr.bf16.mxu0 %v3532
    %3598 = vmatpush1.bf16.msra.mxu0 %v3531
    %3599 = vmatprep.subr.bf16.mxu0 %v3528
    %3600 = vmatpush1.bf16.msra.mxu0 %v3527
    %3601 = vmatprep.subr.bf16.mxu0 %v3524
    %3602 = vmatpush1.bf16.msra.mxu0 %v3523
    %3603 = vmatprep.subr.bf16.mxu0 0
    %3604 = vmatpush2.bf16.msra.mxu0 0
    %3605 = vmatprep.subr.bf16.mxu0 0
    %3606 = vmatpush2.bf16.msra.mxu0 0
    %3607 = vmatprep.subr.bf16.mxu0 0
    %3608 = vmatpush2.bf16.msra.mxu0 0
    %3609 = vmatprep.subr.bf16.mxu0 0
    %3610 = vmatpush2.bf16.msra.mxu0 0
    %3611 = vmatprep.subr.bf16.mxu0 0
    %3612 = vmatpush2.bf16.msra.mxu0 0
    %3613 = vmatprep.subr.bf16.mxu0 0
    %3614 = vmatpush2.bf16.msra.mxu0 0
    %3615 = vmatprep.subr.bf16.mxu0 0
    %3616 = vmatpush2.bf16.msra.mxu0 0
    %3617 = vmatprep.subr.bf16.mxu0 0
    %3618 = vmatpush2.bf16.msra.mxu0 0
    %3619 = vmatprep.mubr.bf16.mxu0 0
    %3620 = vmatmul.mubr.bf16.gmra.mxu0 0
    %v3621 = vpop.f32.mrf.mxu0
    %v3622 = vadd.f32 0.0, %v3621
    %v3623 = vpop.f32.mrf.mxu0
    %v3624 = vadd.f32 0.0, %v3623
    %v3625 = vpop.f32.mrf.mxu0
    %v3626 = vpop.f32.mrf.mxu0
    %3627 = vdwg.mxu0
    %3628 = vmatprep.subr.bf16.mxu0 %v3554
    %3629 = vmatpush1.bf16.msra.mxu0 %v3553
    %3630 = vmatprep.subr.bf16.mxu0 %v3550
    %3631 = vmatpush1.bf16.msra.mxu0 %v3549
    %3632 = vmatprep.subr.bf16.mxu0 %v3546
    %3633 = vmatpush1.bf16.msra.mxu0 %v3545
    %3634 = vmatprep.subr.bf16.mxu0 %v3542
    %3635 = vmatpush1.bf16.msra.mxu0 %v3541
    %3636 = vmatprep.subr.bf16.mxu0 %v3538
    %3637 = vmatpush1.bf16.msra.mxu0 %v3537
    %3638 = vmatprep.subr.bf16.mxu0 %v3534
    %3639 = vmatpush1.bf16.msra.mxu0 %v3533
    %3640 = vmatprep.subr.bf16.mxu0 %v3530
    %3641 = vmatpush1.bf16.msra.mxu0 %v3529
    %3642 = vmatprep.subr.bf16.mxu0 %v3526
    %3643 = vmatpush1.bf16.msra.mxu0 %v3525
    %3644 = vmatprep.subr.bf16.mxu0 0
    %3645 = vmatpush2.bf16.msra.mxu0 0
    %3646 = vmatprep.subr.bf16.mxu0 0
    %3647 = vmatpush2.bf16.msra.mxu0 0
    %3648 = vmatprep.subr.bf16.mxu0 0
    %3649 = vmatpush2.bf16.msra.mxu0 0
    %3650 = vmatprep.subr.bf16.mxu0 0
    %3651 = vmatpush2.bf16.msra.mxu0 0
    %3652 = vmatprep.subr.bf16.mxu0 0
    %3653 = vmatpush2.bf16.msra.mxu0 0
    %3654 = vmatprep.subr.bf16.mxu0 0
    %3655 = vmatpush2.bf16.msra.mxu0 0
    %3656 = vmatprep.subr.bf16.mxu0 0
    %3657 = vmatpush2.bf16.msra.mxu0 0
    %3658 = vmatprep.subr.bf16.mxu0 0
    %3659 = vmatpush2.bf16.msra.mxu0 0
    %3660 = vmatprep.mubr.bf16.mxu0 0
    %3661 = vmatmul.mubr.bf16.gmra.mxu0 0
    %v3662 = vpop.f32.mrf.mxu0
    %v3663 = vadd.f32 0.0, %v3662
    %v3664 = vpop.f32.mrf.mxu0
    %v3665 = vadd.f32 0.0, %v3664
    %v3666 = vpop.f32.mrf.mxu0
    %v3667 = vpop.f32.mrf.mxu0
    %3668 = vdwg.mxu0
    %v3669 = vadd.f32 %v3390, %v3622
    %v3670 = vadd.f32 %v3391, %v3624
    %v3671 = vadd.f32 %v3392, %v3663
    %v3672 = vadd.f32 %v3393, %v3665
    %v3673 = vmul.f32 %v3669, 0.5
    %v3674 = vtanh.pop %v3673
    %v3675 = vmul.f32 %v3674, 0.5
    %v3676 = vadd.f32 %v3675, 0.5
    %v3677 = vmul.f32 %v3670, 0.5
    %v3678 = vtanh.pop %v3677
    %v3679 = vmul.f32 %v3678, 0.5
    %v3680 = vadd.f32 %v3679, 0.5
    %v3681 = vtanh.pop %v3671
    %v3682 = vmul.f32 %v3672, 0.5
    %v3683 = vtanh.pop %v3682
    %v3684 = vmul.f32 %v3683, 0.5
    %v3685 = vadd.f32 %v3684, 0.5
    %v3686 = vmul.f32 %v3680, 0.0
    %v3687 = vmul.f32 %v3676, %v3681
    %v3688 = vadd.f32 %v3686, %v3687
    %v3689 = vtanh.pop %v3688
    %v3690 = vmul.f32 %v3685, %v3689
    %v3691 = vld [vmem:[%s824] sm:$0xff]
    %v3692 = vld [vmem:[%s824 + $0x8] sm:$0xff]
    %v3693 = vld [vmem:[%s824 + $0x10] sm:$0xff]
    %v3694 = vld [vmem:[%s824 + $0x18] sm:$0xff]
    %v3695 = vpack.c.bf16 %v3690, %v3690
    %3696 = vmatprep.subr.bf16.mxu0 %v3552
    %3697 = vmatpush1.bf16.msra.mxu0 %v3551
    %3698 = vmatprep.subr.bf16.mxu0 %v3548
    %3699 = vmatpush1.bf16.msra.mxu0 %v3547
    %3700 = vmatprep.subr.bf16.mxu0 %v3544
    %3701 = vmatpush1.bf16.msra.mxu0 %v3543
    %3702 = vmatprep.subr.bf16.mxu0 %v3540
    %3703 = vmatpush1.bf16.msra.mxu0 %v3539
    %3704 = vmatprep.subr.bf16.mxu0 %v3536
    %3705 = vmatpush1.bf16.msra.mxu0 %v3535
    %3706 = vmatprep.subr.bf16.mxu0 %v3532
    %3707 = vmatpush1.bf16.msra.mxu0 %v3531
    %3708 = vmatprep.subr.bf16.mxu0 %v3528
    %3709 = vmatpush1.bf16.msra.mxu0 %v3527
    %3710 = vmatprep.subr.bf16.mxu0 %v3524
    %3711 = vmatpush1.bf16.msra.mxu0 %v3523
    %3712 = vmatprep.subr.bf16.mxu0 0
    %3713 = vmatpush2.bf16.msra.mxu0 0
    %3714 = vmatprep.subr.bf16.mxu0 0
    %3715 = vmatpush2.bf16.msra.mxu0 0
    %3716 = vmatprep.subr.bf16.mxu0 0
    %3717 = vmatpush2.bf16.msra.mxu0 0
    %3718 = vmatprep.subr.bf16.mxu0 0
    %3719 = vmatpush2.bf16.msra.mxu0 0
    %3720 = vmatprep.subr.bf16.mxu0 0
    %3721 = vmatpush2.bf16.msra.mxu0 0
    %3722 = vmatprep.subr.bf16.mxu0 0
    %3723 = vmatpush2.bf16.msra.mxu0 0
    %3724 = vmatprep.subr.bf16.mxu0 0
    %3725 = vmatpush2.bf16.msra.mxu0 0
    %3726 = vmatprep.subr.bf16.mxu0 0
    %3727 = vmatpush2.bf16.msra.mxu0 0
    %3728 = vmatprep.mubr.bf16.mxu0 0
    %3729 = vmatmul.mubr.bf16.gmra.mxu0 %v3695
    %v3730 = vpop.f32.mrf.mxu0
    %v3731 = vadd.f32 0.0, %v3730
    %v3732 = vpop.f32.mrf.mxu0
    %v3733 = vadd.f32 0.0, %v3732
    %v3734 = vpop.f32.mrf.mxu0
    %v3735 = vpop.f32.mrf.mxu0
    %3736 = vdwg.mxu0
    %3737 = vmatprep.subr.bf16.mxu0 %v3554
    %3738 = vmatpush1.bf16.msra.mxu0 %v3553
    %3739 = vmatprep.subr.bf16.mxu0 %v3550
    %3740 = vmatpush1.bf16.msra.mxu0 %v3549
    %3741 = vmatprep.subr.bf16.mxu0 %v3546
    %3742 = vmatpush1.bf16.msra.mxu0 %v3545
    %3743 = vmatprep.subr.bf16.mxu0 %v3542
    %3744 = vmatpush1.bf16.msra.mxu0 %v3541
    %3745 = vmatprep.subr.bf16.mxu0 %v3538
    %3746 = vmatpush1.bf16.msra.mxu0 %v3537
    %3747 = vmatprep.subr.bf16.mxu0 %v3534
    %3748 = vmatpush1.bf16.msra.mxu0 %v3533
    %3749 = vmatprep.subr.bf16.mxu0 %v3530
    %3750 = vmatpush1.bf16.msra.mxu0 %v3529
    %3751 = vmatprep.subr.bf16.mxu0 %v3526
    %3752 = vmatpush1.bf16.msra.mxu0 %v3525
    %3753 = vmatprep.subr.bf16.mxu0 0
    %3754 = vmatpush2.bf16.msra.mxu0 0
    %3755 = vmatprep.subr.bf16.mxu0 0
    %3756 = vmatpush2.bf16.msra.mxu0 0
    %3757 = vmatprep.subr.bf16.mxu0 0
    %3758 = vmatpush2.bf16.msra.mxu0 0
    %3759 = vmatprep.subr.bf16.mxu0 0
    %3760 = vmatpush2.bf16.msra.mxu0 0
    %3761 = vmatprep.subr.bf16.mxu0 0
    %3762 = vmatpush2.bf16.msra.mxu0 0
    %3763 = vmatprep.subr.bf16.mxu0 0
    %3764 = vmatpush2.bf16.msra.mxu0 0
    %3765 = vmatprep.subr.bf16.mxu0 0
    %3766 = vmatpush2.bf16.msra.mxu0 0
    %3767 = vmatprep.subr.bf16.mxu0 0
    %3768 = vmatpush2.bf16.msra.mxu0 0
    %3769 = vmatprep.mubr.bf16.mxu0 0
    %3770 = vmatmul.mubr.bf16.gmra.mxu0 %v3695
    %v3771 = vpop.f32.mrf.mxu0
    %v3772 = vadd.f32 0.0, %v3771
    %v3773 = vpop.f32.mrf.mxu0
    %v3774 = vadd.f32 0.0, %v3773
    %v3775 = vpop.f32.mrf.mxu0
    %v3776 = vpop.f32.mrf.mxu0
    %3777 = vdwg.mxu0
    %v3778 = vadd.f32 %v3691, %v3731
    %v3779 = vadd.f32 %v3692, %v3733
    %v3780 = vadd.f32 %v3693, %v3772
    %v3781 = vadd.f32 %v3694, %v3774
    %v3782 = vmul.f32 %v3778, 0.5
    %v3783 = vtanh.pop %v3782
    %v3784 = vmul.f32 %v3783, 0.5
    %v3785 = vadd.f32 %v3784, 0.5
    %v3786 = vmul.f32 %v3779, 0.5
    %v3787 = vtanh.pop %v3786
    %v3788 = vmul.f32 %v3787, 0.5
    %v3789 = vadd.f32 %v3788, 0.5
    %v3790 = vtanh.pop %v3780
    %v3791 = vmul.f32 %v3781, 0.5
    %v3792 = vtanh.pop %v3791
    %v3793 = vmul.f32 %v3792, 0.5
    %v3794 = vadd.f32 %v3793, 0.5
    %v3795 = vmul.f32 %v3789, %v3688
    %v3796 = vmul.f32 %v3785, %v3790
    %v3797 = vadd.f32 %v3795, %v3796
    %v3798 = vtanh.pop %v3797
    %v3799 = vmul.f32 %v3794, %v3798
    %v3800 = vld [vmem:[%s1130] sm:$0xff]
    %v3801 = vld [vmem:[%s1130 + $0x8] sm:$0xff]
    %v3802 = vld [vmem:[%s1130 + $0x10] sm:$0xff]
    %v3803 = vld [vmem:[%s1130 + $0x18] sm:$0xff]
    %v3804 = vpack.c.bf16 %v3799, %v3799
    %3805 = vmatprep.subr.bf16.mxu0 %v3552
    %3806 = vmatpush1.bf16.msra.mxu0 %v3551
    %3807 = vmatprep.subr.bf16.mxu0 %v3548
    %3808 = vmatpush1.bf16.msra.mxu0 %v3547
    %3809 = vmatprep.subr.bf16.mxu0 %v3544
    %3810 = vmatpush1.bf16.msra.mxu0 %v3543
    %3811 = vmatprep.subr.bf16.mxu0 %v3540
    %3812 = vmatpush1.bf16.msra.mxu0 %v3539
    %3813 = vmatprep.subr.bf16.mxu0 %v3536
    %3814 = vmatpush1.bf16.msra.mxu0 %v3535
    %3815 = vmatprep.subr.bf16.mxu0 %v3532
    %3816 = vmatpush1.bf16.msra.mxu0 %v3531
    %3817 = vmatprep.subr.bf16.mxu0 %v3528
    %3818 = vmatpush1.bf16.msra.mxu0 %v3527
    %3819 = vmatprep.subr.bf16.mxu0 %v3524
    %3820 = vmatpush1.bf16.msra.mxu0 %v3523
    %3821 = vmatprep.subr.bf16.mxu0 0
    %3822 = vmatpush2.bf16.msra.mxu0 0
    %3823 = vmatprep.subr.bf16.mxu0 0
    %3824 = vmatpush2.bf16.msra.mxu0 0
    %3825 = vmatprep.subr.bf16.mxu0 0
    %3826 = vmatpush2.bf16.msra.mxu0 0
    %3827 = vmatprep.subr.bf16.mxu0 0
    %3828 = vmatpush2.bf16.msra.mxu0 0
    %3829 = vmatprep.subr.bf16.mxu0 0
    %3830 = vmatpush2.bf16.msra.mxu0 0
    %3831 = vmatprep.subr.bf16.mxu0 0
    %3832 = vmatpush2.bf16.msra.mxu0 0
    %3833 = vmatprep.subr.bf16.mxu0 0
    %3834 = vmatpush2.bf16.msra.mxu0 0
    %3835 = vmatprep.subr.bf16.mxu0 0
    %3836 = vmatpush2.bf16.msra.mxu0 0
    %3837 = vmatprep.mubr.bf16.mxu0 0
    %3838 = vmatmul.mubr.bf16.gmra.mxu0 %v3804
    %v3839 = vpop.f32.mrf.mxu0
    %v3840 = vadd.f32 0.0, %v3839
    %v3841 = vpop.f32.mrf.mxu0
    %v3842 = vadd.f32 0.0, %v3841
    %v3843 = vpop.f32.mrf.mxu0
    %v3844 = vpop.f32.mrf.mxu0
    %3845 = vdwg.mxu0
    %3846 = vmatprep.subr.bf16.mxu0 %v3554
    %3847 = vmatpush1.bf16.msra.mxu0 %v3553
    %3848 = vmatprep.subr.bf16.mxu0 %v3550
    %3849 = vmatpush1.bf16.msra.mxu0 %v3549
    %3850 = vmatprep.subr.bf16.mxu0 %v3546
    %3851 = vmatpush1.bf16.msra.mxu0 %v3545
    %3852 = vmatprep.subr.bf16.mxu0 %v3542
    %3853 = vmatpush1.bf16.msra.mxu0 %v3541
    %3854 = vmatprep.subr.bf16.mxu0 %v3538
    %3855 = vmatpush1.bf16.msra.mxu0 %v3537
    %3856 = vmatprep.subr.bf16.mxu0 %v3534
    %3857 = vmatpush1.bf16.msra.mxu0 %v3533
    %3858 = vmatprep.subr.bf16.mxu0 %v3530
    %3859 = vmatpush1.bf16.msra.mxu0 %v3529
    %3860 = vmatprep.subr.bf16.mxu0 %v3526
    %3861 = vmatpush1.bf16.msra.mxu0 %v3525
    %3862 = vmatprep.subr.bf16.mxu0 0
    %3863 = vmatpush2.bf16.msra.mxu0 0
    %3864 = vmatprep.subr.bf16.mxu0 0
    %3865 = vmatpush2.bf16.msra.mxu0 0
    %3866 = vmatprep.subr.bf16.mxu0 0
    %3867 = vmatpush2.bf16.msra.mxu0 0
    %3868 = vmatprep.subr.bf16.mxu0 0
    %3869 = vmatpush2.bf16.msra.mxu0 0
    %3870 = vmatprep.subr.bf16.mxu0 0
    %3871 = vmatpush2.bf16.msra.mxu0 0
    %3872 = vmatprep.subr.bf16.mxu0 0
    %3873 = vmatpush2.bf16.msra.mxu0 0
    %3874 = vmatprep.subr.bf16.mxu0 0
    %3875 = vmatpush2.bf16.msra.mxu0 0
    %3876 = vmatprep.subr.bf16.mxu0 0
    %3877 = vmatpush2.bf16.msra.mxu0 0
    %3878 = vmatprep.mubr.bf16.mxu0 0
    %3879 = vmatmul.mubr.bf16.gmra.mxu0 %v3804
    %v3880 = vpop.f32.mrf.mxu0
    %v3881 = vadd.f32 0.0, %v3880
    %v3882 = vpop.f32.mrf.mxu0
    %v3883 = vadd.f32 0.0, %v3882
    %v3884 = vpop.f32.mrf.mxu0
    %v3885 = vpop.f32.mrf.mxu0
    %3886 = vdwg.mxu0
    %v3887 = vadd.f32 %v3800, %v3840
    %v3888 = vadd.f32 %v3801, %v3842
    %v3889 = vadd.f32 %v3802, %v3881
    %v3890 = vadd.f32 %v3803, %v3883
    %v3891 = vmul.f32 %v3887, 0.5
    %v3892 = vtanh.pop %v3891
    %v3893 = vmul.f32 %v3892, 0.5
    %v3894 = vadd.f32 %v3893, 0.5
    %v3895 = vmul.f32 %v3888, 0.5
    %v3896 = vtanh.pop %v3895
    %v3897 = vmul.f32 %v3896, 0.5
    %v3898 = vadd.f32 %v3897, 0.5
    %v3899 = vtanh.pop %v3889
    %v3900 = vmul.f32 %v3890, 0.5
    %v3901 = vtanh.pop %v3900
    %v3902 = vmul.f32 %v3901, 0.5
    %v3903 = vadd.f32 %v3902, 0.5
    %v3904 = vmul.f32 %v3898, %v3797
    %v3905 = vmul.f32 %v3894, %v3899
    %v3906 = vadd.f32 %v3904, %v3905
    %v3907 = vtanh.pop %v3906
    %v3908 = vmul.f32 %v3903, %v3907
    %v3909 = vld [vmem:[%s1436] sm:$0xff]
    %v3910 = vld [vmem:[%s1436 + $0x8] sm:$0xff]
    %v3911 = vld [vmem:[%s1436 + $0x10] sm:$0xff]
    %v3912 = vld [vmem:[%s1436 + $0x18] sm:$0xff]
    %v3913 = vpack.c.bf16 %v3908, %v3908
    %3914 = vmatprep.subr.bf16.mxu0 %v3552
    %3915 = vmatpush1.bf16.msra.mxu0 %v3551
    %3916 = vmatprep.subr.bf16.mxu0 %v3548
    %3917 = vmatpush1.bf16.msra.mxu0 %v3547
    %3918 = vmatprep.subr.bf16.mxu0 %v3544
    %3919 = vmatpush1.bf16.msra.mxu0 %v3543
    %3920 = vmatprep.subr.bf16.mxu0 %v3540
    %3921 = vmatpush1.bf16.msra.mxu0 %v3539
    %3922 = vmatprep.subr.bf16.mxu0 %v3536
    %3923 = vmatpush1.bf16.msra.mxu0 %v3535
    %3924 = vmatprep.subr.bf16.mxu0 %v3532
    %3925 = vmatpush1.bf16.msra.mxu0 %v3531
    %3926 = vmatprep.subr.bf16.mxu0 %v3528
    %3927 = vmatpush1.bf16.msra.mxu0 %v3527
    %3928 = vmatprep.subr.bf16.mxu0 %v3524
    %3929 = vmatpush1.bf16.msra.mxu0 %v3523
    %3930 = vmatprep.subr.bf16.mxu0 0
    %3931 = vmatpush2.bf16.msra.mxu0 0
    %3932 = vmatprep.subr.bf16.mxu0 0
    %3933 = vmatpush2.bf16.msra.mxu0 0
    %3934 = vmatprep.subr.bf16.mxu0 0
    %3935 = vmatpush2.bf16.msra.mxu0 0
    %3936 = vmatprep.subr.bf16.mxu0 0
    %3937 = vmatpush2.bf16.msra.mxu0 0
    %3938 = vmatprep.subr.bf16.mxu0 0
    %3939 = vmatpush2.bf16.msra.mxu0 0
    %3940 = vmatprep.subr.bf16.mxu0 0
    %3941 = vmatpush2.bf16.msra.mxu0 0
    %3942 = vmatprep.subr.bf16.mxu0 0
    %3943 = vmatpush2.bf16.msra.mxu0 0
    %3944 = vmatprep.subr.bf16.mxu0 0
    %3945 = vmatpush2.bf16.msra.mxu0 0
    %3946 = vmatprep.mubr.bf16.mxu0 0
    %3947 = vmatmul.mubr.bf16.gmra.mxu0 %v3913
    %v3948 = vpop.f32.mrf.mxu0
    %v3949 = vadd.f32 0.0, %v3948
    %v3950 = vpop.f32.mrf.mxu0
    %v3951 = vadd.f32 0.0, %v3950
    %v3952 = vpop.f32.mrf.mxu0
    %v3953 = vpop.f32.mrf.mxu0
    %3954 = vdwg.mxu0
    %3955 = vmatprep.subr.bf16.mxu0 %v3554
    %3956 = vmatpush1.bf16.msra.mxu0 %v3553
    %3957 = vmatprep.subr.bf16.mxu0 %v3550
    %3958 = vmatpush1.bf16.msra.mxu0 %v3549
    %3959 = vmatprep.subr.bf16.mxu0 %v3546
    %3960 = vmatpush1.bf16.msra.mxu0 %v3545
    %3961 = vmatprep.subr.bf16.mxu0 %v3542
    %3962 = vmatpush1.bf16.msra.mxu0 %v3541
    %3963 = vmatprep.subr.bf16.mxu0 %v3538
    %3964 = vmatpush1.bf16.msra.mxu0 %v3537
    %3965 = vmatprep.subr.bf16.mxu0 %v3534
    %3966 = vmatpush1.bf16.msra.mxu0 %v3533
    %3967 = vmatprep.subr.bf16.mxu0 %v3530
    %3968 = vmatpush1.bf16.msra.mxu0 %v3529
    %3969 = vmatprep.subr.bf16.mxu0 %v3526
    %3970 = vmatpush1.bf16.msra.mxu0 %v3525
    %3971 = vmatprep.subr.bf16.mxu0 0
    %3972 = vmatpush2.bf16.msra.mxu0 0
    %3973 = vmatprep.subr.bf16.mxu0 0
    %3974 = vmatpush2.bf16.msra.mxu0 0
    %3975 = vmatprep.subr.bf16.mxu0 0
    %3976 = vmatpush2.bf16.msra.mxu0 0
    %3977 = vmatprep.subr.bf16.mxu0 0
    %3978 = vmatpush2.bf16.msra.mxu0 0
    %3979 = vmatprep.subr.bf16.mxu0 0
    %3980 = vmatpush2.bf16.msra.mxu0 0
    %3981 = vmatprep.subr.bf16.mxu0 0
    %3982 = vmatpush2.bf16.msra.mxu0 0
    %3983 = vmatprep.subr.bf16.mxu0 0
    %3984 = vmatpush2.bf16.msra.mxu0 0
    %3985 = vmatprep.subr.bf16.mxu0 0
    %3986 = vmatpush2.bf16.msra.mxu0 0
    %3987 = vmatprep.mubr.bf16.mxu0 0
    %3988 = vmatmul.mubr.bf16.gmra.mxu0 %v3913
    %v3989 = vpop.f32.mrf.mxu0
    %v3990 = vadd.f32 0.0, %v3989
    %v3991 = vpop.f32.mrf.mxu0
    %v3992 = vadd.f32 0.0, %v3991
    %v3993 = vpop.f32.mrf.mxu0
    %v3994 = vpop.f32.mrf.mxu0
    %3995 = vdwg.mxu0
    %v3996 = vadd.f32 %v3909, %v3949
    %v3997 = vadd.f32 %v3910, %v3951
    %v3998 = vadd.f32 %v3911, %v3990
    %v3999 = vadd.f32 %v3912, %v3992
    %v4000 = vmul.f32 %v3996, 0.5
    %v4001 = vtanh.pop %v4000
    %v4002 = vmul.f32 %v4001, 0.5
    %v4003 = vadd.f32 %v4002, 0.5
    %v4004 = vmul.f32 %v3997, 0.5
    %v4005 = vtanh.pop %v4004
    %v4006 = vmul.f32 %v4005, 0.5
    %v4007 = vadd.f32 %v4006, 0.5
    %v4008 = vtanh.pop %v3998
    %v4009 = vmul.f32 %v3999, 0.5
    %v4010 = vtanh.pop %v4009
    %v4011 = vmul.f32 %v4010, 0.5
    %v4012 = vadd.f32 %v4011, 0.5
    %v4013 = vmul.f32 %v4007, %v3906
    %v4014 = vmul.f32 %v4003, %v4008
    %v4015 = vadd.f32 %v4013, %v4014
    %v4016 = vtanh.pop %v4015
    %v4017 = vmul.f32 %v4012, %v4016
    %v4018 = vld [vmem:[%s1742] sm:$0xff]
    %v4019 = vld [vmem:[%s1742 + $0x8] sm:$0xff]
    %v4020 = vld [vmem:[%s1742 + $0x10] sm:$0xff]
    %v4021 = vld [vmem:[%s1742 + $0x18] sm:$0xff]
    %v4022 = vpack.c.bf16 %v4017, %v4017
    %4023 = vmatprep.subr.bf16.mxu0 %v3552
    %4024 = vmatpush1.bf16.msra.mxu0 %v3551
    %4025 = vmatprep.subr.bf16.mxu0 %v3548
    %4026 = vmatpush1.bf16.msra.mxu0 %v3547
    %4027 = vmatprep.subr.bf16.mxu0 %v3544
    %4028 = vmatpush1.bf16.msra.mxu0 %v3543
    %4029 = vmatprep.subr.bf16.mxu0 %v3540
    %4030 = vmatpush1.bf16.msra.mxu0 %v3539
    %4031 = vmatprep.subr.bf16.mxu0 %v3536
    %4032 = vmatpush1.bf16.msra.mxu0 %v3535
    %4033 = vmatprep.subr.bf16.mxu0 %v3532
    %4034 = vmatpush1.bf16.msra.mxu0 %v3531
    %4035 = vmatprep.subr.bf16.mxu0 %v3528
    %4036 = vmatpush1.bf16.msra.mxu0 %v3527
    %4037 = vmatprep.subr.bf16.mxu0 %v3524
    %4038 = vmatpush1.bf16.msra.mxu0 %v3523
    %4039 = vmatprep.subr.bf16.mxu0 0
    %4040 = vmatpush2.bf16.msra.mxu0 0
    %4041 = vmatprep.subr.bf16.mxu0 0
    %4042 = vmatpush2.bf16.msra.mxu0 0
    %4043 = vmatprep.subr.bf16.mxu0 0
    %4044 = vmatpush2.bf16.msra.mxu0 0
    %4045 = vmatprep.subr.bf16.mxu0 0
    %4046 = vmatpush2.bf16.msra.mxu0 0
    %4047 = vmatprep.subr.bf16.mxu0 0
    %4048 = vmatpush2.bf16.msra.mxu0 0
    %4049 = vmatprep.subr.bf16.mxu0 0
    %4050 = vmatpush2.bf16.msra.mxu0 0
    %4051 = vmatprep.subr.bf16.mxu0 0
    %4052 = vmatpush2.bf16.msra.mxu0 0
    %4053 = vmatprep.subr.bf16.mxu0 0
    %4054 = vmatpush2.bf16.msra.mxu0 0
    %4055 = vmatprep.mubr.bf16.mxu0 0
    %4056 = vmatmul.mubr.bf16.gmra.mxu0 %v4022
    %v4057 = vpop.f32.mrf.mxu0
    %v4058 = vadd.f32 0.0, %v4057
    %v4059 = vpop.f32.mrf.mxu0
    %v4060 = vadd.f32 0.0, %v4059
    %v4061 = vpop.f32.mrf.mxu0
    %v4062 = vpop.f32.mrf.mxu0
    %4063 = vdwg.mxu0
    %4064 = vmatprep.subr.bf16.mxu0 %v3554
    %4065 = vmatpush1.bf16.msra.mxu0 %v3553
    %4066 = vmatprep.subr.bf16.mxu0 %v3550
    %4067 = vmatpush1.bf16.msra.mxu0 %v3549
    %4068 = vmatprep.subr.bf16.mxu0 %v3546
    %4069 = vmatpush1.bf16.msra.mxu0 %v3545
    %4070 = vmatprep.subr.bf16.mxu0 %v3542
    %4071 = vmatpush1.bf16.msra.mxu0 %v3541
    %4072 = vmatprep.subr.bf16.mxu0 %v3538
    %4073 = vmatpush1.bf16.msra.mxu0 %v3537
    %4074 = vmatprep.subr.bf16.mxu0 %v3534
    %4075 = vmatpush1.bf16.msra.mxu0 %v3533
    %4076 = vmatprep.subr.bf16.mxu0 %v3530
    %4077 = vmatpush1.bf16.msra.mxu0 %v3529
    %4078 = vmatprep.subr.bf16.mxu0 %v3526
    %4079 = vmatpush1.bf16.msra.mxu0 %v3525
    %4080 = vmatprep.subr.bf16.mxu0 0
    %4081 = vmatpush2.bf16.msra.mxu0 0
    %4082 = vmatprep.subr.bf16.mxu0 0
    %4083 = vmatpush2.bf16.msra.mxu0 0
    %4084 = vmatprep.subr.bf16.mxu0 0
    %4085 = vmatpush2.bf16.msra.mxu0 0
    %4086 = vmatprep.subr.bf16.mxu0 0
    %4087 = vmatpush2.bf16.msra.mxu0 0
    %4088 = vmatprep.subr.bf16.mxu0 0
    %4089 = vmatpush2.bf16.msra.mxu0 0
    %4090 = vmatprep.subr.bf16.mxu0 0
    %4091 = vmatpush2.bf16.msra.mxu0 0
    %4092 = vmatprep.subr.bf16.mxu0 0
    %4093 = vmatpush2.bf16.msra.mxu0 0
    %4094 = vmatprep.subr.bf16.mxu0 0
    %4095 = vmatpush2.bf16.msra.mxu0 0
    %4096 = vmatprep.mubr.bf16.mxu0 0
    %4097 = vmatmul.mubr.bf16.gmra.mxu0 %v4022
    %v4098 = vpop.f32.mrf.mxu0
    %v4099 = vadd.f32 0.0, %v4098
    %v4100 = vpop.f32.mrf.mxu0
    %v4101 = vadd.f32 0.0, %v4100
    %v4102 = vpop.f32.mrf.mxu0
    %v4103 = vpop.f32.mrf.mxu0
    %4104 = vdwg.mxu0
    %v4105 = vadd.f32 %v4018, %v4058
    %v4106 = vadd.f32 %v4019, %v4060
    %v4107 = vadd.f32 %v4020, %v4099
    %v4108 = vadd.f32 %v4021, %v4101
    %v4109 = vmul.f32 %v4105, 0.5
    %v4110 = vtanh.pop %v4109
    %v4111 = vmul.f32 %v4110, 0.5
    %v4112 = vadd.f32 %v4111, 0.5
    %v4113 = vmul.f32 %v4106, 0.5
    %v4114 = vtanh.pop %v4113
    %v4115 = vmul.f32 %v4114, 0.5
    %v4116 = vadd.f32 %v4115, 0.5
    %v4117 = vtanh.pop %v4107
    %v4118 = vmul.f32 %v4108, 0.5
    %v4119 = vtanh.pop %v4118
    %v4120 = vmul.f32 %v4119, 0.5
    %v4121 = vadd.f32 %v4120, 0.5
    %v4122 = vmul.f32 %v4116, %v4015
    %v4123 = vmul.f32 %v4112, %v4117
    %v4124 = vadd.f32 %v4122, %v4123
    %v4125 = vtanh.pop %v4124
    %v4126 = vmul.f32 %v4121, %v4125
    %v4127 = vld [vmem:[%s2048] sm:$0xff]
    %v4128 = vld [vmem:[%s2048 + $0x8] sm:$0xff]
    %v4129 = vld [vmem:[%s2048 + $0x10] sm:$0xff]
    %v4130 = vld [vmem:[%s2048 + $0x18] sm:$0xff]
    %v4131 = vpack.c.bf16 %v4126, %v4126
    %4132 = vmatprep.subr.bf16.mxu0 %v3552
    %4133 = vmatpush1.bf16.msra.mxu0 %v3551
    %4134 = vmatprep.subr.bf16.mxu0 %v3548
    %4135 = vmatpush1.bf16.msra.mxu0 %v3547
    %4136 = vmatprep.subr.bf16.mxu0 %v3544
    %4137 = vmatpush1.bf16.msra.mxu0 %v3543
    %4138 = vmatprep.subr.bf16.mxu0 %v3540
    %4139 = vmatpush1.bf16.msra.mxu0 %v3539
    %4140 = vmatprep.subr.bf16.mxu0 %v3536
    %4141 = vmatpush1.bf16.msra.mxu0 %v3535
    %4142 = vmatprep.subr.bf16.mxu0 %v3532
    %4143 = vmatpush1.bf16.msra.mxu0 %v3531
    %4144 = vmatprep.subr.bf16.mxu0 %v3528
    %4145 = vmatpush1.bf16.msra.mxu0 %v3527
    %4146 = vmatprep.subr.bf16.mxu0 %v3524
    %4147 = vmatpush1.bf16.msra.mxu0 %v3523
    %4148 = vmatprep.subr.bf16.mxu0 0
    %4149 = vmatpush2.bf16.msra.mxu0 0
    %4150 = vmatprep.subr.bf16.mxu0 0
    %4151 = vmatpush2.bf16.msra.mxu0 0
    %4152 = vmatprep.subr.bf16.mxu0 0
    %4153 = vmatpush2.bf16.msra.mxu0 0
    %4154 = vmatprep.subr.bf16.mxu0 0
    %4155 = vmatpush2.bf16.msra.mxu0 0
    %4156 = vmatprep.subr.bf16.mxu0 0
    %4157 = vmatpush2.bf16.msra.mxu0 0
    %4158 = vmatprep.subr.bf16.mxu0 0
    %4159 = vmatpush2.bf16.msra.mxu0 0
    %4160 = vmatprep.subr.bf16.mxu0 0
    %4161 = vmatpush2.bf16.msra.mxu0 0
    %4162 = vmatprep.subr.bf16.mxu0 0
    %4163 = vmatpush2.bf16.msra.mxu0 0
    %4164 = vmatprep.mubr.bf16.mxu0 0
    %4165 = vmatmul.mubr.bf16.gmra.mxu0 %v4131
    %v4166 = vpop.f32.mrf.mxu0
    %v4167 = vadd.f32 0.0, %v4166
    %v4168 = vpop.f32.mrf.mxu0
    %v4169 = vadd.f32 0.0, %v4168
    %v4170 = vpop.f32.mrf.mxu0
    %v4171 = vpop.f32.mrf.mxu0
    %4172 = vdwg.mxu0
    %4173 = vmatprep.subr.bf16.mxu0 %v3554
    %4174 = vmatpush1.bf16.msra.mxu0 %v3553
    %4175 = vmatprep.subr.bf16.mxu0 %v3550
    %4176 = vmatpush1.bf16.msra.mxu0 %v3549
    %4177 = vmatprep.subr.bf16.mxu0 %v3546
    %4178 = vmatpush1.bf16.msra.mxu0 %v3545
    %4179 = vmatprep.subr.bf16.mxu0 %v3542
    %4180 = vmatpush1.bf16.msra.mxu0 %v3541
    %4181 = vmatprep.subr.bf16.mxu0 %v3538
    %4182 = vmatpush1.bf16.msra.mxu0 %v3537
    %4183 = vmatprep.subr.bf16.mxu0 %v3534
    %4184 = vmatpush1.bf16.msra.mxu0 %v3533
    %4185 = vmatprep.subr.bf16.mxu0 %v3530
    %4186 = vmatpush1.bf16.msra.mxu0 %v3529
    %4187 = vmatprep.subr.bf16.mxu0 %v3526
    %4188 = vmatpush1.bf16.msra.mxu0 %v3525
    %4189 = vmatprep.subr.bf16.mxu0 0
    %4190 = vmatpush2.bf16.msra.mxu0 0
    %4191 = vmatprep.subr.bf16.mxu0 0
    %4192 = vmatpush2.bf16.msra.mxu0 0
    %4193 = vmatprep.subr.bf16.mxu0 0
    %4194 = vmatpush2.bf16.msra.mxu0 0
    %4195 = vmatprep.subr.bf16.mxu0 0
    %4196 = vmatpush2.bf16.msra.mxu0 0
    %4197 = vmatprep.subr.bf16.mxu0 0
    %4198 = vmatpush2.bf16.msra.mxu0 0
    %4199 = vmatprep.subr.bf16.mxu0 0
    %4200 = vmatpush2.bf16.msra.mxu0 0
    %4201 = vmatprep.subr.bf16.mxu0 0
    %4202 = vmatpush2.bf16.msra.mxu0 0
    %4203 = vmatprep.subr.bf16.mxu0 0
    %4204 = vmatpush2.bf16.msra.mxu0 0
    %4205 = vmatprep.mubr.bf16.mxu0 0
    %4206 = vmatmul.mubr.bf16.gmra.mxu0 %v4131
    %v4207 = vpop.f32.mrf.mxu0
    %v4208 = vadd.f32 0.0, %v4207
    %v4209 = vpop.f32.mrf.mxu0
    %v4210 = vadd.f32 0.0, %v4209
    %v4211 = vpop.f32.mrf.mxu0
    %v4212 = vpop.f32.mrf.mxu0
    %4213 = vdwg.mxu0
    %v4214 = vadd.f32 %v4127, %v4167
    %v4215 = vadd.f32 %v4128, %v4169
    %v4216 = vadd.f32 %v4129, %v4208
    %v4217 = vadd.f32 %v4130, %v4210
    %v4218 = vmul.f32 %v4214, 0.5
    %v4219 = vtanh.pop %v4218
    %v4220 = vmul.f32 %v4219, 0.5
    %v4221 = vadd.f32 %v4220, 0.5
    %v4222 = vmul.f32 %v4215, 0.5
    %v4223 = vtanh.pop %v4222
    %v4224 = vmul.f32 %v4223, 0.5
    %v4225 = vadd.f32 %v4224, 0.5
    %v4226 = vtanh.pop %v4216
    %v4227 = vmul.f32 %v4217, 0.5
    %v4228 = vtanh.pop %v4227
    %v4229 = vmul.f32 %v4228, 0.5
    %v4230 = vadd.f32 %v4229, 0.5
    %v4231 = vmul.f32 %v4225, %v4124
    %v4232 = vmul.f32 %v4221, %v4226
    %v4233 = vadd.f32 %v4231, %v4232
    %v4234 = vtanh.pop %v4233
    %v4235 = vmul.f32 %v4230, %v4234
    %v4236 = vld [vmem:[%s2354] sm:$0xff]
    %v4237 = vld [vmem:[%s2354 + $0x8] sm:$0xff]
    %v4238 = vld [vmem:[%s2354 + $0x10] sm:$0xff]
    %v4239 = vld [vmem:[%s2354 + $0x18] sm:$0xff]
    %v4240 = vpack.c.bf16 %v4235, %v4235
    %4241 = vmatprep.subr.bf16.mxu0 %v3552
    %4242 = vmatpush1.bf16.msra.mxu0 %v3551
    %4243 = vmatprep.subr.bf16.mxu0 %v3548
    %4244 = vmatpush1.bf16.msra.mxu0 %v3547
    %4245 = vmatprep.subr.bf16.mxu0 %v3544
    %4246 = vmatpush1.bf16.msra.mxu0 %v3543
    %4247 = vmatprep.subr.bf16.mxu0 %v3540
    %4248 = vmatpush1.bf16.msra.mxu0 %v3539
    %4249 = vmatprep.subr.bf16.mxu0 %v3536
    %4250 = vmatpush1.bf16.msra.mxu0 %v3535
    %4251 = vmatprep.subr.bf16.mxu0 %v3532
    %4252 = vmatpush1.bf16.msra.mxu0 %v3531
    %4253 = vmatprep.subr.bf16.mxu0 %v3528
    %4254 = vmatpush1.bf16.msra.mxu0 %v3527
    %4255 = vmatprep.subr.bf16.mxu0 %v3524
    %4256 = vmatpush1.bf16.msra.mxu0 %v3523
    %4257 = vmatprep.subr.bf16.mxu0 0
    %4258 = vmatpush2.bf16.msra.mxu0 0
    %4259 = vmatprep.subr.bf16.mxu0 0
    %4260 = vmatpush2.bf16.msra.mxu0 0
    %4261 = vmatprep.subr.bf16.mxu0 0
    %4262 = vmatpush2.bf16.msra.mxu0 0
    %4263 = vmatprep.subr.bf16.mxu0 0
    %4264 = vmatpush2.bf16.msra.mxu0 0
    %4265 = vmatprep.subr.bf16.mxu0 0
    %4266 = vmatpush2.bf16.msra.mxu0 0
    %4267 = vmatprep.subr.bf16.mxu0 0
    %4268 = vmatpush2.bf16.msra.mxu0 0
    %4269 = vmatprep.subr.bf16.mxu0 0
    %4270 = vmatpush2.bf16.msra.mxu0 0
    %4271 = vmatprep.subr.bf16.mxu0 0
    %4272 = vmatpush2.bf16.msra.mxu0 0
    %4273 = vmatprep.mubr.bf16.mxu0 0
    %4274 = vmatmul.mubr.bf16.gmra.mxu0 %v4240
    %v4275 = vpop.f32.mrf.mxu0
    %v4276 = vadd.f32 0.0, %v4275
    %v4277 = vpop.f32.mrf.mxu0
    %v4278 = vadd.f32 0.0, %v4277
    %v4279 = vpop.f32.mrf.mxu0
    %v4280 = vpop.f32.mrf.mxu0
    %4281 = vdwg.mxu0
    %4282 = vmatprep.subr.bf16.mxu0 %v3554
    %4283 = vmatpush1.bf16.msra.mxu0 %v3553
    %4284 = vmatprep.subr.bf16.mxu0 %v3550
    %4285 = vmatpush1.bf16.msra.mxu0 %v3549
    %4286 = vmatprep.subr.bf16.mxu0 %v3546
    %4287 = vmatpush1.bf16.msra.mxu0 %v3545
    %4288 = vmatprep.subr.bf16.mxu0 %v3542
    %4289 = vmatpush1.bf16.msra.mxu0 %v3541
    %4290 = vmatprep.subr.bf16.mxu0 %v3538
    %4291 = vmatpush1.bf16.msra.mxu0 %v3537
    %4292 = vmatprep.subr.bf16.mxu0 %v3534
    %4293 = vmatpush1.bf16.msra.mxu0 %v3533
    %4294 = vmatprep.subr.bf16.mxu0 %v3530
    %4295 = vmatpush1.bf16.msra.mxu0 %v3529
    %4296 = vmatprep.subr.bf16.mxu0 %v3526
    %4297 = vmatpush1.bf16.msra.mxu0 %v3525
    %4298 = vmatprep.subr.bf16.mxu0 0
    %4299 = vmatpush2.bf16.msra.mxu0 0
    %4300 = vmatprep.subr.bf16.mxu0 0
    %4301 = vmatpush2.bf16.msra.mxu0 0
    %4302 = vmatprep.subr.bf16.mxu0 0
    %4303 = vmatpush2.bf16.msra.mxu0 0
    %4304 = vmatprep.subr.bf16.mxu0 0
    %4305 = vmatpush2.bf16.msra.mxu0 0
    %4306 = vmatprep.subr.bf16.mxu0 0
    %4307 = vmatpush2.bf16.msra.mxu0 0
    %4308 = vmatprep.subr.bf16.mxu0 0
    %4309 = vmatpush2.bf16.msra.mxu0 0
    %4310 = vmatprep.subr.bf16.mxu0 0
    %4311 = vmatpush2.bf16.msra.mxu0 0
    %4312 = vmatprep.subr.bf16.mxu0 0
    %4313 = vmatpush2.bf16.msra.mxu0 0
    %4314 = vmatprep.mubr.bf16.mxu0 0
    %4315 = vmatmul.mubr.bf16.gmra.mxu0 %v4240
    %v4316 = vpop.f32.mrf.mxu0
    %v4317 = vadd.f32 0.0, %v4316
    %v4318 = vpop.f32.mrf.mxu0
    %v4319 = vadd.f32 0.0, %v4318
    %v4320 = vpop.f32.mrf.mxu0
    %v4321 = vpop.f32.mrf.mxu0
    %4322 = vdwg.mxu0
    %v4323 = vadd.f32 %v4236, %v4276
    %v4324 = vadd.f32 %v4237, %v4278
    %v4325 = vadd.f32 %v4238, %v4317
    %v4326 = vadd.f32 %v4239, %v4319
    %v4327 = vmul.f32 %v4323, 0.5
    %v4328 = vtanh.pop %v4327
    %v4329 = vmul.f32 %v4328, 0.5
    %v4330 = vadd.f32 %v4329, 0.5
    %v4331 = vmul.f32 %v4324, 0.5
    %v4332 = vtanh.pop %v4331
    %v4333 = vmul.f32 %v4332, 0.5
    %v4334 = vadd.f32 %v4333, 0.5
    %v4335 = vtanh.pop %v4325
    %v4336 = vmul.f32 %v4326, 0.5
    %v4337 = vtanh.pop %v4336
    %v4338 = vmul.f32 %v4337, 0.5
    %v4339 = vadd.f32 %v4338, 0.5
    %v4340 = vmul.f32 %v4334, %v4233
    %v4341 = vmul.f32 %v4330, %v4335
    %v4342 = vadd.f32 %v4340, %v4341
    %v4343 = vtanh.pop %v4342
    %v4344 = vmul.f32 %v4339, %v4343
    %v4345 = vld [vmem:[%s2660] sm:$0xff]
    %v4346 = vld [vmem:[%s2660 + $0x8] sm:$0xff]
    %v4347 = vld [vmem:[%s2660 + $0x10] sm:$0xff]
    %v4348 = vld [vmem:[%s2660 + $0x18] sm:$0xff]
    %v4349 = vpack.c.bf16 %v4344, %v4344
    %4350 = vmatprep.subr.bf16.mxu0 %v3552
    %4351 = vmatpush1.bf16.msra.mxu0 %v3551
    %4352 = vmatprep.subr.bf16.mxu0 %v3548
    %4353 = vmatpush1.bf16.msra.mxu0 %v3547
    %4354 = vmatprep.subr.bf16.mxu0 %v3544
    %4355 = vmatpush1.bf16.msra.mxu0 %v3543
    %4356 = vmatprep.subr.bf16.mxu0 %v3540
    %4357 = vmatpush1.bf16.msra.mxu0 %v3539
    %4358 = vmatprep.subr.bf16.mxu0 %v3536
    %4359 = vmatpush1.bf16.msra.mxu0 %v3535
    %4360 = vmatprep.subr.bf16.mxu0 %v3532
    %4361 = vmatpush1.bf16.msra.mxu0 %v3531
    %4362 = vmatprep.subr.bf16.mxu0 %v3528
    %4363 = vmatpush1.bf16.msra.mxu0 %v3527
    %4364 = vmatprep.subr.bf16.mxu0 %v3524
    %4365 = vmatpush1.bf16.msra.mxu0 %v3523
    %4366 = vmatprep.subr.bf16.mxu0 0
    %4367 = vmatpush2.bf16.msra.mxu0 0
    %4368 = vmatprep.subr.bf16.mxu0 0
    %4369 = vmatpush2.bf16.msra.mxu0 0
    %4370 = vmatprep.subr.bf16.mxu0 0
    %4371 = vmatpush2.bf16.msra.mxu0 0
    %4372 = vmatprep.subr.bf16.mxu0 0
    %4373 = vmatpush2.bf16.msra.mxu0 0
    %4374 = vmatprep.subr.bf16.mxu0 0
    %4375 = vmatpush2.bf16.msra.mxu0 0
    %4376 = vmatprep.subr.bf16.mxu0 0
    %4377 = vmatpush2.bf16.msra.mxu0 0
    %4378 = vmatprep.subr.bf16.mxu0 0
    %4379 = vmatpush2.bf16.msra.mxu0 0
    %4380 = vmatprep.subr.bf16.mxu0 0
    %4381 = vmatpush2.bf16.msra.mxu0 0
    %4382 = vmatprep.mubr.bf16.mxu0 0
    %4383 = vmatmul.mubr.bf16.gmra.mxu0 %v4349
    %v4384 = vpop.f32.mrf.mxu0
    %v4385 = vadd.f32 0.0, %v4384
    %v4386 = vpop.f32.mrf.mxu0
    %v4387 = vadd.f32 0.0, %v4386
    %v4388 = vpop.f32.mrf.mxu0
    %v4389 = vpop.f32.mrf.mxu0
    %4390 = vdwg.mxu0
    %4391 = vmatprep.subr.bf16.mxu0 %v3554
    %4392 = vmatpush1.bf16.msra.mxu0 %v3553
    %4393 = vmatprep.subr.bf16.mxu0 %v3550
    %4394 = vmatpush1.bf16.msra.mxu0 %v3549
    %4395 = vmatprep.subr.bf16.mxu0 %v3546
    %4396 = vmatpush1.bf16.msra.mxu0 %v3545
    %4397 = vmatprep.subr.bf16.mxu0 %v3542
    %4398 = vmatpush1.bf16.msra.mxu0 %v3541
    %4399 = vmatprep.subr.bf16.mxu0 %v3538
    %4400 = vmatpush1.bf16.msra.mxu0 %v3537
    %4401 = vmatprep.subr.bf16.mxu0 %v3534
    %4402 = vmatpush1.bf16.msra.mxu0 %v3533
    %4403 = vmatprep.subr.bf16.mxu0 %v3530
    %4404 = vmatpush1.bf16.msra.mxu0 %v3529
    %4405 = vmatprep.subr.bf16.mxu0 %v3526
    %4406 = vmatpush1.bf16.msra.mxu0 %v3525
    %4407 = vmatprep.subr.bf16.mxu0 0
    %4408 = vmatpush2.bf16.msra.mxu0 0
    %4409 = vmatprep.subr.bf16.mxu0 0
    %4410 = vmatpush2.bf16.msra.mxu0 0
    %4411 = vmatprep.subr.bf16.mxu0 0
    %4412 = vmatpush2.bf16.msra.mxu0 0
    %4413 = vmatprep.subr.bf16.mxu0 0
    %4414 = vmatpush2.bf16.msra.mxu0 0
    %4415 = vmatprep.subr.bf16.mxu0 0
    %4416 = vmatpush2.bf16.msra.mxu0 0
    %4417 = vmatprep.subr.bf16.mxu0 0
    %4418 = vmatpush2.bf16.msra.mxu0 0
    %4419 = vmatprep.subr.bf16.mxu0 0
    %4420 = vmatpush2.bf16.msra.mxu0 0
    %4421 = vmatprep.subr.bf16.mxu0 0
    %4422 = vmatpush2.bf16.msra.mxu0 0
    %4423 = vmatprep.mubr.bf16.mxu0 0
    %4424 = vmatmul.mubr.bf16.gmra.mxu0 %v4349
    %v4425 = vpop.f32.mrf.mxu0
    %v4426 = vadd.f32 0.0, %v4425
    %v4427 = vpop.f32.mrf.mxu0
    %v4428 = vadd.f32 0.0, %v4427
    %v4429 = vpop.f32.mrf.mxu0
    %v4430 = vpop.f32.mrf.mxu0
    %4431 = vdwg.mxu0
    %v4432 = vadd.f32 %v4345, %v4385
    %v4433 = vadd.f32 %v4346, %v4387
    %v4434 = vadd.f32 %v4347, %v4426
    %v4435 = vadd.f32 %v4348, %v4428
    %v4436 = vmul.f32 %v4432, 0.5
    %v4437 = vtanh.pop %v4436
    %v4438 = vmul.f32 %v4437, 0.5
    %v4439 = vadd.f32 %v4438, 0.5
    %v4440 = vmul.f32 %v4433, 0.5
    %v4441 = vtanh.pop %v4440
    %v4442 = vmul.f32 %v4441, 0.5
    %v4443 = vadd.f32 %v4442, 0.5
    %v4444 = vtanh.pop %v4434
    %v4445 = vmul.f32 %v4435, 0.5
    %v4446 = vtanh.pop %v4445
    %v4447 = vmul.f32 %v4446, 0.5
    %v4448 = vadd.f32 %v4447, 0.5
    %v4449 = vmul.f32 %v4443, %v4342
    %v4450 = vmul.f32 %v4439, %v4444
    %v4451 = vadd.f32 %v4449, %v4450
    %v4452 = vtanh.pop %v4451
    %v4453 = vmul.f32 %v4448, %v4452
    %v4454 = vpack.c.bf16 %v4453, %v4453
    %v4455 = vld [vmem:[#allocation12] sm:$0xf]
    %v4456 = vld [vmem:[#allocation12 + $0x4] sm:$0xf]
    %v4457 = vld [vmem:[#allocation12 + $0x8] sm:$0xf]
    %v4458 = vld [vmem:[#allocation12 + $0xc] sm:$0xf]
    %v4459 = vld [vmem:[#allocation12 + $0x10] sm:$0xf]
    %v4460 = vld [vmem:[#allocation12 + $0x14] sm:$0xf]
    %v4461 = vld [vmem:[#allocation12 + $0x18] sm:$0xf]
    %v4462 = vld [vmem:[#allocation12 + $0x1c] sm:$0xf]
    %v4463 = vld [vmem:[#allocation12 + $0x20] sm:$0xf]
    %v4464 = vld [vmem:[#allocation12 + $0x24] sm:$0xf]
    %v4465 = vld [vmem:[#allocation12 + $0x28] sm:$0xf]
    %v4466 = vld [vmem:[#allocation12 + $0x2c] sm:$0xf]
    %v4467 = vld [vmem:[#allocation12 + $0x30] sm:$0xf]
    %v4468 = vld [vmem:[#allocation12 + $0x34] sm:$0xf]
    %v4469 = vld [vmem:[#allocation12 + $0x38] sm:$0xf]
    %v4470 = vld [vmem:[#allocation12 + $0x3c] sm:$0xf]
    %v4471 = vld [vmem:[%s5] sm:$0x1]
    %v4473 = vlaneseq
    %v4474 = vshrl.u32 %v4473, 7
    %v4475 = vsub.s32 0, %v4474
    %v4476 = vrot.slane %v4471, %v4475
    %v4494 = vunpack.c.l.b16 %v4455
    %v4495 = vunpack.c.l.b16 %v4456
    %v4496 = vunpack.c.l.b16 %v4457
    %v4497 = vunpack.c.l.b16 %v4458
    %v4498 = vunpack.c.l.b16 %v4459
    %v4499 = vunpack.c.l.b16 %v4460
    %v4500 = vunpack.c.l.b16 %v4461
    %v4501 = vunpack.c.l.b16 %v4462
    %v4502 = vunpack.c.l.b16 %v4463
    %v4503 = vunpack.c.l.b16 %v4464
    %v4504 = vunpack.c.l.b16 %v4465
    %v4505 = vunpack.c.l.b16 %v4466
    %v4506 = vunpack.c.l.b16 %v4467
    %v4507 = vunpack.c.l.b16 %v4468
    %v4508 = vunpack.c.l.b16 %v4469
    %v4509 = vunpack.c.l.b16 %v4470
    %v4510 = vpack.c.b16 %v4495, %v4494
    %v4511 = vpack.c.b16 %v4497, %v4496
    %v4512 = vpack.c.b16 %v4499, %v4498
    %v4513 = vpack.c.b16 %v4501, %v4500
    %v4514 = vpack.c.b16 %v4503, %v4502
    %v4515 = vpack.c.b16 %v4505, %v4504
    %v4516 = vpack.c.b16 %v4507, %v4506
    %v4517 = vpack.c.b16 %v4509, %v4508
    %4526 = vmatprep.subr.bf16.mxu0 0
    %4527 = vmatpush1.bf16.msra.mxu0 %v4517
    %4528 = vmatprep.subr.bf16.mxu0 0
    %4529 = vmatpush1.bf16.msra.mxu0 %v4516
    %4530 = vmatprep.subr.bf16.mxu0 0
    %4531 = vmatpush1.bf16.msra.mxu0 %v4515
    %4532 = vmatprep.subr.bf16.mxu0 0
    %4533 = vmatpush1.bf16.msra.mxu0 %v4514
    %4534 = vmatprep.subr.bf16.mxu0 0
    %4535 = vmatpush1.bf16.msra.mxu0 %v4513
    %4536 = vmatprep.subr.bf16.mxu0 0
    %4537 = vmatpush1.bf16.msra.mxu0 %v4512
    %4538 = vmatprep.subr.bf16.mxu0 0
    %4539 = vmatpush1.bf16.msra.mxu0 %v4511
    %4540 = vmatprep.subr.bf16.mxu0 0
    %4541 = vmatpush1.bf16.msra.mxu0 %v4510
    %4542 = vmatprep.subr.bf16.mxu0 0
    %4543 = vmatpush2.bf16.msra.mxu0 0
    %4544 = vmatprep.subr.bf16.mxu0 0
    %4545 = vmatpush2.bf16.msra.mxu0 0
    %4546 = vmatprep.subr.bf16.mxu0 0
    %4547 = vmatpush2.bf16.msra.mxu0 0
    %4548 = vmatprep.subr.bf16.mxu0 0
    %4549 = vmatpush2.bf16.msra.mxu0 0
    %4550 = vmatprep.subr.bf16.mxu0 0
    %4551 = vmatpush2.bf16.msra.mxu0 0
    %4552 = vmatprep.subr.bf16.mxu0 0
    %4553 = vmatpush2.bf16.msra.mxu0 0
    %4554 = vmatprep.subr.bf16.mxu0 0
    %4555 = vmatpush2.bf16.msra.mxu0 0
    %4556 = vmatprep.subr.bf16.mxu0 0
    %4557 = vmatpush2.bf16.msra.mxu0 0
    %4558 = vmatprep.mubr.bf16.mxu0 0
    %4559 = vmatmul.mubr.bf16.gmra.mxu0 %v4454
    %v4560 = vpop.f32.mrf.mxu0
    %v4561 = vadd.f32 %v4476, %v4560
    %v4562 = vpop.f32.mrf.mxu0
    %v4563 = vpop.f32.mrf.mxu0
    %v4564 = vpop.f32.mrf.mxu0
    %4565 = vdwg.mxu0
    %4566 = vst [vmem:[#allocation13] sm:$0xff] %v4561
    // Predicated region
    $region46: #{tpu_custom_call.1} parent=1 // pred_check
      _
    $region47: #{tpu_custom_call.1} parent=1 // pred_check_branch
      %4568 = sbr.rel (0) target = $region49
    $region48: #{tpu_custom_call.1} parent=1 // pred_region
      %s4570 = ssub.s32 128, 128
      %4571 = vsyncadd [#allocation6], %s4570
      %s4573 = sshll.u32 [#allocation13], 4
      %s4574 = int_to_ptr.vmem [resolvable:$true] %s4573
      %4576 = dma.vmem_to_hbm [thread:$0]  %s4574, 128, %s6, [#allocation6]
    $region49: #{tpu_custom_call.1} parent=1 // pred_fallthru
      _
    // Predicated region
    $region50: #{tpu_custom_call.1} parent=1 // pred_check
      _
    $region51: #{tpu_custom_call.1} parent=1 // pred_check_branch
      %4578 = sbr.rel (0) target = $region53
    $region52: #{tpu_custom_call.1} parent=1 // pred_region
      %4579 = dma.done [#allocation6], 128
    $region53: #{tpu_custom_call.1} parent=1 // pred_fallthru
      _
    %4580 = vsyncpa [#allocation5], 1
    %4581 = vsyncpa [#allocation8], 1
    %4582 = vsyncpa [#allocation11], 1
    %4583 = vsyncpa [#allocation6], 1

</llo_original>
